<compile_context>
chip_gen: v7x
topology: tpu7x:2x2x1
jax: 0.10.0
libtpu: 0.0.40
codegen_flags: <defaults>
</compile_context>

<pallas_src>
import numpy as np
import jax
import jax.numpy as jnp
from jax.experimental import pallas as pl
from jax.experimental.pallas import tpu as pltpu

F32 = jnp.float32
BF16 = jnp.bfloat16


def _dot(a, b):
    return jnp.dot(a, b, preferred_element_type=F32)


def _vmem_limit_bytes():
    # Generation-aware: ~3/4 of physical VMEM (≈96 MiB on v5e/v6e, ≈48 MiB on v7x).
    try:
        cap = int(pltpu.get_tpu_info().vmem_capacity_bytes)
    except Exception:
        cap = 64 * 1024 * 1024
    return max(32 * 1024 * 1024, min((cap * 3) // 4, 112 * 1024 * 1024))


# ----------------------------------------------------------------------------- kernel

def make_rrn_kernel(batch_block, n_nodes, deg, hid_pad):
    P = hid_pad

    def kernel(x_ref, c0_ref, selo_ref,
               fw1, fb1, fw2, fb2, fw3, fb3,
               gw1a, gw1b, gb1, gw2, gb2, gw3, gb3,
               wih, whh, blstm,
               rw1, rb1, rw2, rb2, rw3, rb3,
               y_ref, h_scr, c_scr):
        t = pl.program_id(1)

        # H = X.clone(); c = randn(...)  -- before the first iteration of each batch block.
        @pl.when(t == 0)
        def _init():
            h_scr[...] = x_ref[...]
            c_scr[...] = c0_ref[...]

        x = x_ref[...]
        h = h_scr[...]
        c = c_scr[...]
        hb = h.astype(BF16)

        # ---- message MLP f: layer-1 halves fused & hoisted through the edge gather ----
        a = _dot(hb, fw1[...])                 # (rows, 2P) single fused matmul, f32 acc
        a_node = a[:, :P]                      # destination-node half (f32)
        a_nbr = a[:, P:].astype(BF16)          # neighbour half (bf16: feeds bf16 gather/MLP)

        selo = selo_ref[...]                   # (deg*N, N) bf16 one-hot, degree-major layout
        fb1v = fb1[...]
        ms = []
        for bb in range(batch_block):          # tiny static loop (one puzzle per step)
            lo = bb * n_nodes
            a_node_b = a_node[lo:lo + n_nodes, :]
            a_nbr_b = a_nbr[lo:lo + n_nodes, :]
            # Neighbour gather: bf16 one-hot matmul (exact selection, f32 accumulation).
            gathered = _dot(selo, a_nbr_b)                         # (deg*N, P)
            # Destination replication is a plain row-repeat -> no MXU work.
            a_rep = jnp.concatenate([a_node_b] * deg, axis=0)      # (deg*N, P)
            e1 = jnp.maximum(gathered + a_rep + fb1v, 0.0).astype(BF16)
            e2 = jnp.maximum(_dot(e1, fw2[...]) + fb2[...], 0.0).astype(BF16)
            msgs = _dot(e2, fw3[...]) + fb3[...]                   # (deg*N, P) f32
            # Per-destination message sum: deg contiguous slab adds (VPU, exact f32).
            m_b = msgs[0:n_nodes, :]
            for d in range(1, deg):
                m_b = m_b + msgs[d * n_nodes:(d + 1) * n_nodes, :]
            ms.append(m_b)
        m = ms[0] if batch_block == 1 else jnp.concatenate(ms, axis=0)   # (rows, P)

        # ---- g MLP on concat([X, M]) (layer-1 weights split over the two halves) ----
        g1 = jnp.maximum(_dot(x.astype(BF16), gw1a[...]) +
                         _dot(m.astype(BF16), gw1b[...]) + gb1[...], 0.0).astype(BF16)
        g2 = jnp.maximum(_dot(g1, gw2[...]) + gb2[...], 0.0).astype(BF16)
        g_in = _dot(g2, gw3[...]) + gb3[...]   # (rows, P) f32

        # ---- single-step LSTM cell: gates fused into two matmuls, order [i, f, o | g] ----
        gates = _dot(g_in.astype(BF16), wih[...]) + _dot(hb, whh[...]) + blstm[...]
        sig = jax.nn.sigmoid(gates[:, :3 * P])     # one wide sigmoid over i|f|o
        i_g = sig[:, 0 * P:1 * P]
        f_g = sig[:, 1 * P:2 * P]
        o_g = sig[:, 2 * P:3 * P]
        g_g = jnp.tanh(gates[:, 3 * P:])
        c_new = f_g * c + i_g * g_g
        h_new = o_g * jnp.tanh(c_new)

        # ---- readout MLP r (final layer zero lane-padded to 128 -> dense vst) ----
        r1 = jnp.maximum(_dot(h_new.astype(BF16), rw1[...]) + rb1[...], 0.0).astype(BF16)
        r2 = jnp.maximum(_dot(r1, rw2[...]) + rb2[...], 0.0).astype(BF16)
        y = _dot(r2, rw3[...]) + rb3[...]          # (rows, out_pad)

        h_scr[...] = h_new
        c_scr[...] = c_new
        y_ref[0] = y

    return kernel


# ----------------------------------------------------------------------------- graph

def determine_edges(dim_x, dim_y):
    m = dim_x * dim_y
    edges = []
    for r in range(m):
        for col in range(m):
            nbrs = set()
            for k in range(m):
                nbrs.add(r * m + k)      # same row
                nbrs.add(k * m + col)    # same column
            br = (r // dim_y) * dim_y
            bc = (col // dim_x) * dim_x
            for rr in range(br, br + dim_y):      # same box
                for cc in range(bc, bc + dim_x):
                    nbrs.add(rr * m + cc)
            nbrs.discard(r * m + col)
            edges.append(sorted(nbrs))
    return edges


def build_neighbor_selector(edges):
    """Degree-major bf16 one-hot neighbour-gather matrix (edge slot = d*N + node)."""
    n = len(edges)
    degs = {len(e) for e in edges}
    assert len(degs) == 1, "fixed-degree graph required for the slab message sum"
    deg = degs.pop()
    selo = np.zeros((deg * n, n), np.float32)
    for node in range(n):
        for d, other in enumerate(edges[node]):
            selo[d * n + node, other] = 1.0        # one-hot: exact in bf16
    return jnp.asarray(selo, dtype=BF16), deg


# ----------------------------------------------------------------------------- params

def _linear_init(key, fan_in, fan_out):
    kw, kb = jax.random.split(key)
    bound = 1.0 / np.sqrt(fan_in)
    w = jax.random.uniform(kw, (fan_in, fan_out), F32, -bound, bound)
    b = jax.random.uniform(kb, (1, fan_out), F32, -bound, bound)
    return w, b


def init_params(key, max_digit, embed_size, hidden):
    keys = jax.random.split(key, 32)
    ki = iter(keys)
    p = {}
    p["embed"] = jax.random.normal(next(ki), (max_digit + 1, embed_size), F32)
    # input MLP: embed -> h -> h -> h
    p["iw1"], p["ib1"] = _linear_init(next(ki), embed_size, hidden)
    p["iw2"], p["ib2"] = _linear_init(next(ki), hidden, hidden)
    p["iw3"], p["ib3"] = _linear_init(next(ki), hidden, hidden)
    # f MLP: 2h -> h -> h -> h (layer 1 split over [node, other])
    w1, p["fb1"] = _linear_init(next(ki), 2 * hidden, hidden)
    p["fw1a"], p["fw1b"] = w1[:hidden], w1[hidden:]
    p["fw2"], p["fb2"] = _linear_init(next(ki), hidden, hidden)
    p["fw3"], p["fb3"] = _linear_init(next(ki), hidden, hidden)
    # g MLP: 2h -> h -> h -> h (layer 1 split over [X, M])
    w1, p["gb1"] = _linear_init(next(ki), 2 * hidden, hidden)
    p["gw1a"], p["gw1b"] = w1[:hidden], w1[hidden:]
    p["gw2"], p["gb2"] = _linear_init(next(ki), hidden, hidden)
    p["gw3"], p["gb3"] = _linear_init(next(ki), hidden, hidden)
    # LSTM cell gates i, f, g, o (biases folded: b_ih + b_hh)
    for gate in ("i", "f", "g", "o"):
        wih, bih = _linear_init(next(ki), hidden, hidden)
        whh, bhh = _linear_init(next(ki), hidden, hidden)
        p["wi" + gate] = wih
        p["wh" + gate] = whh
        p["b" + gate] = bih + bhh
    # r MLP: h -> h -> h -> max_digit
    p["rw1"], p["rb1"] = _linear_init(next(ki), hidden, hidden)
    p["rw2"], p["rb2"] = _linear_init(next(ki), hidden, hidden)
    p["rw3"], p["rb3"] = _linear_init(next(ki), hidden, max_digit)
    return p


def prepare_kernel_params(p, hid_pad, out_pad):
    """Zero lane/row-padded bf16 weights, fused f-layer-1, fused [i,f,o,g] LSTM gates."""
    P = hid_pad

    def pad(w, rows=P, cols=P):
        return jnp.zeros((rows, cols), F32).at[:w.shape[0], :w.shape[1]].set(w)

    bf = lambda w: w.astype(BF16)

    fw1 = jnp.concatenate([pad(p["fw1a"]), pad(p["fw1b"])], axis=1)          # (P, 2P)
    wih = jnp.concatenate([pad(p["wii"]), pad(p["wif"]),
                           pad(p["wio"]), pad(p["wig"])], axis=1)            # (P, 4P) [i,f,o,g]
    whh = jnp.concatenate([pad(p["whi"]), pad(p["whf"]),
                           pad(p["who"]), pad(p["whg"])], axis=1)
    blstm = jnp.concatenate([pad(p["bi"], 1, P), pad(p["bf"], 1, P),
                             pad(p["bo"], 1, P), pad(p["bg"], 1, P)], axis=1)  # (1, 4P)
    return (bf(fw1), pad(p["fb1"], 1, P),
            bf(pad(p["fw2"])), pad(p["fb2"], 1, P),
            bf(pad(p["fw3"])), pad(p["fb3"], 1, P),
            bf(pad(p["gw1a"])), bf(pad(p["gw1b"])), pad(p["gb1"], 1, P),
            bf(pad(p["gw2"])), pad(p["gb2"], 1, P),
            bf(pad(p["gw3"])), pad(p["gb3"], 1, P),
            bf(wih), bf(whh), blstm,
            bf(pad(p["rw1"])), pad(p["rb1"], 1, P),
            bf(pad(p["rw2"])), pad(p["rb2"], 1, P),
            bf(pad(p["rw3"], P, out_pad)), pad(p["rb3"], 1, out_pad))


# ----------------------------------------------------------------------------- forward

def rrn_forward(grids, iters, params, edges, dim_x, dim_y, hidden, c0_key,
                graph=None, batch_block=1):
    max_digit = dim_x * dim_y
    n_nodes = max_digit ** 2
    batch = grids.shape[0]
    bn = batch * n_nodes
    assert batch % batch_block == 0
    rows_blk = batch_block * n_nodes
    # TODO(synk): for 9x9 sudoku (n_nodes=81) pad node rows to a multiple of 8 so the
    # per-degree slab slices stay sublane-aligned.

    if graph is None:                       # tiny & batch-independent; cacheable by caller
        graph = build_neighbor_selector(edges)
    selo, deg = graph

    hid_pad = max(128, ((hidden + 127) // 128) * 128)   # lane-dense hidden
    out_pad = ((max_digit + 127) // 128) * 128

    # nn.Embedding lookup + one-shot input MLP: glue, left to XLA.
    emb = params["embed"][grids.reshape(-1)]                         # (BN, embed)
    x = jnp.maximum(emb @ params["iw1"] + params["ib1"], 0.0)
    x = jnp.maximum(x @ params["iw2"] + params["ib2"], 0.0)
    x = (x @ params["iw3"] + params["ib3"]).astype(F32)              # (BN, hidden)
    x = jnp.zeros((bn, hid_pad), F32).at[:, :hidden].set(x)          # zero lane-pad

    c0 = jax.random.normal(c0_key, (bn, hidden), F32)                # g_lstm_c = randn
    c0 = jnp.zeros((bn, hid_pad), F32).at[:, :hidden].set(c0)

    kp = prepare_kernel_params(params, hid_pad, out_pad)
    ins = (x, c0, selo) + kp

    def const_spec(a):
        return pl.BlockSpec(a.shape, lambda b, t: (0,) * a.ndim)     # DMA'd once

    blk_spec = pl.BlockSpec((rows_blk, hid_pad), lambda b, t: (b, 0))
    in_specs = [blk_spec, blk_spec] + [const_spec(a) for a in ins[2:]]

    kernel = make_rrn_kernel(batch_block, n_nodes, deg, hid_pad)
    y_pad = pl.pallas_call(
        kernel,
        out_shape=jax.ShapeDtypeStruct((iters, bn, out_pad), F32),
        grid_spec=pltpu.PrefetchScalarGridSpec(
            num_scalar_prefetch=0,
            grid=(batch // batch_block, iters),     # (batch blocks, RRN iterations)
            in_specs=in_specs,
            out_specs=pl.BlockSpec((1, rows_blk, out_pad), lambda b, t: (t, b, 0)),
            scratch_shapes=[
                pltpu.VMEM((rows_blk, hid_pad), F32),   # H (carried across iterations)
                pltpu.VMEM((rows_blk, hid_pad), F32),   # c (carried across iterations)
            ]),
        compiler_params=pltpu.CompilerParams(
            # batch blocks are independent (megacore on v7x); iterations carry state
            dimension_semantics=("parallel", "arbitrary"),
            vmem_limit_bytes=_vmem_limit_bytes()),
    )(*ins)

    logits = y_pad[:, :, :max_digit]                                 # drop lane padding
    return logits.reshape(iters, batch, n_nodes, max_digit)


# ----------------------------------------------------------------------------- main

if __name__ == "__main__":
    dim_x, dim_y = 2, 2            # 4x4 sudoku -> max_digit=4, num_nodes=16, deg=7
    max_digit = dim_x * dim_y
    num_nodes = max_digit ** 2
    batch_size = 2
    embed_size = 16
    hidden = 32
    iters = 3

    key = jax.random.PRNGKey(0)
    k_params, k_grid, k_c0 = jax.random.split(key, 3)

    params = init_params(k_params, max_digit, embed_size, hidden)
    edges = determine_edges(dim_x, dim_y)
    graph = build_neighbor_selector(edges)
    grids = jax.random.randint(k_grid, (batch_size, num_nodes), 0, max_digit + 1, jnp.int32)

    out = rrn_forward(grids, iters, params, edges, dim_x, dim_y, hidden, k_c0,
                      graph, batch_block=1)
    out = jax.block_until_ready(out)

    assert out.shape == (iters, batch_size, num_nodes, max_digit), out.shape
    assert bool(jnp.isfinite(out).all())
    print("KERNEL_OK")
</pallas_src>

<mosaic_0001>
module attributes {stable_mosaic.version = 11 : i64} {
  func.func @kernel(%arg0: i32, %arg1: i32, %arg2: memref<16x128xf32, #tpu.memory_space<vmem>>, %arg3: memref<16x128xf32, #tpu.memory_space<vmem>>, %arg4: memref<112x16xbf16, #tpu.memory_space<vmem>>, %arg5: memref<128x256xbf16, #tpu.memory_space<vmem>>, %arg6: memref<1x128xf32, #tpu.memory_space<vmem>>, %arg7: memref<128x128xbf16, #tpu.memory_space<vmem>>, %arg8: memref<1x128xf32, #tpu.memory_space<vmem>>, %arg9: memref<128x128xbf16, #tpu.memory_space<vmem>>, %arg10: memref<1x128xf32, #tpu.memory_space<vmem>>, %arg11: memref<128x128xbf16, #tpu.memory_space<vmem>>, %arg12: memref<128x128xbf16, #tpu.memory_space<vmem>>, %arg13: memref<1x128xf32, #tpu.memory_space<vmem>>, %arg14: memref<128x128xbf16, #tpu.memory_space<vmem>>, %arg15: memref<1x128xf32, #tpu.memory_space<vmem>>, %arg16: memref<128x128xbf16, #tpu.memory_space<vmem>>, %arg17: memref<1x128xf32, #tpu.memory_space<vmem>>, %arg18: memref<128x512xbf16, #tpu.memory_space<vmem>>, %arg19: memref<128x512xbf16, #tpu.memory_space<vmem>>, %arg20: memref<1x512xf32, #tpu.memory_space<vmem>>, %arg21: memref<128x128xbf16, #tpu.memory_space<vmem>>, %arg22: memref<1x128xf32, #tpu.memory_space<vmem>>, %arg23: memref<128x128xbf16, #tpu.memory_space<vmem>>, %arg24: memref<1x128xf32, #tpu.memory_space<vmem>>, %arg25: memref<128x128xbf16, #tpu.memory_space<vmem>>, %arg26: memref<1x128xf32, #tpu.memory_space<vmem>>, %arg27: memref<1x16x128xf32, #tpu.memory_space<vmem>>, %arg28: memref<16x128xf32, #tpu.memory_space<vmem>>, %arg29: memref<16x128xf32, #tpu.memory_space<vmem>>) attributes {dimension_semantics = [#tpu.dimension_semantics<parallel>, #tpu.dimension_semantics<arbitrary>], iteration_bounds = array<i64: 2, 3>, scalar_prefetch = 0 : i64, scratch_operands = 2 : i64, tpu.core_type = #tpu.core_type<tc>, window_params = [{transform_indices = @transform_0, window_bounds = array<i64: 16, 128>}, {transform_indices = @transform_1, window_bounds = array<i64: 16, 128>}, {pipeline_mode = #tpu.pipeline_mode<synchronous>, transform_indices = @transform_2, window_bounds = array<i64: 112, 16>}, {pipeline_mode = #tpu.pipeline_mode<synchronous>, transform_indices = @transform_3, window_bounds = array<i64: 128, 256>}, {pipeline_mode = #tpu.pipeline_mode<synchronous>, transform_indices = @transform_4, window_bounds = array<i64: 1, 128>}, {pipeline_mode = #tpu.pipeline_mode<synchronous>, transform_indices = @transform_5, window_bounds = array<i64: 128, 128>}, {pipeline_mode = #tpu.pipeline_mode<synchronous>, transform_indices = @transform_6, window_bounds = array<i64: 1, 128>}, {pipeline_mode = #tpu.pipeline_mode<synchronous>, transform_indices = @transform_7, window_bounds = array<i64: 128, 128>}, {pipeline_mode = #tpu.pipeline_mode<synchronous>, transform_indices = @transform_8, window_bounds = array<i64: 1, 128>}, {pipeline_mode = #tpu.pipeline_mode<synchronous>, transform_indices = @transform_9, window_bounds = array<i64: 128, 128>}, {pipeline_mode = #tpu.pipeline_mode<synchronous>, transform_indices = @transform_10, window_bounds = array<i64: 128, 128>}, {pipeline_mode = #tpu.pipeline_mode<synchronous>, transform_indices = @transform_11, window_bounds = array<i64: 1, 128>}, {pipeline_mode = #tpu.pipeline_mode<synchronous>, transform_indices = @transform_12, window_bounds = array<i64: 128, 128>}, {pipeline_mode = #tpu.pipeline_mode<synchronous>, transform_indices = @transform_13, window_bounds = array<i64: 1, 128>}, {pipeline_mode = #tpu.pipeline_mode<synchronous>, transform_indices = @transform_14, window_bounds = array<i64: 128, 128>}, {pipeline_mode = #tpu.pipeline_mode<synchronous>, transform_indices = @transform_15, window_bounds = array<i64: 1, 128>}, {pipeline_mode = #tpu.pipeline_mode<synchronous>, transform_indices = @transform_16, window_bounds = array<i64: 128, 512>}, {pipeline_mode = #tpu.pipeline_mode<synchronous>, transform_indices = @transform_17, window_bounds = array<i64: 128, 512>}, {pipeline_mode = #tpu.pipeline_mode<synchronous>, transform_indices = @transform_18, window_bounds = array<i64: 1, 512>}, {pipeline_mode = #tpu.pipeline_mode<synchronous>, transform_indices = @transform_19, window_bounds = array<i64: 128, 128>}, {pipeline_mode = #tpu.pipeline_mode<synchronous>, transform_indices = @transform_20, window_bounds = array<i64: 1, 128>}, {pipeline_mode = #tpu.pipeline_mode<synchronous>, transform_indices = @transform_21, window_bounds = array<i64: 128, 128>}, {pipeline_mode = #tpu.pipeline_mode<synchronous>, transform_indices = @transform_22, window_bounds = array<i64: 1, 128>}, {pipeline_mode = #tpu.pipeline_mode<synchronous>, transform_indices = @transform_23, window_bounds = array<i64: 128, 128>}, {pipeline_mode = #tpu.pipeline_mode<synchronous>, transform_indices = @transform_24, window_bounds = array<i64: 1, 128>}, {transform_indices = @transform_25, window_bounds = array<i64: 1, 16, 128>}]} {
    %c0_i32 = arith.constant 0 : i32
    %0 = arith.cmpi eq, %arg1, %c0_i32 : i32
    %1 = arith.extui %0 : i1 to i32
    %c0_i32_0 = arith.constant 0 : i32
    %2 = arith.cmpi ne, %1, %c0_i32_0 : i32
    scf.if %2 {
      %c0_78 = arith.constant 0 : index
      %c0_79 = arith.constant 0 : index
      %126 = vector.load %arg2[%c0_78, %c0_79] : memref<16x128xf32, #tpu.memory_space<vmem>>, vector<16x128xf32>
      %c0_80 = arith.constant 0 : index
      %c0_81 = arith.constant 0 : index
      %127 = vector.load %arg28[%c0_80, %c0_81] : memref<16x128xf32, #tpu.memory_space<vmem>>, vector<16x128xf32>
      tpu.vector_store %arg28[%c0_80, %c0_81], %126 {strides = array<i32>} : memref<16x128xf32, #tpu.memory_space<vmem>>, vector<16x128xf32>,
      %c0_82 = arith.constant 0 : index
      %c0_83 = arith.constant 0 : index
      %128 = vector.load %arg3[%c0_82, %c0_83] : memref<16x128xf32, #tpu.memory_space<vmem>>, vector<16x128xf32>
      %c0_84 = arith.constant 0 : index
      %c0_85 = arith.constant 0 : index
      %129 = vector.load %arg29[%c0_84, %c0_85] : memref<16x128xf32, #tpu.memory_space<vmem>>, vector<16x128xf32>
      tpu.vector_store %arg29[%c0_84, %c0_85], %128 {strides = array<i32>} : memref<16x128xf32, #tpu.memory_space<vmem>>, vector<16x128xf32>,
    } else {
    }
    %c0 = arith.constant 0 : index
    %c0_1 = arith.constant 0 : index
    %3 = vector.load %arg2[%c0, %c0_1] : memref<16x128xf32, #tpu.memory_space<vmem>>, vector<16x128xf32>
    %c0_2 = arith.constant 0 : index
    %c0_3 = arith.constant 0 : index
    %4 = vector.load %arg28[%c0_2, %c0_3] : memref<16x128xf32, #tpu.memory_space<vmem>>, vector<16x128xf32>
    %c0_4 = arith.constant 0 : index
    %c0_5 = arith.constant 0 : index
    %5 = vector.load %arg29[%c0_4, %c0_5] : memref<16x128xf32, #tpu.memory_space<vmem>>, vector<16x128xf32>
    %6 = arith.truncf %4 : vector<16x128xf32> to vector<16x128xbf16>
    %c0_6 = arith.constant 0 : index
    %c0_7 = arith.constant 0 : index
    %7 = vector.load %arg5[%c0_6, %c0_7] : memref<128x256xbf16, #tpu.memory_space<vmem>>, vector<128x256xbf16>
    %cst = arith.constant dense<0.000000e+00> : vector<16x256xf32>
    %8 = tpu.matmul %6, %7, %cst {dimension_numbers = #tpu.dot_dimension_numbers<[1], [0], [0], [1], [0, 0, 1, 1], [], []>} : vector<16x128xbf16>, vector<128x256xbf16>, vector<16x256xf32> -> vector<16x256xf32>
    %9 = vector.extract_strided_slice %8 {offsets = [0, 0], sizes = [16, 128], strides = [1, 1]} : vector<16x256xf32> to vector<16x128xf32>
    %10 = vector.extract_strided_slice %8 {offsets = [0, 128], sizes = [16, 128], strides = [1, 1]} : vector<16x256xf32> to vector<16x128xf32>
    %11 = arith.truncf %10 : vector<16x128xf32> to vector<16x128xbf16>
    %c0_8 = arith.constant 0 : index
    %c0_9 = arith.constant 0 : index
    %12 = vector.load %arg4[%c0_8, %c0_9] : memref<112x16xbf16, #tpu.memory_space<vmem>>, vector<112x16xbf16>
    %c0_10 = arith.constant 0 : index
    %c0_11 = arith.constant 0 : index
    %13 = vector.load %arg6[%c0_10, %c0_11] : memref<1x128xf32, #tpu.memory_space<vmem>>, vector<1x128xf32>
    %cst_12 = arith.constant dense<0.000000e+00> : vector<112x128xf32>
    %14 = tpu.matmul %12, %11, %cst_12 {dimension_numbers = #tpu.dot_dimension_numbers<[1], [0], [0], [1], [0, 0, 1, 1], [], []>} : vector<112x16xbf16>, vector<16x128xbf16>, vector<112x128xf32> -> vector<112x128xf32>
    %15 = tpu.concatenate %9, %9, %9, %9, %9, %9, %9 in 0 : vector<16x128xf32>, vector<16x128xf32>, vector<16x128xf32>, vector<16x128xf32>, vector<16x128xf32>, vector<16x128xf32>, vector<16x128xf32> -> vector<112x128xf32>
    %16 = arith.addf %14, %15 : vector<112x128xf32>
    %17 = vector.broadcast %13 : vector<1x128xf32> to vector<112x128xf32>
    %18 = arith.addf %16, %17 : vector<112x128xf32>
    %cst_13 = arith.constant 0.000000e+00 : f32
    %19 = vector.broadcast %cst_13 : f32 to vector<112x128xf32>
    %20 = arith.maximumf %18, %19 : vector<112x128xf32>
    %21 = arith.truncf %20 : vector<112x128xf32> to vector<112x128xbf16>
    %c0_14 = arith.constant 0 : index
    %c0_15 = arith.constant 0 : index
    %22 = vector.load %arg7[%c0_14, %c0_15] : memref<128x128xbf16, #tpu.memory_space<vmem>>, vector<128x128xbf16>
    %cst_16 = arith.constant dense<0.000000e+00> : vector<112x128xf32>
    %23 = tpu.matmul %21, %22, %cst_16 {dimension_numbers = #tpu.dot_dimension_numbers<[1], [0], [0], [1], [0, 0, 1, 1], [], []>} : vector<112x128xbf16>, vector<128x128xbf16>, vector<112x128xf32> -> vector<112x128xf32>
    %c0_17 = arith.constant 0 : index
    %c0_18 = arith.constant 0 : index
    %24 = vector.load %arg8[%c0_17, %c0_18] : memref<1x128xf32, #tpu.memory_space<vmem>>, vector<1x128xf32>
    %25 = vector.broadcast %24 : vector<1x128xf32> to vector<112x128xf32>
    %26 = arith.addf %23, %25 : vector<112x128xf32>
    %cst_19 = arith.constant 0.000000e+00 : f32
    %27 = vector.broadcast %cst_19 : f32 to vector<112x128xf32>
    %28 = arith.maximumf %26, %27 : vector<112x128xf32>
    %29 = arith.truncf %28 : vector<112x128xf32> to vector<112x128xbf16>
    %c0_20 = arith.constant 0 : index
    %c0_21 = arith.constant 0 : index
    %30 = vector.load %arg9[%c0_20, %c0_21] : memref<128x128xbf16, #tpu.memory_space<vmem>>, vector<128x128xbf16>
    %cst_22 = arith.constant dense<0.000000e+00> : vector<112x128xf32>
    %31 = tpu.matmul %29, %30, %cst_22 {dimension_numbers = #tpu.dot_dimension_numbers<[1], [0], [0], [1], [0, 0, 1, 1], [], []>} : vector<112x128xbf16>, vector<128x128xbf16>, vector<112x128xf32> -> vector<112x128xf32>
    %c0_23 = arith.constant 0 : index
    %c0_24 = arith.constant 0 : index
    %32 = vector.load %arg10[%c0_23, %c0_24] : memref<1x128xf32, #tpu.memory_space<vmem>>, vector<1x128xf32>
    %33 = vector.broadcast %32 : vector<1x128xf32> to vector<112x128xf32>
    %34 = arith.addf %31, %33 : vector<112x128xf32>
    %35 = vector.extract_strided_slice %34 {offsets = [0, 0], sizes = [16, 128], strides = [1, 1]} : vector<112x128xf32> to vector<16x128xf32>
    %36 = vector.extract_strided_slice %34 {offsets = [16, 0], sizes = [16, 128], strides = [1, 1]} : vector<112x128xf32> to vector<16x128xf32>
    %37 = arith.addf %35, %36 : vector<16x128xf32>
    %38 = vector.extract_strided_slice %34 {offsets = [32, 0], sizes = [16, 128], strides = [1, 1]} : vector<112x128xf32> to vector<16x128xf32>
    %39 = arith.addf %37, %38 : vector<16x128xf32>
    %40 = vector.extract_strided_slice %34 {offsets = [48, 0], sizes = [16, 128], strides = [1, 1]} : vector<112x128xf32> to vector<16x128xf32>
    %41 = arith.addf %39, %40 : vector<16x128xf32>
    %42 = vector.extract_strided_slice %34 {offsets = [64, 0], sizes = [16, 128], strides = [1, 1]} : vector<112x128xf32> to vector<16x128xf32>
    %43 = arith.addf %41, %42 : vector<16x128xf32>
    %44 = vector.extract_strided_slice %34 {offsets = [80, 0], sizes = [16, 128], strides = [1, 1]} : vector<112x128xf32> to vector<16x128xf32>
    %45 = arith.addf %43, %44 : vector<16x128xf32>
    %46 = vector.extract_strided_slice %34 {offsets = [96, 0], sizes = [16, 128], strides = [1, 1]} : vector<112x128xf32> to vector<16x128xf32>
    %47 = arith.addf %45, %46 : vector<16x128xf32>
    %48 = arith.truncf %3 : vector<16x128xf32> to vector<16x128xbf16>
    %c0_25 = arith.constant 0 : index
    %c0_26 = arith.constant 0 : index
    %49 = vector.load %arg11[%c0_25, %c0_26] : memref<128x128xbf16, #tpu.memory_space<vmem>>, vector<128x128xbf16>
    %cst_27 = arith.constant dense<0.000000e+00> : vector<16x128xf32>
    %50 = tpu.matmul %48, %49, %cst_27 {dimension_numbers = #tpu.dot_dimension_numbers<[1], [0], [0], [1], [0, 0, 1, 1], [], []>} : vector<16x128xbf16>, vector<128x128xbf16>, vector<16x128xf32> -> vector<16x128xf32>
    %51 = arith.truncf %47 : vector<16x128xf32> to vector<16x128xbf16>
    %c0_28 = arith.constant 0 : index
    %c0_29 = arith.constant 0 : index
    %52 = vector.load %arg12[%c0_28, %c0_29] : memref<128x128xbf16, #tpu.memory_space<vmem>>, vector<128x128xbf16>
    %cst_30 = arith.constant dense<0.000000e+00> : vector<16x128xf32>
    %53 = tpu.matmul %51, %52, %cst_30 {dimension_numbers = #tpu.dot_dimension_numbers<[1], [0], [0], [1], [0, 0, 1, 1], [], []>} : vector<16x128xbf16>, vector<128x128xbf16>, vector<16x128xf32> -> vector<16x128xf32>
    %54 = arith.addf %50, %53 : vector<16x128xf32>
    %c0_31 = arith.constant 0 : index
    %c0_32 = arith.constant 0 : index
    %55 = vector.load %arg13[%c0_31, %c0_32] : memref<1x128xf32, #tpu.memory_space<vmem>>, vector<1x128xf32>
    %56 = vector.broadcast %55 : vector<1x128xf32> to vector<16x128xf32>
    %57 = arith.addf %54, %56 : vector<16x128xf32>
    %cst_33 = arith.constant 0.000000e+00 : f32
    %58 = vector.broadcast %cst_33 : f32 to vector<16x128xf32>
    %59 = arith.maximumf %57, %58 : vector<16x128xf32>
    %60 = arith.truncf %59 : vector<16x128xf32> to vector<16x128xbf16>
    %c0_34 = arith.constant 0 : index
    %c0_35 = arith.constant 0 : index
    %61 = vector.load %arg14[%c0_34, %c0_35] : memref<128x128xbf16, #tpu.memory_space<vmem>>, vector<128x128xbf16>
    %cst_36 = arith.constant dense<0.000000e+00> : vector<16x128xf32>
    %62 = tpu.matmul %60, %61, %cst_36 {dimension_numbers = #tpu.dot_dimension_numbers<[1], [0], [0], [1], [0, 0, 1, 1], [], []>} : vector<16x128xbf16>, vector<128x128xbf16>, vector<16x128xf32> -> vector<16x128xf32>
    %c0_37 = arith.constant 0 : index
    %c0_38 = arith.constant 0 : index
    %63 = vector.load %arg15[%c0_37, %c0_38] : memref<1x128xf32, #tpu.memory_space<vmem>>, vector<1x128xf32>
    %64 = vector.broadcast %63 : vector<1x128xf32> to vector<16x128xf32>
    %65 = arith.addf %62, %64 : vector<16x128xf32>
    %cst_39 = arith.constant 0.000000e+00 : f32
    %66 = vector.broadcast %cst_39 : f32 to vector<16x128xf32>
    %67 = arith.maximumf %65, %66 : vector<16x128xf32>
    %68 = arith.truncf %67 : vector<16x128xf32> to vector<16x128xbf16>
    %c0_40 = arith.constant 0 : index
    %c0_41 = arith.constant 0 : index
    %69 = vector.load %arg16[%c0_40, %c0_41] : memref<128x128xbf16, #tpu.memory_space<vmem>>, vector<128x128xbf16>
    %cst_42 = arith.constant dense<0.000000e+00> : vector<16x128xf32>
    %70 = tpu.matmul %68, %69, %cst_42 {dimension_numbers = #tpu.dot_dimension_numbers<[1], [0], [0], [1], [0, 0, 1, 1], [], []>} : vector<16x128xbf16>, vector<128x128xbf16>, vector<16x128xf32> -> vector<16x128xf32>
    %c0_43 = arith.constant 0 : index
    %c0_44 = arith.constant 0 : index
    %71 = vector.load %arg17[%c0_43, %c0_44] : memref<1x128xf32, #tpu.memory_space<vmem>>, vector<1x128xf32>
    %72 = vector.broadcast %71 : vector<1x128xf32> to vector<16x128xf32>
    %73 = arith.addf %70, %72 : vector<16x128xf32>
    %74 = arith.truncf %73 : vector<16x128xf32> to vector<16x128xbf16>
    %c0_45 = arith.constant 0 : index
    %c0_46 = arith.constant 0 : index
    %75 = vector.load %arg18[%c0_45, %c0_46] : memref<128x512xbf16, #tpu.memory_space<vmem>>, vector<128x512xbf16>
    %cst_47 = arith.constant dense<0.000000e+00> : vector<16x512xf32>
    %76 = tpu.matmul %74, %75, %cst_47 {dimension_numbers = #tpu.dot_dimension_numbers<[1], [0], [0], [1], [0, 0, 1, 1], [], []>} : vector<16x128xbf16>, vector<128x512xbf16>, vector<16x512xf32> -> vector<16x512xf32>
    %c0_48 = arith.constant 0 : index
    %c0_49 = arith.constant 0 : index
    %77 = vector.load %arg19[%c0_48, %c0_49] : memref<128x512xbf16, #tpu.memory_space<vmem>>, vector<128x512xbf16>
    %cst_50 = arith.constant dense<0.000000e+00> : vector<16x512xf32>
    %78 = tpu.matmul %6, %77, %cst_50 {dimension_numbers = #tpu.dot_dimension_numbers<[1], [0], [0], [1], [0, 0, 1, 1], [], []>} : vector<16x128xbf16>, vector<128x512xbf16>, vector<16x512xf32> -> vector<16x512xf32>
    %79 = arith.addf %76, %78 : vector<16x512xf32>
    %c0_51 = arith.constant 0 : index
    %c0_52 = arith.constant 0 : index
    %80 = vector.load %arg20[%c0_51, %c0_52] : memref<1x512xf32, #tpu.memory_space<vmem>>, vector<1x512xf32>
    %81 = vector.broadcast %80 : vector<1x512xf32> to vector<16x512xf32>
    %82 = arith.addf %79, %81 : vector<16x512xf32>
    %83 = vector.extract_strided_slice %82 {offsets = [0, 0], sizes = [16, 384], strides = [1, 1]} : vector<16x512xf32> to vector<16x384xf32>
    %84 = arith.negf %83 : vector<16x384xf32>
    %85 = math.exp %84 : vector<16x384xf32>
    %cst_53 = arith.constant 1.000000e+00 : f32
    %86 = vector.broadcast %cst_53 : f32 to vector<16x384xf32>
    %87 = arith.addf %86, %85 : vector<16x384xf32>
    %88 = arith.divf %86, %87 : vector<16x384xf32>
    %89 = vector.extract_strided_slice %88 {offsets = [0, 0], sizes = [16, 128], strides = [1, 1]} : vector<16x384xf32> to vector<16x128xf32>
    %90 = vector.extract_strided_slice %88 {offsets = [0, 128], sizes = [16, 128], strides = [1, 1]} : vector<16x384xf32> to vector<16x128xf32>
    %91 = vector.extract_strided_slice %88 {offsets = [0, 256], sizes = [16, 128], strides = [1, 1]} : vector<16x384xf32> to vector<16x128xf32>
    %92 = vector.extract_strided_slice %82 {offsets = [0, 384], sizes = [16, 128], strides = [1, 1]} : vector<16x512xf32> to vector<16x128xf32>
    %93 = math.tanh %92 : vector<16x128xf32>
    %94 = arith.mulf %90, %5 : vector<16x128xf32>
    %95 = arith.mulf %89, %93 : vector<16x128xf32>
    %96 = arith.addf %94, %95 : vector<16x128xf32>
    %97 = math.tanh %96 : vector<16x128xf32>
    %98 = arith.mulf %91, %97 : vector<16x128xf32>
    %99 = arith.truncf %98 : vector<16x128xf32> to vector<16x128xbf16>
    %c0_54 = arith.constant 0 : index
    %c0_55 = arith.constant 0 : index
    %100 = vector.load %arg21[%c0_54, %c0_55] : memref<128x128xbf16, #tpu.memory_space<vmem>>, vector<128x128xbf16>
    %cst_56 = arith.constant dense<0.000000e+00> : vector<16x128xf32>
    %101 = tpu.matmul %99, %100, %cst_56 {dimension_numbers = #tpu.dot_dimension_numbers<[1], [0], [0], [1], [0, 0, 1, 1], [], []>} : vector<16x128xbf16>, vector<128x128xbf16>, vector<16x128xf32> -> vector<16x128xf32>
    %c0_57 = arith.constant 0 : index
    %c0_58 = arith.constant 0 : index
    %102 = vector.load %arg22[%c0_57, %c0_58] : memref<1x128xf32, #tpu.memory_space<vmem>>, vector<1x128xf32>
    %103 = vector.broadcast %102 : vector<1x128xf32> to vector<16x128xf32>
    %104 = arith.addf %101, %103 : vector<16x128xf32>
    %cst_59 = arith.constant 0.000000e+00 : f32
    %105 = vector.broadcast %cst_59 : f32 to vector<16x128xf32>
    %106 = arith.maximumf %104, %105 : vector<16x128xf32>
    %107 = arith.truncf %106 : vector<16x128xf32> to vector<16x128xbf16>
    %c0_60 = arith.constant 0 : index
    %c0_61 = arith.constant 0 : index
    %108 = vector.load %arg23[%c0_60, %c0_61] : memref<128x128xbf16, #tpu.memory_space<vmem>>, vector<128x128xbf16>
    %cst_62 = arith.constant dense<0.000000e+00> : vector<16x128xf32>
    %109 = tpu.matmul %107, %108, %cst_62 {dimension_numbers = #tpu.dot_dimension_numbers<[1], [0], [0], [1], [0, 0, 1, 1], [], []>} : vector<16x128xbf16>, vector<128x128xbf16>, vector<16x128xf32> -> vector<16x128xf32>
    %c0_63 = arith.constant 0 : index
    %c0_64 = arith.constant 0 : index
    %110 = vector.load %arg24[%c0_63, %c0_64] : memref<1x128xf32, #tpu.memory_space<vmem>>, vector<1x128xf32>
    %111 = vector.broadcast %110 : vector<1x128xf32> to vector<16x128xf32>
    %112 = arith.addf %109, %111 : vector<16x128xf32>
    %cst_65 = arith.constant 0.000000e+00 : f32
    %113 = vector.broadcast %cst_65 : f32 to vector<16x128xf32>
    %114 = arith.maximumf %112, %113 : vector<16x128xf32>
    %115 = arith.truncf %114 : vector<16x128xf32> to vector<16x128xbf16>
    %c0_66 = arith.constant 0 : index
    %c0_67 = arith.constant 0 : index
    %116 = vector.load %arg25[%c0_66, %c0_67] : memref<128x128xbf16, #tpu.memory_space<vmem>>, vector<128x128xbf16>
    %cst_68 = arith.constant dense<0.000000e+00> : vector<16x128xf32>
    %117 = tpu.matmul %115, %116, %cst_68 {dimension_numbers = #tpu.dot_dimension_numbers<[1], [0], [0], [1], [0, 0, 1, 1], [], []>} : vector<16x128xbf16>, vector<128x128xbf16>, vector<16x128xf32> -> vector<16x128xf32>
    %c0_69 = arith.constant 0 : index
    %c0_70 = arith.constant 0 : index
    %118 = vector.load %arg26[%c0_69, %c0_70] : memref<1x128xf32, #tpu.memory_space<vmem>>, vector<1x128xf32>
    %119 = vector.broadcast %118 : vector<1x128xf32> to vector<16x128xf32>
    %120 = arith.addf %117, %119 : vector<16x128xf32>
    %c0_71 = arith.constant 0 : index
    %c0_72 = arith.constant 0 : index
    %121 = vector.load %arg28[%c0_71, %c0_72] : memref<16x128xf32, #tpu.memory_space<vmem>>, vector<16x128xf32>
    tpu.vector_store %arg28[%c0_71, %c0_72], %98 {strides = array<i32>} : memref<16x128xf32, #tpu.memory_space<vmem>>, vector<16x128xf32>,
    %c0_73 = arith.constant 0 : index
    %c0_74 = arith.constant 0 : index
    %122 = vector.load %arg29[%c0_73, %c0_74] : memref<16x128xf32, #tpu.memory_space<vmem>>, vector<16x128xf32>
    tpu.vector_store %arg29[%c0_73, %c0_74], %96 {strides = array<i32>} : memref<16x128xf32, #tpu.memory_space<vmem>>, vector<16x128xf32>,
    %c0_75 = arith.constant 0 : index
    %c0_76 = arith.constant 0 : index
    %c0_77 = arith.constant 0 : index
    %123 = vector.load %arg27[%c0_75, %c0_76, %c0_77] : memref<1x16x128xf32, #tpu.memory_space<vmem>>, vector<1x16x128xf32>
    %124 = vector.shape_cast %123 : vector<1x16x128xf32> to vector<16x128xf32>
    %125 = vector.shape_cast %120 : vector<16x128xf32> to vector<1x16x128xf32>
    tpu.vector_store %arg27[%c0_75, %c0_76, %c0_77], %125 {strides = array<i32>} : memref<1x16x128xf32, #tpu.memory_space<vmem>>, vector<1x16x128xf32>,
    return
  }
  func.func @transform_0(%arg0: i32, %arg1: i32) -> (i32, i32) {
    %c0_i32 = arith.constant 0 : i32
    %c0_i32_0 = arith.constant 0 : i32
    return %arg0, %c0_i32 : i32, i32
  }
  func.func @transform_1(%arg0: i32, %arg1: i32) -> (i32, i32) {
    %c0_i32 = arith.constant 0 : i32
    %c0_i32_0 = arith.constant 0 : i32
    return %arg0, %c0_i32 : i32, i32
  }
  func.func @transform_2(%arg0: i32, %arg1: i32) -> (i32, i32) {
    %c0_i32 = arith.constant 0 : i32
    %c0_i32_0 = arith.constant 0 : i32
    %c0_i32_1 = arith.constant 0 : i32
    return %c0_i32, %c0_i32_0 : i32, i32
  }
  func.func @transform_3(%arg0: i32, %arg1: i32) -> (i32, i32) {
    %c0_i32 = arith.constant 0 : i32
    %c0_i32_0 = arith.constant 0 : i32
    %c0_i32_1 = arith.constant 0 : i32
    return %c0_i32, %c0_i32_0 : i32, i32
  }
  func.func @transform_4(%arg0: i32, %arg1: i32) -> (i32, i32) {
    %c0_i32 = arith.constant 0 : i32
    %c0_i32_0 = arith.constant 0 : i32
    %c0_i32_1 = arith.constant 0 : i32
    return %c0_i32, %c0_i32_0 : i32, i32
  }
  func.func @transform_5(%arg0: i32, %arg1: i32) -> (i32, i32) {
    %c0_i32 = arith.constant 0 : i32
    %c0_i32_0 = arith.constant 0 : i32
    %c0_i32_1 = arith.constant 0 : i32
    return %c0_i32, %c0_i32_0 : i32, i32
  }
  func.func @transform_6(%arg0: i32, %arg1: i32) -> (i32, i32) {
    %c0_i32 = arith.constant 0 : i32
    %c0_i32_0 = arith.constant 0 : i32
    %c0_i32_1 = arith.constant 0 : i32
    return %c0_i32, %c0_i32_0 : i32, i32
  }
  func.func @transform_7(%arg0: i32, %arg1: i32) -> (i32, i32) {
    %c0_i32 = arith.constant 0 : i32
    %c0_i32_0 = arith.constant 0 : i32
    %c0_i32_1 = arith.constant 0 : i32
    return %c0_i32, %c0_i32_0 : i32, i32
  }
  func.func @transform_8(%arg0: i32, %arg1: i32) -> (i32, i32) {
    %c0_i32 = arith.constant 0 : i32
    %c0_i32_0 = arith.constant 0 : i32
    %c0_i32_1 = arith.constant 0 : i32
    return %c0_i32, %c0_i32_0 : i32, i32
  }
  func.func @transform_9(%arg0: i32, %arg1: i32) -> (i32, i32) {
    %c0_i32 = arith.constant 0 : i32
    %c0_i32_0 = arith.constant 0 : i32
    %c0_i32_1 = arith.constant 0 : i32
    return %c0_i32, %c0_i32_0 : i32, i32
  }
  func.func @transform_10(%arg0: i32, %arg1: i32) -> (i32, i32) {
    %c0_i32 = arith.constant 0 : i32
    %c0_i32_0 = arith.constant 0 : i32
    %c0_i32_1 = arith.constant 0 : i32
    return %c0_i32, %c0_i32_0 : i32, i32
  }
  func.func @transform_11(%arg0: i32, %arg1: i32) -> (i32, i32) {
    %c0_i32 = arith.constant 0 : i32
    %c0_i32_0 = arith.constant 0 : i32
    %c0_i32_1 = arith.constant 0 : i32
    return %c0_i32, %c0_i32_0 : i32, i32
  }
  func.func @transform_12(%arg0: i32, %arg1: i32) -> (i32, i32) {
    %c0_i32 = arith.constant 0 : i32
    %c0_i32_0 = arith.constant 0 : i32
    %c0_i32_1 = arith.constant 0 : i32
    return %c0_i32, %c0_i32_0 : i32, i32
  }
  func.func @transform_13(%arg0: i32, %arg1: i32) -> (i32, i32) {
    %c0_i32 = arith.constant 0 : i32
    %c0_i32_0 = arith.constant 0 : i32
    %c0_i32_1 = arith.constant 0 : i32
    return %c0_i32, %c0_i32_0 : i32, i32
  }
  func.func @transform_14(%arg0: i32, %arg1: i32) -> (i32, i32) {
    %c0_i32 = arith.constant 0 : i32
    %c0_i32_0 = arith.constant 0 : i32
    %c0_i32_1 = arith.constant 0 : i32
    return %c0_i32, %c0_i32_0 : i32, i32
  }
  func.func @transform_15(%arg0: i32, %arg1: i32) -> (i32, i32) {
    %c0_i32 = arith.constant 0 : i32
    %c0_i32_0 = arith.constant 0 : i32
    %c0_i32_1 = arith.constant 0 : i32
    return %c0_i32, %c0_i32_0 : i32, i32
  }
  func.func @transform_16(%arg0: i32, %arg1: i32) -> (i32, i32) {
    %c0_i32 = arith.constant 0 : i32
    %c0_i32_0 = arith.constant 0 : i32
    %c0_i32_1 = arith.constant 0 : i32
    return %c0_i32, %c0_i32_0 : i32, i32
  }
  func.func @transform_17(%arg0: i32, %arg1: i32) -> (i32, i32) {
    %c0_i32 = arith.constant 0 : i32
    %c0_i32_0 = arith.constant 0 : i32
    %c0_i32_1 = arith.constant 0 : i32
    return %c0_i32, %c0_i32_0 : i32, i32
  }
  func.func @transform_18(%arg0: i32, %arg1: i32) -> (i32, i32) {
    %c0_i32 = arith.constant 0 : i32
    %c0_i32_0 = arith.constant 0 : i32
    %c0_i32_1 = arith.constant 0 : i32
    return %c0_i32, %c0_i32_0 : i32, i32
  }
  func.func @transform_19(%arg0: i32, %arg1: i32) -> (i32, i32) {
    %c0_i32 = arith.constant 0 : i32
    %c0_i32_0 = arith.constant 0 : i32
    %c0_i32_1 = arith.constant 0 : i32
    return %c0_i32, %c0_i32_0 : i32, i32
  }
  func.func @transform_20(%arg0: i32, %arg1: i32) -> (i32, i32) {
    %c0_i32 = arith.constant 0 : i32
    %c0_i32_0 = arith.constant 0 : i32
    %c0_i32_1 = arith.constant 0 : i32
    return %c0_i32, %c0_i32_0 : i32, i32
  }
  func.func @transform_21(%arg0: i32, %arg1: i32) -> (i32, i32) {
    %c0_i32 = arith.constant 0 : i32
    %c0_i32_0 = arith.constant 0 : i32
    %c0_i32_1 = arith.constant 0 : i32
    return %c0_i32, %c0_i32_0 : i32, i32
  }
  func.func @transform_22(%arg0: i32, %arg1: i32) -> (i32, i32) {
    %c0_i32 = arith.constant 0 : i32
    %c0_i32_0 = arith.constant 0 : i32
    %c0_i32_1 = arith.constant 0 : i32
    return %c0_i32, %c0_i32_0 : i32, i32
  }
  func.func @transform_23(%arg0: i32, %arg1: i32) -> (i32, i32) {
    %c0_i32 = arith.constant 0 : i32
    %c0_i32_0 = arith.constant 0 : i32
    %c0_i32_1 = arith.constant 0 : i32
    return %c0_i32, %c0_i32_0 : i32, i32
  }
  func.func @transform_24(%arg0: i32, %arg1: i32) -> (i32, i32) {
    %c0_i32 = arith.constant 0 : i32
    %c0_i32_0 = arith.constant 0 : i32
    %c0_i32_1 = arith.constant 0 : i32
    return %c0_i32, %c0_i32_0 : i32, i32
  }
  func.func @transform_25(%arg0: i32, %arg1: i32) -> (i32, i32, i32) {
    %c0_i32 = arith.constant 0 : i32
    %c0_i32_0 = arith.constant 0 : i32
    return %arg1, %arg0, %c0_i32 : i32, i32, i32
  }
}

</mosaic_0001>

<llo_original>
// kernel: tpu_custom_call.1
$region0: #{tpu_custom_call.1}
  #allocation0 [shape = 'u32[]', space=smem, size = 0x4, offset = 0x4, fixed_abs, tag = 'smem constant byte address 0x4 - core index']
  #allocation1 [shape = 'u32[144,128]{1,0:T(1,128)}', space=vmem, size = 0x12000, scoped, tag = 'internal scratch']
  #allocation2 [shape = 'f32[16,128]{1,0:T(8,128)}', space=vmem, size = 0x2000, scoped, tag = 'scratch operand']
  #allocation3 [shape = 'f32[16,128]{1,0:T(8,128)}', space=vmem, size = 0x2000, scoped, tag = 'scratch operand']
  %s0 = inlined_call_operand.hbm [shape: f32[32,128], index: 0, kind: input, shape index: {}]
  %s1 = inlined_call_operand.hbm [shape: f32[32,128], index: 1, kind: input, shape index: {}]
  %s2 = inlined_call_operand.vmem [shape: bf16[112,16], index: 2, kind: input, shape index: {}]
  %s3 = inlined_call_operand.hbm [shape: bf16[128,256], index: 3, kind: input, shape index: {}]
  %s4 = inlined_call_operand.hbm [shape: f32[1,128], index: 4, kind: input, shape index: {}]
  %s5 = inlined_call_operand.vmem [shape: bf16[128,128], index: 5, kind: input, shape index: {}]
  %s6 = inlined_call_operand.hbm [shape: f32[1,128], index: 6, kind: input, shape index: {}]
  %s7 = inlined_call_operand.hbm [shape: bf16[128,128], index: 7, kind: input, shape index: {}]
  %s8 = inlined_call_operand.hbm [shape: f32[1,128], index: 8, kind: input, shape index: {}]
  %s9 = inlined_call_operand.hbm [shape: bf16[128,128], index: 9, kind: input, shape index: {}]
  %s10 = inlined_call_operand.hbm [shape: bf16[128,128], index: 10, kind: input, shape index: {}]
  %s11 = inlined_call_operand.hbm [shape: f32[1,128], index: 11, kind: input, shape index: {}]
  %s12 = inlined_call_operand.hbm [shape: bf16[128,128], index: 12, kind: input, shape index: {}]
  %s13 = inlined_call_operand.hbm [shape: f32[1,128], index: 13, kind: input, shape index: {}]
  %s14 = inlined_call_operand.hbm [shape: bf16[128,128], index: 14, kind: input, shape index: {}]
  %s15 = inlined_call_operand.hbm [shape: f32[1,128], index: 15, kind: input, shape index: {}]
  %s16 = inlined_call_operand.hbm [shape: bf16[128,512], index: 16, kind: input, shape index: {}]
  %s17 = inlined_call_operand.hbm [shape: bf16[128,512], index: 17, kind: input, shape index: {}]
  %s18 = inlined_call_operand.vmem [shape: f32[1,512], index: 18, kind: input, shape index: {}]
  %s19 = inlined_call_operand.vmem [shape: bf16[128,128], index: 19, kind: input, shape index: {}]
  %s20 = inlined_call_operand.vmem [shape: f32[1,128], index: 20, kind: input, shape index: {}]
  %s21 = inlined_call_operand.hbm [shape: bf16[128,128], index: 21, kind: input, shape index: {}]
  %s22 = inlined_call_operand.vmem [shape: f32[1,128], index: 22, kind: input, shape index: {}]
  %s23 = inlined_call_operand.hbm [shape: bf16[128,128], index: 23, kind: input, shape index: {}]
  %s24 = inlined_call_operand.vmem [shape: f32[1,128], index: 24, kind: input, shape index: {}]
  %s25 = inlined_call_operand.hbm [shape: f32[3,32,128], index: 25, kind: output, shape index: {}]
  %s26 = sld [smem:[#allocation0]]
  $region209: #{tpu_custom_call.1} parent=0
    _
  %s28 = ssub.s32 1, %s26
  %s29 = scalar_select 0, %s28, %s26
  $region1: #{tpu_custom_call.1} parent=0
    #allocation4 [shape = 'u8[16384]{0}', space=vmem, size = 0x4000, scoped, tag = 'input window, operand 0']
    #allocation5 [shape = 's32[2]{0}', space=sflag, size = 0x8, scoped, tag = 'scoped memory for tpu_custom_call.1']
    #allocation6 [shape = 's32[2]{0}', space=sflag, size = 0x8, scoped, tag = 'scoped memory for tpu_custom_call.1']
    #allocation7 [shape = 'u8[16384]{0}', space=vmem, size = 0x4000, scoped, tag = 'input window, operand 1']
    #allocation8 [shape = 's32[2]{0}', space=sflag, size = 0x8, scoped, tag = 'scoped memory for tpu_custom_call.1']
    #allocation9 [shape = 'u8[65536]{0}', space=vmem, size = 0x10000, scoped, tag = 'input window, operand 3, single buffered']
    #allocation10 [shape = 'u8[512]{0}', space=vmem, size = 0x400, scoped, tag = 'input window, operand 4, single buffered']
    #allocation11 [shape = 's32[1]{0}', space=sflag, size = 0x4, scoped, tag = 'scoped memory for tpu_custom_call.1']
    #allocation12 [shape = 'u8[512]{0}', space=vmem, size = 0x400, scoped, tag = 'input window, operand 6, single buffered']
    #allocation13 [shape = 'u8[32768]{0}', space=vmem, size = 0x8000, scoped, tag = 'input window, operand 7, single buffered']
    #allocation14 [shape = 's32[1]{0}', space=sflag, size = 0x4, scoped, tag = 'scoped memory for tpu_custom_call.1']
    #allocation15 [shape = 'u8[512]{0}', space=vmem, size = 0x400, scoped, tag = 'input window, operand 8, single buffered']
    #allocation16 [shape = 'u8[32768]{0}', space=vmem, size = 0x8000, scoped, tag = 'input window, operand 9, single buffered']
    #allocation17 [shape = 's32[1]{0}', space=sflag, size = 0x4, scoped, tag = 'scoped memory for tpu_custom_call.1']
    #allocation18 [shape = 'u8[32768]{0}', space=vmem, size = 0x8000, scoped, tag = 'input window, operand 10, single buffered']
    #allocation19 [shape = 'u8[512]{0}', space=vmem, size = 0x400, scoped, tag = 'input window, operand 11, single buffered']
    #allocation20 [shape = 's32[1]{0}', space=sflag, size = 0x4, scoped, tag = 'scoped memory for tpu_custom_call.1']
    #allocation21 [shape = 'u8[32768]{0}', space=vmem, size = 0x8000, scoped, tag = 'input window, operand 12, single buffered']
    #allocation22 [shape = 'u8[512]{0}', space=vmem, size = 0x400, scoped, tag = 'input window, operand 13, single buffered']
    #allocation23 [shape = 's32[1]{0}', space=sflag, size = 0x4, scoped, tag = 'scoped memory for tpu_custom_call.1']
    #allocation24 [shape = 'u8[32768]{0}', space=vmem, size = 0x8000, scoped, tag = 'input window, operand 14, single buffered']
    #allocation25 [shape = 'u8[512]{0}', space=vmem, size = 0x400, scoped, tag = 'input window, operand 15, single buffered']
    #allocation26 [shape = 's32[1]{0}', space=sflag, size = 0x4, scoped, tag = 'scoped memory for tpu_custom_call.1']
    #allocation27 [shape = 'u8[131072]{0}', space=vmem, size = 0x20000, scoped, tag = 'input window, operand 16, single buffered']
    #allocation28 [shape = 'u8[131072]{0}', space=vmem, size = 0x20000, scoped, tag = 'input window, operand 17, single buffered']
    #allocation29 [shape = 's32[1]{0}', space=sflag, size = 0x4, scoped, tag = 'scoped memory for tpu_custom_call.1']
    #allocation30 [shape = 'u8[32768]{0}', space=vmem, size = 0x8000, scoped, tag = 'input window, operand 21, single buffered']
    #allocation31 [shape = 'u8[32768]{0}', space=vmem, size = 0x8000, scoped, tag = 'input window, operand 23, single buffered']
    #allocation32 [shape = 's32[1]{0}', space=sflag, size = 0x4, scoped, tag = 'scoped memory for tpu_custom_call.1']
    #allocation33 [shape = 'u8[16384]{0}', space=vmem, size = 0x4000, scoped, tag = 'output window, operand 0']
    %30 = vsyncpa [#allocation5], 0
    %s31 = scalar_lea.sflag [#allocation5], 1
    %32 = vsyncpa %s31, 0
    %33 = vsyncpa [#allocation8], 0
    %s34 = scalar_lea.sflag [#allocation8], 1
    %35 = vsyncpa %s34, 0
    %36 = vsyncpa [#allocation11], 0
    %37 = vsyncpa [#allocation14], 0
    %38 = vsyncpa [#allocation17], 0
    %39 = vsyncpa [#allocation20], 0
    %40 = vsyncpa [#allocation23], 0
    %41 = vsyncpa [#allocation26], 0
    %42 = vsyncpa [#allocation29], 0
    %43 = vsyncpa [#allocation32], 0
    %44 = vsyncpa [#allocation6], 0
    %s45 = scalar_lea.sflag [#allocation6], 1
    %46 = vsyncpa %s45, 0
    loop: start=0, step=1, limit=8
    $region2: #{tpu_custom_call.1} parent=1 // loop_pre_header
      _
    $region3: #{tpu_custom_call.1} parent=1 // loop_header
      %s48 = sphi 0, %s52
      %p49 = scmp.ge.s32.totalorder %s48, 8
      %s55 = sphi 0, %s67
      %s56 = sphi 0, %s63
      %s57 = sphi 0, %s55
      %s58 = sphi 0, %s56
      %s59 = sphi 0, %s57
      %s60 = sphi 0, %s58
      %s70 = sphi 0, %s72
      %s73 = sphi 0, %s70
      %s74 = sphi 0, %s73
      %s90 = sphi 0, %s74
      %s96 = sphi 0, %s98
      %s99 = sphi 0, %s96
      %s100 = sphi 0, %s99
      %s116 = sphi 0, %s100
      %s120 = sphi 0, %s120
      %s122 = sphi 0, %s120
      %s123 = sphi 0, %s122
      %s137 = sphi 0, %s123
      %s141 = sphi 0, %s141
      %s143 = sphi 0, %s141
      %s144 = sphi 0, %s143
      %s158 = sphi 0, %s144
      %s162 = sphi 0, %s162
      %s164 = sphi 0, %s162
      %s165 = sphi 0, %s164
      %s179 = sphi 0, %s165
      %s183 = sphi 0, %s183
      %s185 = sphi 0, %s183
      %s186 = sphi 0, %s185
      %s200 = sphi 0, %s186
      %s204 = sphi 0, %s204
      %s206 = sphi 0, %s204
      %s207 = sphi 0, %s206
      %s221 = sphi 0, %s207
      %s225 = sphi 0, %s225
      %s227 = sphi 0, %s225
      %s228 = sphi 0, %s227
      %s242 = sphi 0, %s228
      %s246 = sphi 0, %s246
      %s248 = sphi 0, %s246
      %s249 = sphi 0, %s248
      %s263 = sphi 0, %s249
      %s267 = sphi 0, %s267
      %s269 = sphi 0, %s267
      %s270 = sphi 0, %s269
      %s284 = sphi 0, %s270
      %s288 = sphi 0, %s288
      %s290 = sphi 0, %s288
      %s291 = sphi 0, %s290
      %s305 = sphi 0, %s291
      %s309 = sphi 0, %s309
      %s311 = sphi 0, %s309
      %s312 = sphi 0, %s311
      %s326 = sphi 0, %s312
      %s330 = sphi 0, %s330
      %s332 = sphi 0, %s330
      %s333 = sphi 0, %s332
      %s347 = sphi 0, %s333
      %s351 = sphi 0, %s351
      %s353 = sphi 0, %s351
      %s354 = sphi 0, %s353
      %s368 = sphi 0, %s354
      %s372 = sphi 0, %s372
      %s374 = sphi 0, %s372
      %s375 = sphi 0, %s374
      %s389 = sphi 0, %s375
      %s393 = sphi 0, %s393
      %s395 = sphi 0, %s393
      %s396 = sphi 0, %s395
      %s410 = sphi 0, %s396
      %s414 = sphi 0, %s414
      %s416 = sphi 0, %s414
      %s417 = sphi 0, %s416
      %s431 = sphi 0, %s417
      %s435 = sphi 0, %s435
      %s437 = sphi 0, %s435
      %s438 = sphi 0, %s437
      %s452 = sphi 0, %s438
      %s456 = sphi 0, %s456
      %s458 = sphi 0, %s456
      %s459 = sphi 0, %s458
      %s473 = sphi 0, %s459
      %s477 = sphi 0, %s477
      %s479 = sphi 0, %s477
      %s480 = sphi 0, %s479
      %s494 = sphi 0, %s480
      %s498 = sphi 0, %s498
      %s500 = sphi 0, %s498
      %s501 = sphi 0, %s500
      %s515 = sphi 0, %s501
      %s519 = sphi 0, %s519
      %s521 = sphi 0, %s519
      %s522 = sphi 0, %s521
      %s536 = sphi 0, %s522
      %s540 = sphi 0, %s540
      %s542 = sphi 0, %s540
      %s543 = sphi 0, %s542
      %s557 = sphi 0, %s543
      %s561 = sphi 0, %s561
      %s563 = sphi 0, %s561
      %s564 = sphi 0, %s563
      %s578 = sphi 0, %s564
      %s582 = sphi 0, %s582
      %s584 = sphi 0, %s582
      %s585 = sphi 0, %s584
      %s599 = sphi 0, %s585
      %s607 = sphi 0, %s609
      %s610 = sphi 0, %s607
      %s611 = sphi 0, %s610
      %s627 = sphi 0, %s611
    $region4: #{tpu_custom_call.1} parent=1 // loop_header_branch
      %51 = sbr.rel (%p49) target = $region8
    $region5: #{tpu_custom_call.1} parent=1 // loop_body
      %s53 = ssub.s32 %s48, 1
      %s54 = ssub.s32 %s48, 2
      %s61 = sadd.s32 1, %s56
      %p62 = scmp.ge.s32.totalorder %s61, 3
      %s63 = scalar_select %p62, 0, %s61
      %s64 = sadd.s32 1, %s55
      %s65 = scalar_select %p62, %s64, %s55
      %p66 = scmp.ge.s32.totalorder %s65, 2
      %s67 = scalar_select %p66, 0, %s65
      %s68 = ssub.s32 %s55, %s67
      %p69 = scmp.eq.s32.totalorder %s68, 0
      %s71 = sadd.s32 %s70, 1
      %s72 = scalar_select %p69, %s70, %s71
      %p75 = pneg %p69
      %p76 = scmp.eq.s32.totalorder %s48, 5
      %p77 = por %p75, %p76
      %p78 = scmp.ne.s32.totalorder %s70, %s73
      %p79 = scmp.eq.s32.totalorder %s48, 0
      %p80 = por %p78, %p79
      %p81 = scmp.ne.s32.totalorder %s70, %s73
      %p82 = scmp.eq.s32.totalorder %s53, 5
      %p83 = por %p81, %p82
      %p84 = scmp.ne.s32.totalorder %s73, %s74
      %p85 = scmp.eq.s32.totalorder %s53, 0
      %p86 = por %p84, %p85
      %p87 = scmp.ne.s32.totalorder %s73, %s74
      %p88 = scmp.eq.s32.totalorder %s54, 5
      %p89 = por %p87, %p88
      %p91 = scmp.ne.s32.totalorder %s74, %s90
      %p92 = scmp.eq.s32.totalorder %s54, 0
      %p93 = por %p91, %p92
      %s94 = ssub.s32 %s55, %s67
      %p95 = scmp.eq.s32.totalorder %s94, 0
      %s97 = sadd.s32 %s96, 1
      %s98 = scalar_select %p95, %s96, %s97
      %p101 = pneg %p95
      %p102 = scmp.eq.s32.totalorder %s48, 5
      %p103 = por %p101, %p102
      %p104 = scmp.ne.s32.totalorder %s96, %s99
      %p105 = scmp.eq.s32.totalorder %s48, 0
      %p106 = por %p104, %p105
      %p107 = scmp.ne.s32.totalorder %s96, %s99
      %p108 = scmp.eq.s32.totalorder %s53, 5
      %p109 = por %p107, %p108
      %p110 = scmp.ne.s32.totalorder %s99, %s100
      %p111 = scmp.eq.s32.totalorder %s53, 0
      %p112 = por %p110, %p111
      %p113 = scmp.ne.s32.totalorder %s99, %s100
      %p114 = scmp.eq.s32.totalorder %s54, 5
      %p115 = por %p113, %p114
      %p117 = scmp.ne.s32.totalorder %s100, %s116
      %p118 = scmp.eq.s32.totalorder %s54, 0
      %p119 = por %p117, %p118
      %s121 = sadd.s32 %s120, 1
      %p124 = scmp.eq.s32.totalorder %s48, 5
      %p125 = scmp.ne.s32.totalorder %s120, %s122
      %p126 = scmp.eq.s32.totalorder %s48, 0
      %p127 = por %p125, %p126
      %p128 = scmp.ne.s32.totalorder %s120, %s122
      %p129 = scmp.eq.s32.totalorder %s53, 5
      %p130 = por %p128, %p129
      %p131 = scmp.ne.s32.totalorder %s122, %s123
      %p132 = scmp.eq.s32.totalorder %s53, 0
      %p133 = por %p131, %p132
      %p134 = scmp.ne.s32.totalorder %s122, %s123
      %p135 = scmp.eq.s32.totalorder %s54, 5
      %p136 = por %p134, %p135
      %p138 = scmp.ne.s32.totalorder %s123, %s137
      %p139 = scmp.eq.s32.totalorder %s54, 0
      %p140 = por %p138, %p139
      %s142 = sadd.s32 %s141, 1
      %p145 = scmp.eq.s32.totalorder %s48, 5
      %p146 = scmp.ne.s32.totalorder %s141, %s143
      %p147 = scmp.eq.s32.totalorder %s48, 0
      %p148 = por %p146, %p147
      %p149 = scmp.ne.s32.totalorder %s141, %s143
      %p150 = scmp.eq.s32.totalorder %s53, 5
      %p151 = por %p149, %p150
      %p152 = scmp.ne.s32.totalorder %s143, %s144
      %p153 = scmp.eq.s32.totalorder %s53, 0
      %p154 = por %p152, %p153
      %p155 = scmp.ne.s32.totalorder %s143, %s144
      %p156 = scmp.eq.s32.totalorder %s54, 5
      %p157 = por %p155, %p156
      %p159 = scmp.ne.s32.totalorder %s144, %s158
      %p160 = scmp.eq.s32.totalorder %s54, 0
      %p161 = por %p159, %p160
      %s163 = sadd.s32 %s162, 1
      %p166 = scmp.eq.s32.totalorder %s48, 5
      %p167 = scmp.ne.s32.totalorder %s162, %s164
      %p168 = scmp.eq.s32.totalorder %s48, 0
      %p169 = por %p167, %p168
      %p170 = scmp.ne.s32.totalorder %s162, %s164
      %p171 = scmp.eq.s32.totalorder %s53, 5
      %p172 = por %p170, %p171
      %p173 = scmp.ne.s32.totalorder %s164, %s165
      %p174 = scmp.eq.s32.totalorder %s53, 0
      %p175 = por %p173, %p174
      %p176 = scmp.ne.s32.totalorder %s164, %s165
      %p177 = scmp.eq.s32.totalorder %s54, 5
      %p178 = por %p176, %p177
      %p180 = scmp.ne.s32.totalorder %s165, %s179
      %p181 = scmp.eq.s32.totalorder %s54, 0
      %p182 = por %p180, %p181
      %s184 = sadd.s32 %s183, 1
      %p187 = scmp.eq.s32.totalorder %s48, 5
      %p188 = scmp.ne.s32.totalorder %s183, %s185
      %p189 = scmp.eq.s32.totalorder %s48, 0
      %p190 = por %p188, %p189
      %p191 = scmp.ne.s32.totalorder %s183, %s185
      %p192 = scmp.eq.s32.totalorder %s53, 5
      %p193 = por %p191, %p192
      %p194 = scmp.ne.s32.totalorder %s185, %s186
      %p195 = scmp.eq.s32.totalorder %s53, 0
      %p196 = por %p194, %p195
      %p197 = scmp.ne.s32.totalorder %s185, %s186
      %p198 = scmp.eq.s32.totalorder %s54, 5
      %p199 = por %p197, %p198
      %p201 = scmp.ne.s32.totalorder %s186, %s200
      %p202 = scmp.eq.s32.totalorder %s54, 0
      %p203 = por %p201, %p202
      %s205 = sadd.s32 %s204, 1
      %p208 = scmp.eq.s32.totalorder %s48, 5
      %p209 = scmp.ne.s32.totalorder %s204, %s206
      %p210 = scmp.eq.s32.totalorder %s48, 0
      %p211 = por %p209, %p210
      %p212 = scmp.ne.s32.totalorder %s204, %s206
      %p213 = scmp.eq.s32.totalorder %s53, 5
      %p214 = por %p212, %p213
      %p215 = scmp.ne.s32.totalorder %s206, %s207
      %p216 = scmp.eq.s32.totalorder %s53, 0
      %p217 = por %p215, %p216
      %p218 = scmp.ne.s32.totalorder %s206, %s207
      %p219 = scmp.eq.s32.totalorder %s54, 5
      %p220 = por %p218, %p219
      %p222 = scmp.ne.s32.totalorder %s207, %s221
      %p223 = scmp.eq.s32.totalorder %s54, 0
      %p224 = por %p222, %p223
      %s226 = sadd.s32 %s225, 1
      %p229 = scmp.eq.s32.totalorder %s48, 5
      %p230 = scmp.ne.s32.totalorder %s225, %s227
      %p231 = scmp.eq.s32.totalorder %s48, 0
      %p232 = por %p230, %p231
      %p233 = scmp.ne.s32.totalorder %s225, %s227
      %p234 = scmp.eq.s32.totalorder %s53, 5
      %p235 = por %p233, %p234
      %p236 = scmp.ne.s32.totalorder %s227, %s228
      %p237 = scmp.eq.s32.totalorder %s53, 0
      %p238 = por %p236, %p237
      %p239 = scmp.ne.s32.totalorder %s227, %s228
      %p240 = scmp.eq.s32.totalorder %s54, 5
      %p241 = por %p239, %p240
      %p243 = scmp.ne.s32.totalorder %s228, %s242
      %p244 = scmp.eq.s32.totalorder %s54, 0
      %p245 = por %p243, %p244
      %s247 = sadd.s32 %s246, 1
      %p250 = scmp.eq.s32.totalorder %s48, 5
      %p251 = scmp.ne.s32.totalorder %s246, %s248
      %p252 = scmp.eq.s32.totalorder %s48, 0
      %p253 = por %p251, %p252
      %p254 = scmp.ne.s32.totalorder %s246, %s248
      %p255 = scmp.eq.s32.totalorder %s53, 5
      %p256 = por %p254, %p255
      %p257 = scmp.ne.s32.totalorder %s248, %s249
      %p258 = scmp.eq.s32.totalorder %s53, 0
      %p259 = por %p257, %p258
      %p260 = scmp.ne.s32.totalorder %s248, %s249
      %p261 = scmp.eq.s32.totalorder %s54, 5
      %p262 = por %p260, %p261
      %p264 = scmp.ne.s32.totalorder %s249, %s263
      %p265 = scmp.eq.s32.totalorder %s54, 0
      %p266 = por %p264, %p265
      %s268 = sadd.s32 %s267, 1
      %p271 = scmp.eq.s32.totalorder %s48, 5
      %p272 = scmp.ne.s32.totalorder %s267, %s269
      %p273 = scmp.eq.s32.totalorder %s48, 0
      %p274 = por %p272, %p273
      %p275 = scmp.ne.s32.totalorder %s267, %s269
      %p276 = scmp.eq.s32.totalorder %s53, 5
      %p277 = por %p275, %p276
      %p278 = scmp.ne.s32.totalorder %s269, %s270
      %p279 = scmp.eq.s32.totalorder %s53, 0
      %p280 = por %p278, %p279
      %p281 = scmp.ne.s32.totalorder %s269, %s270
      %p282 = scmp.eq.s32.totalorder %s54, 5
      %p283 = por %p281, %p282
      %p285 = scmp.ne.s32.totalorder %s270, %s284
      %p286 = scmp.eq.s32.totalorder %s54, 0
      %p287 = por %p285, %p286
      %s289 = sadd.s32 %s288, 1
      %p292 = scmp.eq.s32.totalorder %s48, 5
      %p293 = scmp.ne.s32.totalorder %s288, %s290
      %p294 = scmp.eq.s32.totalorder %s48, 0
      %p295 = por %p293, %p294
      %p296 = scmp.ne.s32.totalorder %s288, %s290
      %p297 = scmp.eq.s32.totalorder %s53, 5
      %p298 = por %p296, %p297
      %p299 = scmp.ne.s32.totalorder %s290, %s291
      %p300 = scmp.eq.s32.totalorder %s53, 0
      %p301 = por %p299, %p300
      %p302 = scmp.ne.s32.totalorder %s290, %s291
      %p303 = scmp.eq.s32.totalorder %s54, 5
      %p304 = por %p302, %p303
      %p306 = scmp.ne.s32.totalorder %s291, %s305
      %p307 = scmp.eq.s32.totalorder %s54, 0
      %p308 = por %p306, %p307
      %s310 = sadd.s32 %s309, 1
      %p313 = scmp.eq.s32.totalorder %s48, 5
      %p314 = scmp.ne.s32.totalorder %s309, %s311
      %p315 = scmp.eq.s32.totalorder %s48, 0
      %p316 = por %p314, %p315
      %p317 = scmp.ne.s32.totalorder %s309, %s311
      %p318 = scmp.eq.s32.totalorder %s53, 5
      %p319 = por %p317, %p318
      %p320 = scmp.ne.s32.totalorder %s311, %s312
      %p321 = scmp.eq.s32.totalorder %s53, 0
      %p322 = por %p320, %p321
      %p323 = scmp.ne.s32.totalorder %s311, %s312
      %p324 = scmp.eq.s32.totalorder %s54, 5
      %p325 = por %p323, %p324
      %p327 = scmp.ne.s32.totalorder %s312, %s326
      %p328 = scmp.eq.s32.totalorder %s54, 0
      %p329 = por %p327, %p328
      %s331 = sadd.s32 %s330, 1
      %p334 = scmp.eq.s32.totalorder %s48, 5
      %p335 = scmp.ne.s32.totalorder %s330, %s332
      %p336 = scmp.eq.s32.totalorder %s48, 0
      %p337 = por %p335, %p336
      %p338 = scmp.ne.s32.totalorder %s330, %s332
      %p339 = scmp.eq.s32.totalorder %s53, 5
      %p340 = por %p338, %p339
      %p341 = scmp.ne.s32.totalorder %s332, %s333
      %p342 = scmp.eq.s32.totalorder %s53, 0
      %p343 = por %p341, %p342
      %p344 = scmp.ne.s32.totalorder %s332, %s333
      %p345 = scmp.eq.s32.totalorder %s54, 5
      %p346 = por %p344, %p345
      %p348 = scmp.ne.s32.totalorder %s333, %s347
      %p349 = scmp.eq.s32.totalorder %s54, 0
      %p350 = por %p348, %p349
      %s352 = sadd.s32 %s351, 1
      %p355 = scmp.eq.s32.totalorder %s48, 5
      %p356 = scmp.ne.s32.totalorder %s351, %s353
      %p357 = scmp.eq.s32.totalorder %s48, 0
      %p358 = por %p356, %p357
      %p359 = scmp.ne.s32.totalorder %s351, %s353
      %p360 = scmp.eq.s32.totalorder %s53, 5
      %p361 = por %p359, %p360
      %p362 = scmp.ne.s32.totalorder %s353, %s354
      %p363 = scmp.eq.s32.totalorder %s53, 0
      %p364 = por %p362, %p363
      %p365 = scmp.ne.s32.totalorder %s353, %s354
      %p366 = scmp.eq.s32.totalorder %s54, 5
      %p367 = por %p365, %p366
      %p369 = scmp.ne.s32.totalorder %s354, %s368
      %p370 = scmp.eq.s32.totalorder %s54, 0
      %p371 = por %p369, %p370
      %s373 = sadd.s32 %s372, 1
      %p376 = scmp.eq.s32.totalorder %s48, 5
      %p377 = scmp.ne.s32.totalorder %s372, %s374
      %p378 = scmp.eq.s32.totalorder %s48, 0
      %p379 = por %p377, %p378
      %p380 = scmp.ne.s32.totalorder %s372, %s374
      %p381 = scmp.eq.s32.totalorder %s53, 5
      %p382 = por %p380, %p381
      %p383 = scmp.ne.s32.totalorder %s374, %s375
      %p384 = scmp.eq.s32.totalorder %s53, 0
      %p385 = por %p383, %p384
      %p386 = scmp.ne.s32.totalorder %s374, %s375
      %p387 = scmp.eq.s32.totalorder %s54, 5
      %p388 = por %p386, %p387
      %p390 = scmp.ne.s32.totalorder %s375, %s389
      %p391 = scmp.eq.s32.totalorder %s54, 0
      %p392 = por %p390, %p391
      %s394 = sadd.s32 %s393, 1
      %p397 = scmp.eq.s32.totalorder %s48, 5
      %p398 = scmp.ne.s32.totalorder %s393, %s395
      %p399 = scmp.eq.s32.totalorder %s48, 0
      %p400 = por %p398, %p399
      %p401 = scmp.ne.s32.totalorder %s393, %s395
      %p402 = scmp.eq.s32.totalorder %s53, 5
      %p403 = por %p401, %p402
      %p404 = scmp.ne.s32.totalorder %s395, %s396
      %p405 = scmp.eq.s32.totalorder %s53, 0
      %p406 = por %p404, %p405
      %p407 = scmp.ne.s32.totalorder %s395, %s396
      %p408 = scmp.eq.s32.totalorder %s54, 5
      %p409 = por %p407, %p408
      %p411 = scmp.ne.s32.totalorder %s396, %s410
      %p412 = scmp.eq.s32.totalorder %s54, 0
      %p413 = por %p411, %p412
      %s415 = sadd.s32 %s414, 1
      %p418 = scmp.eq.s32.totalorder %s48, 5
      %p419 = scmp.ne.s32.totalorder %s414, %s416
      %p420 = scmp.eq.s32.totalorder %s48, 0
      %p421 = por %p419, %p420
      %p422 = scmp.ne.s32.totalorder %s414, %s416
      %p423 = scmp.eq.s32.totalorder %s53, 5
      %p424 = por %p422, %p423
      %p425 = scmp.ne.s32.totalorder %s416, %s417
      %p426 = scmp.eq.s32.totalorder %s53, 0
      %p427 = por %p425, %p426
      %p428 = scmp.ne.s32.totalorder %s416, %s417
      %p429 = scmp.eq.s32.totalorder %s54, 5
      %p430 = por %p428, %p429
      %p432 = scmp.ne.s32.totalorder %s417, %s431
      %p433 = scmp.eq.s32.totalorder %s54, 0
      %p434 = por %p432, %p433
      %s436 = sadd.s32 %s435, 1
      %p439 = scmp.eq.s32.totalorder %s48, 5
      %p440 = scmp.ne.s32.totalorder %s435, %s437
      %p441 = scmp.eq.s32.totalorder %s48, 0
      %p442 = por %p440, %p441
      %p443 = scmp.ne.s32.totalorder %s435, %s437
      %p444 = scmp.eq.s32.totalorder %s53, 5
      %p445 = por %p443, %p444
      %p446 = scmp.ne.s32.totalorder %s437, %s438
      %p447 = scmp.eq.s32.totalorder %s53, 0
      %p448 = por %p446, %p447
      %p449 = scmp.ne.s32.totalorder %s437, %s438
      %p450 = scmp.eq.s32.totalorder %s54, 5
      %p451 = por %p449, %p450
      %p453 = scmp.ne.s32.totalorder %s438, %s452
      %p454 = scmp.eq.s32.totalorder %s54, 0
      %p455 = por %p453, %p454
      %s457 = sadd.s32 %s456, 1
      %p460 = scmp.eq.s32.totalorder %s48, 5
      %p461 = scmp.ne.s32.totalorder %s456, %s458
      %p462 = scmp.eq.s32.totalorder %s48, 0
      %p463 = por %p461, %p462
      %p464 = scmp.ne.s32.totalorder %s456, %s458
      %p465 = scmp.eq.s32.totalorder %s53, 5
      %p466 = por %p464, %p465
      %p467 = scmp.ne.s32.totalorder %s458, %s459
      %p468 = scmp.eq.s32.totalorder %s53, 0
      %p469 = por %p467, %p468
      %p470 = scmp.ne.s32.totalorder %s458, %s459
      %p471 = scmp.eq.s32.totalorder %s54, 5
      %p472 = por %p470, %p471
      %p474 = scmp.ne.s32.totalorder %s459, %s473
      %p475 = scmp.eq.s32.totalorder %s54, 0
      %p476 = por %p474, %p475
      %s478 = sadd.s32 %s477, 1
      %p481 = scmp.eq.s32.totalorder %s48, 5
      %p482 = scmp.ne.s32.totalorder %s477, %s479
      %p483 = scmp.eq.s32.totalorder %s48, 0
      %p484 = por %p482, %p483
      %p485 = scmp.ne.s32.totalorder %s477, %s479
      %p486 = scmp.eq.s32.totalorder %s53, 5
      %p487 = por %p485, %p486
      %p488 = scmp.ne.s32.totalorder %s479, %s480
      %p489 = scmp.eq.s32.totalorder %s53, 0
      %p490 = por %p488, %p489
      %p491 = scmp.ne.s32.totalorder %s479, %s480
      %p492 = scmp.eq.s32.totalorder %s54, 5
      %p493 = por %p491, %p492
      %p495 = scmp.ne.s32.totalorder %s480, %s494
      %p496 = scmp.eq.s32.totalorder %s54, 0
      %p497 = por %p495, %p496
      %s499 = sadd.s32 %s498, 1
      %p502 = scmp.eq.s32.totalorder %s48, 5
      %p503 = scmp.ne.s32.totalorder %s498, %s500
      %p504 = scmp.eq.s32.totalorder %s48, 0
      %p505 = por %p503, %p504
      %p506 = scmp.ne.s32.totalorder %s498, %s500
      %p507 = scmp.eq.s32.totalorder %s53, 5
      %p508 = por %p506, %p507
      %p509 = scmp.ne.s32.totalorder %s500, %s501
      %p510 = scmp.eq.s32.totalorder %s53, 0
      %p511 = por %p509, %p510
      %p512 = scmp.ne.s32.totalorder %s500, %s501
      %p513 = scmp.eq.s32.totalorder %s54, 5
      %p514 = por %p512, %p513
      %p516 = scmp.ne.s32.totalorder %s501, %s515
      %p517 = scmp.eq.s32.totalorder %s54, 0
      %p518 = por %p516, %p517
      %s520 = sadd.s32 %s519, 1
      %p523 = scmp.eq.s32.totalorder %s48, 5
      %p524 = scmp.ne.s32.totalorder %s519, %s521
      %p525 = scmp.eq.s32.totalorder %s48, 0
      %p526 = por %p524, %p525
      %p527 = scmp.ne.s32.totalorder %s519, %s521
      %p528 = scmp.eq.s32.totalorder %s53, 5
      %p529 = por %p527, %p528
      %p530 = scmp.ne.s32.totalorder %s521, %s522
      %p531 = scmp.eq.s32.totalorder %s53, 0
      %p532 = por %p530, %p531
      %p533 = scmp.ne.s32.totalorder %s521, %s522
      %p534 = scmp.eq.s32.totalorder %s54, 5
      %p535 = por %p533, %p534
      %p537 = scmp.ne.s32.totalorder %s522, %s536
      %p538 = scmp.eq.s32.totalorder %s54, 0
      %p539 = por %p537, %p538
      %s541 = sadd.s32 %s540, 1
      %p544 = scmp.eq.s32.totalorder %s48, 5
      %p545 = scmp.ne.s32.totalorder %s540, %s542
      %p546 = scmp.eq.s32.totalorder %s48, 0
      %p547 = por %p545, %p546
      %p548 = scmp.ne.s32.totalorder %s540, %s542
      %p549 = scmp.eq.s32.totalorder %s53, 5
      %p550 = por %p548, %p549
      %p551 = scmp.ne.s32.totalorder %s542, %s543
      %p552 = scmp.eq.s32.totalorder %s53, 0
      %p553 = por %p551, %p552
      %p554 = scmp.ne.s32.totalorder %s542, %s543
      %p555 = scmp.eq.s32.totalorder %s54, 5
      %p556 = por %p554, %p555
      %p558 = scmp.ne.s32.totalorder %s543, %s557
      %p559 = scmp.eq.s32.totalorder %s54, 0
      %p560 = por %p558, %p559
      %s562 = sadd.s32 %s561, 1
      %p565 = scmp.eq.s32.totalorder %s48, 5
      %p566 = scmp.ne.s32.totalorder %s561, %s563
      %p567 = scmp.eq.s32.totalorder %s48, 0
      %p568 = por %p566, %p567
      %p569 = scmp.ne.s32.totalorder %s561, %s563
      %p570 = scmp.eq.s32.totalorder %s53, 5
      %p571 = por %p569, %p570
      %p572 = scmp.ne.s32.totalorder %s563, %s564
      %p573 = scmp.eq.s32.totalorder %s53, 0
      %p574 = por %p572, %p573
      %p575 = scmp.ne.s32.totalorder %s563, %s564
      %p576 = scmp.eq.s32.totalorder %s54, 5
      %p577 = por %p575, %p576
      %p579 = scmp.ne.s32.totalorder %s564, %s578
      %p580 = scmp.eq.s32.totalorder %s54, 0
      %p581 = por %p579, %p580
      %s583 = sadd.s32 %s582, 1
      %p586 = scmp.eq.s32.totalorder %s48, 5
      %p587 = scmp.ne.s32.totalorder %s582, %s584
      %p588 = scmp.eq.s32.totalorder %s48, 0
      %p589 = por %p587, %p588
      %p590 = scmp.ne.s32.totalorder %s582, %s584
      %p591 = scmp.eq.s32.totalorder %s53, 5
      %p592 = por %p590, %p591
      %p593 = scmp.ne.s32.totalorder %s584, %s585
      %p594 = scmp.eq.s32.totalorder %s53, 0
      %p595 = por %p593, %p594
      %p596 = scmp.ne.s32.totalorder %s584, %s585
      %p597 = scmp.eq.s32.totalorder %s54, 5
      %p598 = por %p596, %p597
      %p600 = scmp.ne.s32.totalorder %s585, %s599
      %p601 = scmp.eq.s32.totalorder %s54, 0
      %p602 = por %p600, %p601
      %s603 = ssub.s32 %s56, %s63
      %s604 = ssub.s32 %s55, %s67
      %s605 = sor.u32 %s603, %s604
      %p606 = scmp.eq.s32.totalorder %s605, 0
      %s608 = sadd.s32 %s607, 1
      %s609 = scalar_select %p606, %s607, %s608
      %p612 = pneg %p606
      %p613 = scmp.eq.s32.totalorder %s48, 5
      %p614 = por %p612, %p613
      %p615 = scmp.ne.s32.totalorder %s607, %s610
      %p616 = scmp.eq.s32.totalorder %s48, 0
      %p617 = por %p615, %p616
      %p618 = scmp.ne.s32.totalorder %s607, %s610
      %p619 = scmp.eq.s32.totalorder %s53, 5
      %p620 = por %p618, %p619
      %p621 = scmp.ne.s32.totalorder %s610, %s611
      %p622 = scmp.eq.s32.totalorder %s53, 0
      %p623 = por %p621, %p622
      %p624 = scmp.ne.s32.totalorder %s610, %s611
      %p625 = scmp.eq.s32.totalorder %s54, 5
      %p626 = por %p624, %p625
      %p628 = scmp.ne.s32.totalorder %s611, %s627
      %p629 = scmp.eq.s32.totalorder %s54, 0
      %p630 = por %p628, %p629
      %p631 = scmp.le.s32.totalorder 1, %s48
      %p632 = scmp.lt.s32.totalorder %s48, 7
      %p633 = pnand %p631, %p632
      %p634 = pneg %p633
      // Predicated region
      $region9: #{tpu_custom_call.1} parent=5 // pred_check
        _
      $region10: #{tpu_custom_call.1} parent=5 // pred_check_branch
        %636 = sbr.rel (%p633) target = $region12
      $region11: #{tpu_custom_call.1} parent=5 // pred_region
        %s637 = ssub.s32 %s48, 1
        // Predicated region
        $region13: #{tpu_custom_call.1} parent=11 // pred_check
          %p638 = pneg %p133
        $region14: #{tpu_custom_call.1} parent=11 // pred_check_branch
          %640 = sbr.rel (%p638) target = $region16
        $region15: #{tpu_custom_call.1} parent=11 // pred_region
          _
        $region16: #{tpu_custom_call.1} parent=11 // pred_fallthru
          _
        // Predicated region
        $region17: #{tpu_custom_call.1} parent=11 // pred_check
          %p641 = pneg %p154
        $region18: #{tpu_custom_call.1} parent=11 // pred_check_branch
          %643 = sbr.rel (%p641) target = $region20
        $region19: #{tpu_custom_call.1} parent=11 // pred_region
          %s645 = ssub.s32 2048, 2048
          %646 = vsyncadd [#allocation8], %s645
          %s647 = sshll.u32 [#allocation9], 4
          %s648 = int_to_ptr.vmem [resolvable:$true] %s647
          %653 = dma.hbm_to_vmem [thread:$0]  %s3, 2048, %s648, [#allocation8], 128, 128, 8
        $region20: #{tpu_custom_call.1} parent=11 // pred_fallthru
          _
        // Predicated region
        $region21: #{tpu_custom_call.1} parent=11 // pred_check
          %p654 = pneg %p175
        $region22: #{tpu_custom_call.1} parent=11 // pred_check_branch
          %656 = sbr.rel (%p654) target = $region24
        $region23: #{tpu_custom_call.1} parent=11 // pred_region
          %s658 = ssub.s32 16, 16
          %659 = vsyncadd [#allocation11], %s658
          %s661 = sshll.u32 [#allocation10], 4
          %s662 = int_to_ptr.vmem [resolvable:$true] %s661
          %664 = dma.hbm_to_vmem [thread:$0]  %s4, 16, %s662, [#allocation11]
        $region24: #{tpu_custom_call.1} parent=11 // pred_fallthru
          _
        // Predicated region
        $region25: #{tpu_custom_call.1} parent=11 // pred_check
          %p665 = pneg %p196
        $region26: #{tpu_custom_call.1} parent=11 // pred_check_branch
          %667 = sbr.rel (%p665) target = $region28
        $region27: #{tpu_custom_call.1} parent=11 // pred_region
          _
        $region28: #{tpu_custom_call.1} parent=11 // pred_fallthru
          _
        // Predicated region
        $region29: #{tpu_custom_call.1} parent=11 // pred_check
          %p668 = pneg %p217
        $region30: #{tpu_custom_call.1} parent=11 // pred_check_branch
          %670 = sbr.rel (%p668) target = $region32
        $region31: #{tpu_custom_call.1} parent=11 // pred_region
          %s672 = ssub.s32 16, 16
          %673 = vsyncadd [#allocation11], %s672
          %s675 = sshll.u32 [#allocation12], 4
          %s676 = int_to_ptr.vmem [resolvable:$true] %s675
          %678 = dma.hbm_to_vmem [thread:$0]  %s6, 16, %s676, [#allocation11]
        $region32: #{tpu_custom_call.1} parent=11 // pred_fallthru
          _
        // Predicated region
        $region33: #{tpu_custom_call.1} parent=11 // pred_check
          %p679 = pneg %p238
        $region34: #{tpu_custom_call.1} parent=11 // pred_check_branch
          %681 = sbr.rel (%p679) target = $region36
        $region35: #{tpu_custom_call.1} parent=11 // pred_region
          %s683 = ssub.s32 1024, 1024
          %684 = vsyncadd [#allocation14], %s683
          %s685 = sshll.u32 [#allocation13], 4
          %s686 = int_to_ptr.vmem [resolvable:$true] %s685
          %691 = dma.hbm_to_vmem [thread:$0]  %s7, 1024, %s686, [#allocation14], 64, 64, 4
        $region36: #{tpu_custom_call.1} parent=11 // pred_fallthru
          _
        // Predicated region
        $region37: #{tpu_custom_call.1} parent=11 // pred_check
          %p692 = pneg %p259
        $region38: #{tpu_custom_call.1} parent=11 // pred_check_branch
          %694 = sbr.rel (%p692) target = $region40
        $region39: #{tpu_custom_call.1} parent=11 // pred_region
          %s696 = ssub.s32 16, 16
          %697 = vsyncadd [#allocation14], %s696
          %s699 = sshll.u32 [#allocation15], 4
          %s700 = int_to_ptr.vmem [resolvable:$true] %s699
          %702 = dma.hbm_to_vmem [thread:$0]  %s8, 16, %s700, [#allocation14]
        $region40: #{tpu_custom_call.1} parent=11 // pred_fallthru
          _
        // Predicated region
        $region41: #{tpu_custom_call.1} parent=11 // pred_check
          %p703 = pneg %p280
        $region42: #{tpu_custom_call.1} parent=11 // pred_check_branch
          %705 = sbr.rel (%p703) target = $region44
        $region43: #{tpu_custom_call.1} parent=11 // pred_region
          %s707 = ssub.s32 1024, 1024
          %708 = vsyncadd [#allocation17], %s707
          %s709 = sshll.u32 [#allocation16], 4
          %s710 = int_to_ptr.vmem [resolvable:$true] %s709
          %715 = dma.hbm_to_vmem [thread:$0]  %s9, 1024, %s710, [#allocation17], 64, 64, 4
        $region44: #{tpu_custom_call.1} parent=11 // pred_fallthru
          _
        // Predicated region
        $region45: #{tpu_custom_call.1} parent=11 // pred_check
          %p716 = pneg %p301
        $region46: #{tpu_custom_call.1} parent=11 // pred_check_branch
          %718 = sbr.rel (%p716) target = $region48
        $region47: #{tpu_custom_call.1} parent=11 // pred_region
          %s720 = ssub.s32 1024, 1024
          %721 = vsyncadd [#allocation17], %s720
          %s722 = sshll.u32 [#allocation18], 4
          %s723 = int_to_ptr.vmem [resolvable:$true] %s722
          %728 = dma.hbm_to_vmem [thread:$0]  %s10, 1024, %s723, [#allocation17], 64, 64, 4
        $region48: #{tpu_custom_call.1} parent=11 // pred_fallthru
          _
        // Predicated region
        $region49: #{tpu_custom_call.1} parent=11 // pred_check
          %p729 = pneg %p322
        $region50: #{tpu_custom_call.1} parent=11 // pred_check_branch
          %731 = sbr.rel (%p729) target = $region52
        $region51: #{tpu_custom_call.1} parent=11 // pred_region
          %s733 = ssub.s32 16, 16
          %734 = vsyncadd [#allocation20], %s733
          %s736 = sshll.u32 [#allocation19], 4
          %s737 = int_to_ptr.vmem [resolvable:$true] %s736
          %739 = dma.hbm_to_vmem [thread:$0]  %s11, 16, %s737, [#allocation20]
        $region52: #{tpu_custom_call.1} parent=11 // pred_fallthru
          _
        // Predicated region
        $region53: #{tpu_custom_call.1} parent=11 // pred_check
          %p740 = pneg %p343
        $region54: #{tpu_custom_call.1} parent=11 // pred_check_branch
          %742 = sbr.rel (%p740) target = $region56
        $region55: #{tpu_custom_call.1} parent=11 // pred_region
          %s744 = ssub.s32 1024, 1024
          %745 = vsyncadd [#allocation20], %s744
          %s746 = sshll.u32 [#allocation21], 4
          %s747 = int_to_ptr.vmem [resolvable:$true] %s746
          %752 = dma.hbm_to_vmem [thread:$0]  %s12, 1024, %s747, [#allocation20], 64, 64, 4
        $region56: #{tpu_custom_call.1} parent=11 // pred_fallthru
          _
        // Predicated region
        $region57: #{tpu_custom_call.1} parent=11 // pred_check
          %p753 = pneg %p364
        $region58: #{tpu_custom_call.1} parent=11 // pred_check_branch
          %755 = sbr.rel (%p753) target = $region60
        $region59: #{tpu_custom_call.1} parent=11 // pred_region
          %s757 = ssub.s32 16, 16
          %758 = vsyncadd [#allocation23], %s757
          %s760 = sshll.u32 [#allocation22], 4
          %s761 = int_to_ptr.vmem [resolvable:$true] %s760
          %763 = dma.hbm_to_vmem [thread:$0]  %s13, 16, %s761, [#allocation23]
        $region60: #{tpu_custom_call.1} parent=11 // pred_fallthru
          _
        // Predicated region
        $region61: #{tpu_custom_call.1} parent=11 // pred_check
          %p764 = pneg %p385
        $region62: #{tpu_custom_call.1} parent=11 // pred_check_branch
          %766 = sbr.rel (%p764) target = $region64
        $region63: #{tpu_custom_call.1} parent=11 // pred_region
          %s768 = ssub.s32 1024, 1024
          %769 = vsyncadd [#allocation23], %s768
          %s770 = sshll.u32 [#allocation24], 4
          %s771 = int_to_ptr.vmem [resolvable:$true] %s770
          %776 = dma.hbm_to_vmem [thread:$0]  %s14, 1024, %s771, [#allocation23], 64, 64, 4
        $region64: #{tpu_custom_call.1} parent=11 // pred_fallthru
          _
        // Predicated region
        $region65: #{tpu_custom_call.1} parent=11 // pred_check
          %p777 = pneg %p406
        $region66: #{tpu_custom_call.1} parent=11 // pred_check_branch
          %779 = sbr.rel (%p777) target = $region68
        $region67: #{tpu_custom_call.1} parent=11 // pred_region
          %s781 = ssub.s32 16, 16
          %782 = vsyncadd [#allocation26], %s781
          %s784 = sshll.u32 [#allocation25], 4
          %s785 = int_to_ptr.vmem [resolvable:$true] %s784
          %787 = dma.hbm_to_vmem [thread:$0]  %s15, 16, %s785, [#allocation26]
        $region68: #{tpu_custom_call.1} parent=11 // pred_fallthru
          _
        // Predicated region
        $region69: #{tpu_custom_call.1} parent=11 // pred_check
          %p788 = pneg %p427
        $region70: #{tpu_custom_call.1} parent=11 // pred_check_branch
          %790 = sbr.rel (%p788) target = $region72
        $region71: #{tpu_custom_call.1} parent=11 // pred_region
          %s792 = ssub.s32 4096, 4096
          %793 = vsyncadd [#allocation26], %s792
          %s794 = sshll.u32 [#allocation27], 4
          %s795 = int_to_ptr.vmem [resolvable:$true] %s794
          %800 = dma.hbm_to_vmem [thread:$0]  %s16, 4096, %s795, [#allocation26], 256, 256, 16
        $region72: #{tpu_custom_call.1} parent=11 // pred_fallthru
          _
        // Predicated region
        $region73: #{tpu_custom_call.1} parent=11 // pred_check
          %p801 = pneg %p448
        $region74: #{tpu_custom_call.1} parent=11 // pred_check_branch
          %803 = sbr.rel (%p801) target = $region76
        $region75: #{tpu_custom_call.1} parent=11 // pred_region
          %s805 = ssub.s32 4096, 4096
          %806 = vsyncadd [#allocation29], %s805
          %s807 = sshll.u32 [#allocation28], 4
          %s808 = int_to_ptr.vmem [resolvable:$true] %s807
          %813 = dma.hbm_to_vmem [thread:$0]  %s17, 4096, %s808, [#allocation29], 256, 256, 16
        $region76: #{tpu_custom_call.1} parent=11 // pred_fallthru
          _
        // Predicated region
        $region77: #{tpu_custom_call.1} parent=11 // pred_check
          %p814 = pneg %p469
        $region78: #{tpu_custom_call.1} parent=11 // pred_check_branch
          %816 = sbr.rel (%p814) target = $region80
        $region79: #{tpu_custom_call.1} parent=11 // pred_region
          _
        $region80: #{tpu_custom_call.1} parent=11 // pred_fallthru
          _
        // Predicated region
        $region81: #{tpu_custom_call.1} parent=11 // pred_check
          %p817 = pneg %p490
        $region82: #{tpu_custom_call.1} parent=11 // pred_check_branch
          %819 = sbr.rel (%p817) target = $region84
        $region83: #{tpu_custom_call.1} parent=11 // pred_region
          _
        $region84: #{tpu_custom_call.1} parent=11 // pred_fallthru
          _
        // Predicated region
        $region85: #{tpu_custom_call.1} parent=11 // pred_check
          %p820 = pneg %p511
        $region86: #{tpu_custom_call.1} parent=11 // pred_check_branch
          %822 = sbr.rel (%p820) target = $region88
        $region87: #{tpu_custom_call.1} parent=11 // pred_region
          _
        $region88: #{tpu_custom_call.1} parent=11 // pred_fallthru
          _
        // Predicated region
        $region89: #{tpu_custom_call.1} parent=11 // pred_check
          %p823 = pneg %p532
        $region90: #{tpu_custom_call.1} parent=11 // pred_check_branch
          %825 = sbr.rel (%p823) target = $region92
        $region91: #{tpu_custom_call.1} parent=11 // pred_region
          %s827 = ssub.s32 1024, 1024
          %828 = vsyncadd [#allocation29], %s827
          %s829 = sshll.u32 [#allocation30], 4
          %s830 = int_to_ptr.vmem [resolvable:$true] %s829
          %835 = dma.hbm_to_vmem [thread:$0]  %s21, 1024, %s830, [#allocation29], 64, 64, 4
        $region92: #{tpu_custom_call.1} parent=11 // pred_fallthru
          _
        // Predicated region
        $region93: #{tpu_custom_call.1} parent=11 // pred_check
          %p836 = pneg %p553
        $region94: #{tpu_custom_call.1} parent=11 // pred_check_branch
          %838 = sbr.rel (%p836) target = $region96
        $region95: #{tpu_custom_call.1} parent=11 // pred_region
          _
        $region96: #{tpu_custom_call.1} parent=11 // pred_fallthru
          _
        // Predicated region
        $region97: #{tpu_custom_call.1} parent=11 // pred_check
          %p839 = pneg %p574
        $region98: #{tpu_custom_call.1} parent=11 // pred_check_branch
          %841 = sbr.rel (%p839) target = $region100
        $region99: #{tpu_custom_call.1} parent=11 // pred_region
          %s843 = ssub.s32 1024, 1024
          %844 = vsyncadd [#allocation32], %s843
          %s845 = sshll.u32 [#allocation31], 4
          %s846 = int_to_ptr.vmem [resolvable:$true] %s845
          %851 = dma.hbm_to_vmem [thread:$0]  %s23, 1024, %s846, [#allocation32], 64, 64, 4
        $region100: #{tpu_custom_call.1} parent=11 // pred_fallthru
          _
        // Predicated region
        $region101: #{tpu_custom_call.1} parent=11 // pred_check
          %p852 = pneg %p595
        $region102: #{tpu_custom_call.1} parent=11 // pred_check_branch
          %854 = sbr.rel (%p852) target = $region104
        $region103: #{tpu_custom_call.1} parent=11 // pred_region
          _
        $region104: #{tpu_custom_call.1} parent=11 // pred_fallthru
          _
      $region12: #{tpu_custom_call.1} parent=5 // pred_fallthru
        _
      %p855 = scmp.lt.s32.totalorder %s48, 6
      // Predicated region
      $region105: #{tpu_custom_call.1} parent=5 // pred_check
        %p856 = pneg %p855
      $region106: #{tpu_custom_call.1} parent=5 // pred_check_branch
        %858 = sbr.rel (%p856) target = $region108
      $region107: #{tpu_custom_call.1} parent=5 // pred_region
        // Predicated region
        $region109: #{tpu_custom_call.1} parent=107 // pred_check
          %p859 = pneg %p80
        $region110: #{tpu_custom_call.1} parent=107 // pred_check_branch
          %861 = sbr.rel (%p859) target = $region112
        $region111: #{tpu_custom_call.1} parent=107 // pred_region
          %s862 = sand.u32 %s70, 1
          %s863 = scalar_lea.sflag [#allocation5], %s862
          %s864 = sand.u32 %s70, 1
          %s865 = smul.addr %s864, 16
          %s866 = scalar_lea.vmem [#allocation4], %s865
          %s867 = smul.u32 2, %s55
          %s869 = ssub.s32 256, 256
          %870 = vsyncadd %s863, %s869
          %s871 = smul.addr %s867, 128
          %s872 = scalar_lea.hbm %s0, %s871
          %s873 = sshll.u32 %s866, 4
          %s874 = int_to_ptr.vmem [resolvable:$true] %s873
          %879 = dma.hbm_to_vmem [thread:$0]  %s872, 256, %s874, %s863, 128, 128, 8
        $region112: #{tpu_custom_call.1} parent=107 // pred_fallthru
          _
        // Predicated region
        $region113: #{tpu_custom_call.1} parent=107 // pred_check
          %p880 = pneg %p106
        $region114: #{tpu_custom_call.1} parent=107 // pred_check_branch
          %882 = sbr.rel (%p880) target = $region116
        $region115: #{tpu_custom_call.1} parent=107 // pred_region
          %s883 = sand.u32 %s48, 1
          %s884 = scalar_lea.sflag [#allocation8], %s883
          %s885 = sand.u32 %s96, 1
          %s886 = smul.addr %s885, 16
          %s887 = scalar_lea.vmem [#allocation7], %s886
          %s888 = smul.u32 2, %s55
          %s890 = ssub.s32 256, 256
          %891 = vsyncadd %s884, %s890
          %s892 = smul.addr %s888, 128
          %s893 = scalar_lea.hbm %s1, %s892
          %s894 = sshll.u32 %s887, 4
          %s895 = int_to_ptr.vmem [resolvable:$true] %s894
          %900 = dma.hbm_to_vmem [thread:$0]  %s893, 256, %s895, %s884, 128, 128, 8
        $region116: #{tpu_custom_call.1} parent=107 // pred_fallthru
          _
      $region108: #{tpu_custom_call.1} parent=5 // pred_fallthru
        _
      %p901 = scmp.le.s32.totalorder 1, %s48
      %p902 = scmp.lt.s32.totalorder %s48, 7
      %p903 = pnand %p901, %p902
      %p904 = pneg %p903
      // Predicated region
      $region117: #{tpu_custom_call.1} parent=5 // pred_check
        _
      $region118: #{tpu_custom_call.1} parent=5 // pred_check_branch
        %906 = sbr.rel (%p903) target = $region120
      $region119: #{tpu_custom_call.1} parent=5 // pred_region
        %s907 = ssub.s32 %s48, 1
        %s908 = sand.u32 %s73, 1
        %s909 = scalar_lea.sflag [#allocation5], %s908
        %s910 = sand.u32 %s73, 1
        %s911 = smul.addr %s910, 16
        %s912 = scalar_lea.vmem [#allocation4], %s911
        // Predicated region
        $region121: #{tpu_custom_call.1} parent=119 // pred_check
          %p913 = pneg %p86
        $region122: #{tpu_custom_call.1} parent=119 // pred_check_branch
          %915 = sbr.rel (%p913) target = $region124
        $region123: #{tpu_custom_call.1} parent=119 // pred_region
          %916 = dma.done %s909, 256
        $region124: #{tpu_custom_call.1} parent=119 // pred_fallthru
          _
        %s917 = sand.u32 %s53, 1
        %s918 = scalar_lea.sflag [#allocation8], %s917
        %s919 = sand.u32 %s99, 1
        %s920 = smul.addr %s919, 16
        %s921 = scalar_lea.vmem [#allocation7], %s920
        // Predicated region
        $region125: #{tpu_custom_call.1} parent=119 // pred_check
          %p922 = pneg %p112
        $region126: #{tpu_custom_call.1} parent=119 // pred_check_branch
          %924 = sbr.rel (%p922) target = $region128
        $region127: #{tpu_custom_call.1} parent=119 // pred_region
          %925 = dma.done %s918, 256
        $region128: #{tpu_custom_call.1} parent=119 // pred_fallthru
          _
        // Predicated region
        $region129: #{tpu_custom_call.1} parent=119 // pred_check
          %p926 = pneg %p154
        $region130: #{tpu_custom_call.1} parent=119 // pred_check_branch
          %928 = sbr.rel (%p926) target = $region132
        $region131: #{tpu_custom_call.1} parent=119 // pred_region
          %929 = dma.done [#allocation8], 2048
        $region132: #{tpu_custom_call.1} parent=119 // pred_fallthru
          _
        // Predicated region
        $region133: #{tpu_custom_call.1} parent=119 // pred_check
          %p930 = pneg %p175
        $region134: #{tpu_custom_call.1} parent=119 // pred_check_branch
          %932 = sbr.rel (%p930) target = $region136
        $region135: #{tpu_custom_call.1} parent=119 // pred_region
          %933 = dma.done [#allocation11], 16
        $region136: #{tpu_custom_call.1} parent=119 // pred_fallthru
          _
        // Predicated region
        $region137: #{tpu_custom_call.1} parent=119 // pred_check
          %p934 = pneg %p217
        $region138: #{tpu_custom_call.1} parent=119 // pred_check_branch
          %936 = sbr.rel (%p934) target = $region140
        $region139: #{tpu_custom_call.1} parent=119 // pred_region
          %937 = dma.done [#allocation11], 16
        $region140: #{tpu_custom_call.1} parent=119 // pred_fallthru
          _
        // Predicated region
        $region141: #{tpu_custom_call.1} parent=119 // pred_check
          %p938 = pneg %p238
        $region142: #{tpu_custom_call.1} parent=119 // pred_check_branch
          %940 = sbr.rel (%p938) target = $region144
        $region143: #{tpu_custom_call.1} parent=119 // pred_region
          %941 = dma.done [#allocation14], 1024
        $region144: #{tpu_custom_call.1} parent=119 // pred_fallthru
          _
        // Predicated region
        $region145: #{tpu_custom_call.1} parent=119 // pred_check
          %p942 = pneg %p259
        $region146: #{tpu_custom_call.1} parent=119 // pred_check_branch
          %944 = sbr.rel (%p942) target = $region148
        $region147: #{tpu_custom_call.1} parent=119 // pred_region
          %945 = dma.done [#allocation14], 16
        $region148: #{tpu_custom_call.1} parent=119 // pred_fallthru
          _
        // Predicated region
        $region149: #{tpu_custom_call.1} parent=119 // pred_check
          %p946 = pneg %p280
        $region150: #{tpu_custom_call.1} parent=119 // pred_check_branch
          %948 = sbr.rel (%p946) target = $region152
        $region151: #{tpu_custom_call.1} parent=119 // pred_region
          %949 = dma.done [#allocation17], 1024
        $region152: #{tpu_custom_call.1} parent=119 // pred_fallthru
          _
        // Predicated region
        $region153: #{tpu_custom_call.1} parent=119 // pred_check
          %p950 = pneg %p301
        $region154: #{tpu_custom_call.1} parent=119 // pred_check_branch
          %952 = sbr.rel (%p950) target = $region156
        $region155: #{tpu_custom_call.1} parent=119 // pred_region
          %953 = dma.done [#allocation17], 1024
        $region156: #{tpu_custom_call.1} parent=119 // pred_fallthru
          _
        // Predicated region
        $region157: #{tpu_custom_call.1} parent=119 // pred_check
          %p954 = pneg %p322
        $region158: #{tpu_custom_call.1} parent=119 // pred_check_branch
          %956 = sbr.rel (%p954) target = $region160
        $region159: #{tpu_custom_call.1} parent=119 // pred_region
          %957 = dma.done [#allocation20], 16
        $region160: #{tpu_custom_call.1} parent=119 // pred_fallthru
          _
        // Predicated region
        $region161: #{tpu_custom_call.1} parent=119 // pred_check
          %p958 = pneg %p343
        $region162: #{tpu_custom_call.1} parent=119 // pred_check_branch
          %960 = sbr.rel (%p958) target = $region164
        $region163: #{tpu_custom_call.1} parent=119 // pred_region
          %961 = dma.done [#allocation20], 1024
        $region164: #{tpu_custom_call.1} parent=119 // pred_fallthru
          _
        // Predicated region
        $region165: #{tpu_custom_call.1} parent=119 // pred_check
          %p962 = pneg %p364
        $region166: #{tpu_custom_call.1} parent=119 // pred_check_branch
          %964 = sbr.rel (%p962) target = $region168
        $region167: #{tpu_custom_call.1} parent=119 // pred_region
          %965 = dma.done [#allocation23], 16
        $region168: #{tpu_custom_call.1} parent=119 // pred_fallthru
          _
        // Predicated region
        $region169: #{tpu_custom_call.1} parent=119 // pred_check
          %p966 = pneg %p385
        $region170: #{tpu_custom_call.1} parent=119 // pred_check_branch
          %968 = sbr.rel (%p966) target = $region172
        $region171: #{tpu_custom_call.1} parent=119 // pred_region
          %969 = dma.done [#allocation23], 1024
        $region172: #{tpu_custom_call.1} parent=119 // pred_fallthru
          _
        // Predicated region
        $region173: #{tpu_custom_call.1} parent=119 // pred_check
          %p970 = pneg %p406
        $region174: #{tpu_custom_call.1} parent=119 // pred_check_branch
          %972 = sbr.rel (%p970) target = $region176
        $region175: #{tpu_custom_call.1} parent=119 // pred_region
          %973 = dma.done [#allocation26], 16
        $region176: #{tpu_custom_call.1} parent=119 // pred_fallthru
          _
        // Predicated region
        $region177: #{tpu_custom_call.1} parent=119 // pred_check
          %p974 = pneg %p427
        $region178: #{tpu_custom_call.1} parent=119 // pred_check_branch
          %976 = sbr.rel (%p974) target = $region180
        $region179: #{tpu_custom_call.1} parent=119 // pred_region
          %977 = dma.done [#allocation26], 4096
        $region180: #{tpu_custom_call.1} parent=119 // pred_fallthru
          _
        // Predicated region
        $region181: #{tpu_custom_call.1} parent=119 // pred_check
          %p978 = pneg %p448
        $region182: #{tpu_custom_call.1} parent=119 // pred_check_branch
          %980 = sbr.rel (%p978) target = $region184
        $region183: #{tpu_custom_call.1} parent=119 // pred_region
          %981 = dma.done [#allocation29], 4096
        $region184: #{tpu_custom_call.1} parent=119 // pred_fallthru
          _
        // Predicated region
        $region185: #{tpu_custom_call.1} parent=119 // pred_check
          %p982 = pneg %p532
        $region186: #{tpu_custom_call.1} parent=119 // pred_check_branch
          %984 = sbr.rel (%p982) target = $region188
        $region187: #{tpu_custom_call.1} parent=119 // pred_region
          %985 = dma.done [#allocation29], 1024
        $region188: #{tpu_custom_call.1} parent=119 // pred_fallthru
          _
        // Predicated region
        $region189: #{tpu_custom_call.1} parent=119 // pred_check
          %p986 = pneg %p574
        $region190: #{tpu_custom_call.1} parent=119 // pred_check_branch
          %988 = sbr.rel (%p986) target = $region192
        $region191: #{tpu_custom_call.1} parent=119 // pred_region
          %989 = dma.done [#allocation32], 1024
        $region192: #{tpu_custom_call.1} parent=119 // pred_fallthru
          _
        %s990 = sand.u32 %s73, 1
        %s991 = scalar_lea.sflag [#allocation5], %s990
        %s992 = sand.u32 %s73, 1
        %s993 = smul.addr %s992, 16
        %s994 = scalar_lea.vmem [#allocation4], %s993
        %p995 = pneg %p86
        %p996 = pneg %p83
        %s997 = sand.u32 %s53, 1
        %s998 = scalar_lea.sflag [#allocation8], %s997
        %s999 = sand.u32 %s99, 1
        %s1000 = smul.addr %s999, 16
        %s1001 = scalar_lea.vmem [#allocation7], %s1000
        %p1002 = pneg %p112
        %p1003 = pneg %p109
        %p1004 = pneg %p133
        %p1005 = pneg %p130
        %p1006 = pneg %p154
        %p1007 = pneg %p151
        %p1008 = pneg %p175
        %p1009 = pneg %p172
        %p1010 = pneg %p196
        %p1011 = pneg %p193
        %p1012 = pneg %p217
        %p1013 = pneg %p214
        %p1014 = pneg %p238
        %p1015 = pneg %p235
        %p1016 = pneg %p259
        %p1017 = pneg %p256
        %p1018 = pneg %p280
        %p1019 = pneg %p277
        %p1020 = pneg %p301
        %p1021 = pneg %p298
        %p1022 = pneg %p322
        %p1023 = pneg %p319
        %p1024 = pneg %p343
        %p1025 = pneg %p340
        %p1026 = pneg %p364
        %p1027 = pneg %p361
        %p1028 = pneg %p385
        %p1029 = pneg %p382
        %p1030 = pneg %p406
        %p1031 = pneg %p403
        %p1032 = pneg %p427
        %p1033 = pneg %p424
        %p1034 = pneg %p448
        %p1035 = pneg %p445
        %p1036 = pneg %p469
        %p1037 = pneg %p466
        %p1038 = pneg %p490
        %p1039 = pneg %p487
        %p1040 = pneg %p511
        %p1041 = pneg %p508
        %p1042 = pneg %p532
        %p1043 = pneg %p529
        %p1044 = pneg %p553
        %p1045 = pneg %p550
        %p1046 = pneg %p574
        %p1047 = pneg %p571
        %p1048 = pneg %p595
        %p1049 = pneg %p592
        %p1050 = pneg %p623
        %p1051 = pneg %p620
        %s1052 = sand.u32 %s610, 1
        %s1053 = scalar_lea.sflag [#allocation6], %s1052
        %s1054 = sand.u32 %s610, 1
        %s1055 = smul.addr %s1054, 16
        %s1056 = scalar_lea.vmem [#allocation33], %s1055
        %s1057 = smul.u32 2, %s57
        %s1058 = smul.u32 2, %s57
        %s1059 = smul.u32 2, %s57
        %p1061 = scmp.eq.s32.totalorder %s58, 0
        // Predicated region
        $region193: #{tpu_custom_call.1} parent=119 // pred_check
          %p1062 = pneg %p1061
        $region194: #{tpu_custom_call.1} parent=119 // pred_check_branch
          %1064 = sbr.rel (%p1062) target = $region196
        $region195: #{tpu_custom_call.1} parent=119 // pred_region
          %v1065 = vld [vmem:[%s912] sm:$0xff]
          %v1066 = vld [vmem:[%s912 + $0x8] sm:$0xff]
          %1067 = vst [vmem:[#allocation2] sm:$0xff] %v1065
          %1068 = vst [vmem:[#allocation2 + $0x8] sm:$0xff] %v1066
          %v1069 = vld [vmem:[%s921] sm:$0xff]
          %v1070 = vld [vmem:[%s921 + $0x8] sm:$0xff]
          %1071 = vst [vmem:[#allocation3] sm:$0xff] %v1069
          %1072 = vst [vmem:[#allocation3 + $0x8] sm:$0xff] %v1070
        $region196: #{tpu_custom_call.1} parent=119 // pred_fallthru
          _
        %v1073 = vld [vmem:[%s912] sm:$0xff]
        %v1074 = vld [vmem:[%s912 + $0x8] sm:$0xff]
        %v1075 = vld [vmem:[#allocation2] sm:$0xff]
        %v1076 = vld [vmem:[#allocation2 + $0x8] sm:$0xff]
        %v1077 = vld [vmem:[#allocation3] sm:$0xff]
        %v1078 = vld [vmem:[#allocation3 + $0x8] sm:$0xff]
        %v1079 = vpack.c.bf16 %v1076, %v1075
        %v1080 = vld [vmem:[#allocation9] sm:$0xff]
        %v1081 = vld [vmem:[#allocation9 + $0x8] sm:$0xff]
        %v1082 = vld [vmem:[#allocation9 + $0x10] sm:$0xff]
        %v1083 = vld [vmem:[#allocation9 + $0x18] sm:$0xff]
        %v1084 = vld [vmem:[#allocation9 + $0x20] sm:$0xff]
        %v1085 = vld [vmem:[#allocation9 + $0x28] sm:$0xff]
        %v1086 = vld [vmem:[#allocation9 + $0x30] sm:$0xff]
        %v1087 = vld [vmem:[#allocation9 + $0x38] sm:$0xff]
        %v1088 = vld [vmem:[#allocation9 + $0x40] sm:$0xff]
        %v1089 = vld [vmem:[#allocation9 + $0x48] sm:$0xff]
        %v1090 = vld [vmem:[#allocation9 + $0x50] sm:$0xff]
        %v1091 = vld [vmem:[#allocation9 + $0x58] sm:$0xff]
        %v1092 = vld [vmem:[#allocation9 + $0x60] sm:$0xff]
        %v1093 = vld [vmem:[#allocation9 + $0x68] sm:$0xff]
        %v1094 = vld [vmem:[#allocation9 + $0x70] sm:$0xff]
        %v1095 = vld [vmem:[#allocation9 + $0x78] sm:$0xff]
        %v1112 = vunpack.c.l.b16 %v1080
        %v1113 = vunpack.c.h.b16 %v1080
        %v1114 = vunpack.c.l.b16 %v1081
        %v1115 = vunpack.c.h.b16 %v1081
        %v1116 = vunpack.c.l.b16 %v1082
        %v1117 = vunpack.c.h.b16 %v1082
        %v1118 = vunpack.c.l.b16 %v1083
        %v1119 = vunpack.c.h.b16 %v1083
        %v1120 = vunpack.c.l.b16 %v1084
        %v1121 = vunpack.c.h.b16 %v1084
        %v1122 = vunpack.c.l.b16 %v1085
        %v1123 = vunpack.c.h.b16 %v1085
        %v1124 = vunpack.c.l.b16 %v1086
        %v1125 = vunpack.c.h.b16 %v1086
        %v1126 = vunpack.c.l.b16 %v1087
        %v1127 = vunpack.c.h.b16 %v1087
        %v1128 = vunpack.c.l.b16 %v1088
        %v1129 = vunpack.c.h.b16 %v1088
        %v1130 = vunpack.c.l.b16 %v1089
        %v1131 = vunpack.c.h.b16 %v1089
        %v1132 = vunpack.c.l.b16 %v1090
        %v1133 = vunpack.c.h.b16 %v1090
        %v1134 = vunpack.c.l.b16 %v1091
        %v1135 = vunpack.c.h.b16 %v1091
        %v1136 = vunpack.c.l.b16 %v1092
        %v1137 = vunpack.c.h.b16 %v1092
        %v1138 = vunpack.c.l.b16 %v1093
        %v1139 = vunpack.c.h.b16 %v1093
        %v1140 = vunpack.c.l.b16 %v1094
        %v1141 = vunpack.c.h.b16 %v1094
        %v1142 = vunpack.c.l.b16 %v1095
        %v1143 = vunpack.c.h.b16 %v1095
        %v1144 = vpack.c.b16 %v1114, %v1112
        %v1145 = vpack.c.b16 %v1115, %v1113
        %v1146 = vpack.c.b16 %v1118, %v1116
        %v1147 = vpack.c.b16 %v1119, %v1117
        %v1148 = vpack.c.b16 %v1122, %v1120
        %v1149 = vpack.c.b16 %v1123, %v1121
        %v1150 = vpack.c.b16 %v1126, %v1124
        %v1151 = vpack.c.b16 %v1127, %v1125
        %v1152 = vpack.c.b16 %v1130, %v1128
        %v1153 = vpack.c.b16 %v1131, %v1129
        %v1154 = vpack.c.b16 %v1134, %v1132
        %v1155 = vpack.c.b16 %v1135, %v1133
        %v1156 = vpack.c.b16 %v1138, %v1136
        %v1157 = vpack.c.b16 %v1139, %v1137
        %v1158 = vpack.c.b16 %v1142, %v1140
        %v1159 = vpack.c.b16 %v1143, %v1141
        %1176 = vmatprep.subr.bf16.mxu0 %v1145
        %1177 = vmatpush1.bf16.msra.mxu0 %v1144
        %1178 = vmatprep.subr.bf16.mxu0 %v1147
        %1179 = vmatpush1.bf16.msra.mxu0 %v1146
        %1180 = vmatprep.subr.bf16.mxu0 %v1149
        %1181 = vmatpush1.bf16.msra.mxu0 %v1148
        %1182 = vmatprep.subr.bf16.mxu0 %v1151
        %1183 = vmatpush1.bf16.msra.mxu0 %v1150
        %1184 = vmatprep.subr.bf16.mxu0 %v1153
        %1185 = vmatpush1.bf16.msra.mxu0 %v1152
        %1186 = vmatprep.subr.bf16.mxu0 %v1155
        %1187 = vmatpush1.bf16.msra.mxu0 %v1154
        %1188 = vmatprep.subr.bf16.mxu0 %v1157
        %1189 = vmatpush1.bf16.msra.mxu0 %v1156
        %1190 = vmatprep.subr.bf16.mxu0 %v1159
        %1191 = vmatpush1.bf16.msra.mxu0 %v1158
        %1192 = vmatprep.subr.bf16.mxu0 0
        %1193 = vmatpush1.bf16.msra.mxu0 0
        %1194 = vmatprep.subr.bf16.mxu0 0
        %1195 = vmatpush1.bf16.msra.mxu0 0
        %1196 = vmatprep.subr.bf16.mxu0 0
        %1197 = vmatpush1.bf16.msra.mxu0 0
        %1198 = vmatprep.subr.bf16.mxu0 0
        %1199 = vmatpush1.bf16.msra.mxu0 0
        %1200 = vmatprep.subr.bf16.mxu0 0
        %1201 = vmatpush1.bf16.msra.mxu0 0
        %1202 = vmatprep.subr.bf16.mxu0 0
        %1203 = vmatpush1.bf16.msra.mxu0 0
        %1204 = vmatprep.subr.bf16.mxu0 0
        %1205 = vmatpush1.bf16.msra.mxu0 0
        %1206 = vmatprep.subr.bf16.mxu0 0
        %1207 = vmatpush1.bf16.msra.mxu0 0
        %1208 = vmatprep.mubr.bf16.mxu0 0
        %1209 = vmatmul.mubr.bf16.gmra.mrb[0].mxu0 %v1079
        %v1210 = vpop.f32.mrb[0].mxu0
        %v1211 = vadd.f32 0.0, %v1210
        %v1212 = vpop.f32.mrb[0].mxu0
        %v1213 = vadd.f32 0.0, %v1212
        %v1214 = vpop.f32.mrb[0].mxu0
        %v1215 = vadd.f32 0.0, %v1214
        %v1216 = vpop.f32.mrb[0].mxu0
        %v1217 = vadd.f32 0.0, %v1216
        %1218 = vdwg.mxu0
        %v1219 = vpack.c.bf16 %v1217, %v1213
        %v1220 = vld [vmem:[%s2] sm:$0xf]
        %v1221 = vld [vmem:[%s2 + $0x4] sm:$0xf]
        %v1222 = vld [vmem:[%s2 + $0x8] sm:$0xf]
        %v1223 = vld [vmem:[%s2 + $0xc] sm:$0xf]
        %v1224 = vld [vmem:[%s2 + $0x10] sm:$0xf]
        %v1225 = vld [vmem:[%s2 + $0x14] sm:$0xf]
        %v1226 = vld [vmem:[%s2 + $0x18] sm:$0xf]
        %v1227 = vld [vmem:[%s2 + $0x1c] sm:$0xf]
        %v1228 = vld [vmem:[%s2 + $0x20] sm:$0xf]
        %v1229 = vld [vmem:[%s2 + $0x24] sm:$0xf]
        %v1230 = vld [vmem:[%s2 + $0x28] sm:$0xf]
        %v1231 = vld [vmem:[%s2 + $0x2c] sm:$0xf]
        %v1232 = vld [vmem:[%s2 + $0x30] sm:$0xf]
        %v1233 = vld [vmem:[%s2 + $0x34] sm:$0xf]
        %v1234 = vld [vmem:[#allocation10] sm:$0x1]
        %v1249 = vunpack.c.l.b16 %v1220
        %v1250 = vunpack.c.l.b16 %v1221
        %v1251 = vunpack.c.l.b16 %v1222
        %v1252 = vunpack.c.l.b16 %v1223
        %v1253 = vunpack.c.l.b16 %v1224
        %v1254 = vunpack.c.l.b16 %v1225
        %v1255 = vunpack.c.l.b16 %v1226
        %v1256 = vunpack.c.l.b16 %v1227
        %v1257 = vunpack.c.l.b16 %v1228
        %v1258 = vunpack.c.l.b16 %v1229
        %v1259 = vunpack.c.l.b16 %v1230
        %v1260 = vunpack.c.l.b16 %v1231
        %v1261 = vunpack.c.l.b16 %v1232
        %v1262 = vunpack.c.l.b16 %v1233
        %v1263 = vpack.c.b16 %v1250, %v1249
        %v1264 = vpack.c.b16 %v1252, %v1251
        %v1265 = vpack.c.b16 %v1254, %v1253
        %v1266 = vpack.c.b16 %v1256, %v1255
        %v1267 = vpack.c.b16 %v1258, %v1257
        %v1268 = vpack.c.b16 %v1260, %v1259
        %v1269 = vpack.c.b16 %v1262, %v1261
        %vm1270 = vcmask 130048
        %v1272 = vsel %vm1270, %v1263, 0
        %v1275 = vsel %vm1270, %v1264, 0
        %v1278 = vsel %vm1270, %v1265, 0
        %v1281 = vsel %vm1270, %v1266, 0
        %v1284 = vsel %vm1270, %v1267, 0
        %v1287 = vsel %vm1270, %v1268, 0
        %v1290 = vsel %vm1270, %v1269, 0
        %1292 = vmatprep.subr.bf16.mxu0 0
        %1293 = vmatpush1.bf16.msra.mxu0 %v1219
        %1294 = vmatprep.subr.bf16.mxu0 0
        %1295 = vmatpush1.bf16.msra.mxu0 0
        %1296 = vmatprep.subr.bf16.mxu0 0
        %1297 = vmatpush1.bf16.msra.mxu0 0
        %1298 = vmatprep.subr.bf16.mxu0 0
        %1299 = vmatpush1.bf16.msra.mxu0 0
        %1300 = vmatprep.subr.bf16.mxu0 0
        %1301 = vmatpush1.bf16.msra.mxu0 0
        %1302 = vmatprep.subr.bf16.mxu0 0
        %1303 = vmatpush1.bf16.msra.mxu0 0
        %1304 = vmatprep.subr.bf16.mxu0 0
        %1305 = vmatpush1.bf16.msra.mxu0 0
        %1306 = vmatprep.subr.bf16.mxu0 0
        %1307 = vmatpush1.bf16.msra.mxu0 0
        %1308 = vmatprep.subr.bf16.mxu0 0
        %1309 = vmatpush1.bf16.msra.mxu0 0
        %1310 = vmatprep.subr.bf16.mxu0 0
        %1311 = vmatpush1.bf16.msra.mxu0 0
        %1312 = vmatprep.subr.bf16.mxu0 0
        %1313 = vmatpush1.bf16.msra.mxu0 0
        %1314 = vmatprep.subr.bf16.mxu0 0
        %1315 = vmatpush1.bf16.msra.mxu0 0
        %1316 = vmatprep.subr.bf16.mxu0 0
        %1317 = vmatpush1.bf16.msra.mxu0 0
        %1318 = vmatprep.subr.bf16.mxu0 0
        %1319 = vmatpush1.bf16.msra.mxu0 0
        %1320 = vmatprep.subr.bf16.mxu0 0
        %1321 = vmatpush1.bf16.msra.mxu0 0
        %1322 = vmatprep.subr.bf16.mxu0 0
        %1323 = vmatpush1.bf16.msra.mxu0 0
        %1324 = vmatprep.mubr.bf16.mxu0 0
        %1325 = vmatmul.mubr.bf16.gmra.mrb[0].mxu0 %v1272
        %v1326 = vpop.f32.mrb[0].mxu0
        %v1327 = vadd.f32 %v1211, %v1326
        %v1328 = vpop.f32.mrb[0].mxu0
        %v1329 = vpop.f32.mrb[0].mxu0
        %v1330 = vadd.f32 %v1215, %v1329
        %v1331 = vpop.f32.mrb[0].mxu0
        %1332 = vmatprep.mubr.bf16.mxu0 0
        %1333 = vmatmul.mubr.bf16.gmra.mrb[0].mxu0 %v1275
        %v1334 = vpop.f32.mrb[0].mxu0
        %v1335 = vadd.f32 %v1211, %v1334
        %v1336 = vpop.f32.mrb[0].mxu0
        %v1337 = vpop.f32.mrb[0].mxu0
        %v1338 = vadd.f32 %v1215, %v1337
        %v1339 = vpop.f32.mrb[0].mxu0
        %1340 = vmatprep.mubr.bf16.mxu0 0
        %1341 = vmatmul.mubr.bf16.gmra.mrb[0].mxu0 %v1278
        %v1342 = vpop.f32.mrb[0].mxu0
        %v1343 = vadd.f32 %v1211, %v1342
        %v1344 = vpop.f32.mrb[0].mxu0
        %v1345 = vpop.f32.mrb[0].mxu0
        %v1346 = vadd.f32 %v1215, %v1345
        %v1347 = vpop.f32.mrb[0].mxu0
        %1348 = vmatprep.mubr.bf16.mxu0 0
        %1349 = vmatmul.mubr.bf16.gmra.mrb[0].mxu0 %v1281
        %v1350 = vpop.f32.mrb[0].mxu0
        %v1351 = vadd.f32 %v1211, %v1350
        %v1352 = vpop.f32.mrb[0].mxu0
        %v1353 = vpop.f32.mrb[0].mxu0
        %v1354 = vadd.f32 %v1215, %v1353
        %v1355 = vpop.f32.mrb[0].mxu0
        %1356 = vmatprep.mubr.bf16.mxu0 0
        %1357 = vmatmul.mubr.bf16.gmra.mrb[0].mxu0 %v1284
        %v1358 = vpop.f32.mrb[0].mxu0
        %v1359 = vadd.f32 %v1211, %v1358
        %v1360 = vpop.f32.mrb[0].mxu0
        %v1361 = vpop.f32.mrb[0].mxu0
        %v1362 = vadd.f32 %v1215, %v1361
        %v1363 = vpop.f32.mrb[0].mxu0
        %1364 = vmatprep.mubr.bf16.mxu0 0
        %1365 = vmatmul.mubr.bf16.gmra.mrb[0].mxu0 %v1287
        %v1366 = vpop.f32.mrb[0].mxu0
        %v1367 = vadd.f32 %v1211, %v1366
        %v1368 = vpop.f32.mrb[0].mxu0
        %v1369 = vpop.f32.mrb[0].mxu0
        %v1370 = vadd.f32 %v1215, %v1369
        %v1371 = vpop.f32.mrb[0].mxu0
        %1372 = vmatprep.mubr.bf16.mxu0 0
        %1373 = vmatmul.mubr.bf16.gmra.mrb[0].mxu0 %v1290
        %v1374 = vpop.f32.mrb[0].mxu0
        %v1375 = vadd.f32 %v1211, %v1374
        %v1376 = vpop.f32.mrb[0].mxu0
        %v1377 = vpop.f32.mrb[0].mxu0
        %v1378 = vadd.f32 %v1215, %v1377
        %v1379 = vpop.f32.mrb[0].mxu0
        %1380 = vdwg.mxu0
        %v1382 = vlaneseq
        %v1383 = vshrl.u32 %v1382, 7
        %v1384 = vsub.s32 0, %v1383
        %v1385 = vrot.slane %v1234, %v1384
        %v1387 = vadd.f32 %v1327, %v1385
        %v1388 = vadd.f32 %v1330, %v1385
        %v1389 = vadd.f32 %v1335, %v1385
        %v1390 = vadd.f32 %v1338, %v1385
        %v1391 = vadd.f32 %v1343, %v1385
        %v1392 = vadd.f32 %v1346, %v1385
        %v1393 = vadd.f32 %v1351, %v1385
        %v1394 = vadd.f32 %v1354, %v1385
        %v1395 = vadd.f32 %v1359, %v1385
        %v1396 = vadd.f32 %v1362, %v1385
        %v1397 = vadd.f32 %v1367, %v1385
        %v1398 = vadd.f32 %v1370, %v1385
        %v1399 = vadd.f32 %v1375, %v1385
        %v1400 = vadd.f32 %v1378, %v1385
        %v1401 = vmax.f32 %v1387, 0.0
        %v1402 = vmax.f32 %v1388, 0.0
        %v1403 = vmax.f32 %v1389, 0.0
        %v1404 = vmax.f32 %v1390, 0.0
        %v1405 = vmax.f32 %v1391, 0.0
        %v1406 = vmax.f32 %v1392, 0.0
        %v1407 = vmax.f32 %v1393, 0.0
        %v1408 = vmax.f32 %v1394, 0.0
        %v1409 = vmax.f32 %v1395, 0.0
        %v1410 = vmax.f32 %v1396, 0.0
        %v1411 = vmax.f32 %v1397, 0.0
        %v1412 = vmax.f32 %v1398, 0.0
        %v1413 = vmax.f32 %v1399, 0.0
        %v1414 = vmax.f32 %v1400, 0.0
        %v1415 = vpack.c.bf16 %v1402, %v1401
        %v1416 = vpack.c.bf16 %v1404, %v1403
        %v1417 = vpack.c.bf16 %v1406, %v1405
        %v1418 = vpack.c.bf16 %v1408, %v1407
        %v1419 = vpack.c.bf16 %v1410, %v1409
        %v1420 = vpack.c.bf16 %v1412, %v1411
        %v1421 = vpack.c.bf16 %v1414, %v1413
        %v1422 = vld [vmem:[%s5] sm:$0xf]
        %v1423 = vld [vmem:[%s5 + $0x4] sm:$0xf]
        %v1424 = vld [vmem:[%s5 + $0x8] sm:$0xf]
        %v1425 = vld [vmem:[%s5 + $0xc] sm:$0xf]
        %v1426 = vld [vmem:[%s5 + $0x10] sm:$0xf]
        %v1427 = vld [vmem:[%s5 + $0x14] sm:$0xf]
        %v1428 = vld [vmem:[%s5 + $0x18] sm:$0xf]
        %v1429 = vld [vmem:[%s5 + $0x1c] sm:$0xf]
        %v1430 = vld [vmem:[%s5 + $0x20] sm:$0xf]
        %v1431 = vld [vmem:[%s5 + $0x24] sm:$0xf]
        %v1432 = vld [vmem:[%s5 + $0x28] sm:$0xf]
        %v1433 = vld [vmem:[%s5 + $0x2c] sm:$0xf]
        %v1434 = vld [vmem:[%s5 + $0x30] sm:$0xf]
        %v1435 = vld [vmem:[%s5 + $0x34] sm:$0xf]
        %v1436 = vld [vmem:[%s5 + $0x38] sm:$0xf]
        %v1437 = vld [vmem:[%s5 + $0x3c] sm:$0xf]
        %v1438 = vld [vmem:[#allocation12] sm:$0x1]
        %v1440 = vlaneseq
        %v1441 = vshrl.u32 %v1440, 7
        %v1442 = vsub.s32 0, %v1441
        %v1443 = vrot.slane %v1438, %v1442
        %v1461 = vunpack.c.l.b16 %v1422
        %v1462 = vunpack.c.l.b16 %v1423
        %v1463 = vunpack.c.l.b16 %v1424
        %v1464 = vunpack.c.l.b16 %v1425
        %v1465 = vunpack.c.l.b16 %v1426
        %v1466 = vunpack.c.l.b16 %v1427
        %v1467 = vunpack.c.l.b16 %v1428
        %v1468 = vunpack.c.l.b16 %v1429
        %v1469 = vunpack.c.l.b16 %v1430
        %v1470 = vunpack.c.l.b16 %v1431
        %v1471 = vunpack.c.l.b16 %v1432
        %v1472 = vunpack.c.l.b16 %v1433
        %v1473 = vunpack.c.l.b16 %v1434
        %v1474 = vunpack.c.l.b16 %v1435
        %v1475 = vunpack.c.l.b16 %v1436
        %v1476 = vunpack.c.l.b16 %v1437
        %v1477 = vpack.c.b16 %v1462, %v1461
        %v1478 = vpack.c.b16 %v1464, %v1463
        %v1479 = vpack.c.b16 %v1466, %v1465
        %v1480 = vpack.c.b16 %v1468, %v1467
        %v1481 = vpack.c.b16 %v1470, %v1469
        %v1482 = vpack.c.b16 %v1472, %v1471
        %v1483 = vpack.c.b16 %v1474, %v1473
        %v1484 = vpack.c.b16 %v1476, %v1475
        %1493 = vmatprep.subr.bf16.mxu0 0
        %1494 = vmatpush1.bf16.msra.mxu0 %v1477
        %1495 = vmatprep.subr.bf16.mxu0 0
        %1496 = vmatpush1.bf16.msra.mxu0 %v1478
        %1497 = vmatprep.subr.bf16.mxu0 0
        %1498 = vmatpush1.bf16.msra.mxu0 %v1479
        %1499 = vmatprep.subr.bf16.mxu0 0
        %1500 = vmatpush1.bf16.msra.mxu0 %v1480
        %1501 = vmatprep.subr.bf16.mxu0 0
        %1502 = vmatpush1.bf16.msra.mxu0 %v1481
        %1503 = vmatprep.subr.bf16.mxu0 0
        %1504 = vmatpush1.bf16.msra.mxu0 %v1482
        %1505 = vmatprep.subr.bf16.mxu0 0
        %1506 = vmatpush1.bf16.msra.mxu0 %v1483
        %1507 = vmatprep.subr.bf16.mxu0 0
        %1508 = vmatpush1.bf16.msra.mxu0 %v1484
        %1509 = vmatprep.subr.bf16.mxu0 0
        %1510 = vmatpush1.bf16.msra.mxu0 0
        %1511 = vmatprep.subr.bf16.mxu0 0
        %1512 = vmatpush1.bf16.msra.mxu0 0
        %1513 = vmatprep.subr.bf16.mxu0 0
        %1514 = vmatpush1.bf16.msra.mxu0 0
        %1515 = vmatprep.subr.bf16.mxu0 0
        %1516 = vmatpush1.bf16.msra.mxu0 0
        %1517 = vmatprep.subr.bf16.mxu0 0
        %1518 = vmatpush1.bf16.msra.mxu0 0
        %1519 = vmatprep.subr.bf16.mxu0 0
        %1520 = vmatpush1.bf16.msra.mxu0 0
        %1521 = vmatprep.subr.bf16.mxu0 0
        %1522 = vmatpush1.bf16.msra.mxu0 0
        %1523 = vmatprep.subr.bf16.mxu0 0
        %1524 = vmatpush1.bf16.msra.mxu0 0
        %1525 = vmatprep.mubr.bf16.mxu0 0
        %1526 = vmatmul.mubr.bf16.gmra.mrb[0].mxu0 %v1415
        %v1527 = vpop.f32.mrb[0].mxu0
        %v1528 = vadd.f32 %v1443, %v1527
        %v1529 = vpop.f32.mrb[0].mxu0
        %v1530 = vpop.f32.mrb[0].mxu0
        %v1531 = vadd.f32 %v1443, %v1530
        %v1532 = vpop.f32.mrb[0].mxu0
        %1533 = vmatprep.mubr.bf16.mxu0 0
        %1534 = vmatmul.mubr.bf16.gmra.mrb[0].mxu0 %v1416
        %v1535 = vpop.f32.mrb[0].mxu0
        %v1536 = vadd.f32 %v1443, %v1535
        %v1537 = vpop.f32.mrb[0].mxu0
        %v1538 = vpop.f32.mrb[0].mxu0
        %v1539 = vadd.f32 %v1443, %v1538
        %v1540 = vpop.f32.mrb[0].mxu0
        %1541 = vmatprep.mubr.bf16.mxu0 0
        %1542 = vmatmul.mubr.bf16.gmra.mrb[0].mxu0 %v1417
        %v1543 = vpop.f32.mrb[0].mxu0
        %v1544 = vadd.f32 %v1443, %v1543
        %v1545 = vpop.f32.mrb[0].mxu0
        %v1546 = vpop.f32.mrb[0].mxu0
        %v1547 = vadd.f32 %v1443, %v1546
        %v1548 = vpop.f32.mrb[0].mxu0
        %1549 = vmatprep.mubr.bf16.mxu0 0
        %1550 = vmatmul.mubr.bf16.gmra.mrb[0].mxu0 %v1418
        %v1551 = vpop.f32.mrb[0].mxu0
        %v1552 = vadd.f32 %v1443, %v1551
        %v1553 = vpop.f32.mrb[0].mxu0
        %v1554 = vpop.f32.mrb[0].mxu0
        %v1555 = vadd.f32 %v1443, %v1554
        %v1556 = vpop.f32.mrb[0].mxu0
        %1557 = vmatprep.mubr.bf16.mxu0 0
        %1558 = vmatmul.mubr.bf16.gmra.mrb[0].mxu0 %v1419
        %v1559 = vpop.f32.mrb[0].mxu0
        %v1560 = vadd.f32 %v1443, %v1559
        %v1561 = vpop.f32.mrb[0].mxu0
        %v1562 = vpop.f32.mrb[0].mxu0
        %v1563 = vadd.f32 %v1443, %v1562
        %v1564 = vpop.f32.mrb[0].mxu0
        %1565 = vmatprep.mubr.bf16.mxu0 0
        %1566 = vmatmul.mubr.bf16.gmra.mrb[0].mxu0 %v1420
        %v1567 = vpop.f32.mrb[0].mxu0
        %v1568 = vadd.f32 %v1443, %v1567
        %v1569 = vpop.f32.mrb[0].mxu0
        %v1570 = vpop.f32.mrb[0].mxu0
        %v1571 = vadd.f32 %v1443, %v1570
        %v1572 = vpop.f32.mrb[0].mxu0
        %1573 = vmatprep.mubr.bf16.mxu0 0
        %1574 = vmatmul.mubr.bf16.gmra.mrb[0].mxu0 %v1421
        %v1575 = vpop.f32.mrb[0].mxu0
        %v1576 = vadd.f32 %v1443, %v1575
        %v1577 = vpop.f32.mrb[0].mxu0
        %v1578 = vpop.f32.mrb[0].mxu0
        %v1579 = vadd.f32 %v1443, %v1578
        %v1580 = vpop.f32.mrb[0].mxu0
        %1581 = vdwg.mxu0
        %v1582 = vmax.f32 %v1528, 0.0
        %v1583 = vmax.f32 %v1531, 0.0
        %v1584 = vmax.f32 %v1536, 0.0
        %v1585 = vmax.f32 %v1539, 0.0
        %v1586 = vmax.f32 %v1544, 0.0
        %v1587 = vmax.f32 %v1547, 0.0
        %v1588 = vmax.f32 %v1552, 0.0
        %v1589 = vmax.f32 %v1555, 0.0
        %v1590 = vmax.f32 %v1560, 0.0
        %v1591 = vmax.f32 %v1563, 0.0
        %v1592 = vmax.f32 %v1568, 0.0
        %v1593 = vmax.f32 %v1571, 0.0
        %v1594 = vmax.f32 %v1576, 0.0
        %v1595 = vmax.f32 %v1579, 0.0
        %v1596 = vpack.c.bf16 %v1583, %v1582
        %v1597 = vpack.c.bf16 %v1585, %v1584
        %v1598 = vpack.c.bf16 %v1587, %v1586
        %v1599 = vpack.c.bf16 %v1589, %v1588
        %v1600 = vpack.c.bf16 %v1591, %v1590
        %v1601 = vpack.c.bf16 %v1593, %v1592
        %v1602 = vpack.c.bf16 %v1595, %v1594
        %v1603 = vld [vmem:[#allocation13] sm:$0xf]
        %v1604 = vld [vmem:[#allocation13 + $0x4] sm:$0xf]
        %v1605 = vld [vmem:[#allocation13 + $0x8] sm:$0xf]
        %v1606 = vld [vmem:[#allocation13 + $0xc] sm:$0xf]
        %v1607 = vld [vmem:[#allocation13 + $0x10] sm:$0xf]
        %v1608 = vld [vmem:[#allocation13 + $0x14] sm:$0xf]
        %v1609 = vld [vmem:[#allocation13 + $0x18] sm:$0xf]
        %v1610 = vld [vmem:[#allocation13 + $0x1c] sm:$0xf]
        %v1611 = vld [vmem:[#allocation13 + $0x20] sm:$0xf]
        %v1612 = vld [vmem:[#allocation13 + $0x24] sm:$0xf]
        %v1613 = vld [vmem:[#allocation13 + $0x28] sm:$0xf]
        %v1614 = vld [vmem:[#allocation13 + $0x2c] sm:$0xf]
        %v1615 = vld [vmem:[#allocation13 + $0x30] sm:$0xf]
        %v1616 = vld [vmem:[#allocation13 + $0x34] sm:$0xf]
        %v1617 = vld [vmem:[#allocation13 + $0x38] sm:$0xf]
        %v1618 = vld [vmem:[#allocation13 + $0x3c] sm:$0xf]
        %v1619 = vld [vmem:[#allocation15] sm:$0x1]
        %v1621 = vlaneseq
        %v1622 = vshrl.u32 %v1621, 7
        %v1623 = vsub.s32 0, %v1622
        %v1624 = vrot.slane %v1619, %v1623
        %v1642 = vunpack.c.l.b16 %v1603
        %v1643 = vunpack.c.l.b16 %v1604
        %v1644 = vunpack.c.l.b16 %v1605
        %v1645 = vunpack.c.l.b16 %v1606
        %v1646 = vunpack.c.l.b16 %v1607
        %v1647 = vunpack.c.l.b16 %v1608
        %v1648 = vunpack.c.l.b16 %v1609
        %v1649 = vunpack.c.l.b16 %v1610
        %v1650 = vunpack.c.l.b16 %v1611
        %v1651 = vunpack.c.l.b16 %v1612
        %v1652 = vunpack.c.l.b16 %v1613
        %v1653 = vunpack.c.l.b16 %v1614
        %v1654 = vunpack.c.l.b16 %v1615
        %v1655 = vunpack.c.l.b16 %v1616
        %v1656 = vunpack.c.l.b16 %v1617
        %v1657 = vunpack.c.l.b16 %v1618
        %v1658 = vpack.c.b16 %v1643, %v1642
        %v1659 = vpack.c.b16 %v1645, %v1644
        %v1660 = vpack.c.b16 %v1647, %v1646
        %v1661 = vpack.c.b16 %v1649, %v1648
        %v1662 = vpack.c.b16 %v1651, %v1650
        %v1663 = vpack.c.b16 %v1653, %v1652
        %v1664 = vpack.c.b16 %v1655, %v1654
        %v1665 = vpack.c.b16 %v1657, %v1656
        %1674 = vmatprep.subr.bf16.mxu0 0
        %1675 = vmatpush1.bf16.msra.mxu0 %v1658
        %1676 = vmatprep.subr.bf16.mxu0 0
        %1677 = vmatpush1.bf16.msra.mxu0 %v1659
        %1678 = vmatprep.subr.bf16.mxu0 0
        %1679 = vmatpush1.bf16.msra.mxu0 %v1660
        %1680 = vmatprep.subr.bf16.mxu0 0
        %1681 = vmatpush1.bf16.msra.mxu0 %v1661
        %1682 = vmatprep.subr.bf16.mxu0 0
        %1683 = vmatpush1.bf16.msra.mxu0 %v1662
        %1684 = vmatprep.subr.bf16.mxu0 0
        %1685 = vmatpush1.bf16.msra.mxu0 %v1663
        %1686 = vmatprep.subr.bf16.mxu0 0
        %1687 = vmatpush1.bf16.msra.mxu0 %v1664
        %1688 = vmatprep.subr.bf16.mxu0 0
        %1689 = vmatpush1.bf16.msra.mxu0 %v1665
        %1690 = vmatprep.subr.bf16.mxu0 0
        %1691 = vmatpush1.bf16.msra.mxu0 0
        %1692 = vmatprep.subr.bf16.mxu0 0
        %1693 = vmatpush1.bf16.msra.mxu0 0
        %1694 = vmatprep.subr.bf16.mxu0 0
        %1695 = vmatpush1.bf16.msra.mxu0 0
        %1696 = vmatprep.subr.bf16.mxu0 0
        %1697 = vmatpush1.bf16.msra.mxu0 0
        %1698 = vmatprep.subr.bf16.mxu0 0
        %1699 = vmatpush1.bf16.msra.mxu0 0
        %1700 = vmatprep.subr.bf16.mxu0 0
        %1701 = vmatpush1.bf16.msra.mxu0 0
        %1702 = vmatprep.subr.bf16.mxu0 0
        %1703 = vmatpush1.bf16.msra.mxu0 0
        %1704 = vmatprep.subr.bf16.mxu0 0
        %1705 = vmatpush1.bf16.msra.mxu0 0
        %1706 = vmatprep.mubr.bf16.mxu0 0
        %1707 = vmatmul.mubr.bf16.gmra.mrb[0].mxu0 %v1596
        %v1708 = vpop.f32.mrb[0].mxu0
        %v1709 = vadd.f32 %v1624, %v1708
        %v1710 = vpop.f32.mrb[0].mxu0
        %v1711 = vpop.f32.mrb[0].mxu0
        %v1712 = vadd.f32 %v1624, %v1711
        %v1713 = vpop.f32.mrb[0].mxu0
        %1714 = vmatprep.mubr.bf16.mxu0 0
        %1715 = vmatmul.mubr.bf16.gmra.mrb[0].mxu0 %v1597
        %v1716 = vpop.f32.mrb[0].mxu0
        %v1717 = vadd.f32 %v1624, %v1716
        %v1718 = vpop.f32.mrb[0].mxu0
        %v1719 = vpop.f32.mrb[0].mxu0
        %v1720 = vadd.f32 %v1624, %v1719
        %v1721 = vpop.f32.mrb[0].mxu0
        %1722 = vmatprep.mubr.bf16.mxu0 0
        %1723 = vmatmul.mubr.bf16.gmra.mrb[0].mxu0 %v1598
        %v1724 = vpop.f32.mrb[0].mxu0
        %v1725 = vadd.f32 %v1624, %v1724
        %v1726 = vpop.f32.mrb[0].mxu0
        %v1727 = vpop.f32.mrb[0].mxu0
        %v1728 = vadd.f32 %v1624, %v1727
        %v1729 = vpop.f32.mrb[0].mxu0
        %1730 = vmatprep.mubr.bf16.mxu0 0
        %1731 = vmatmul.mubr.bf16.gmra.mrb[0].mxu0 %v1599
        %v1732 = vpop.f32.mrb[0].mxu0
        %v1733 = vadd.f32 %v1624, %v1732
        %v1734 = vpop.f32.mrb[0].mxu0
        %v1735 = vpop.f32.mrb[0].mxu0
        %v1736 = vadd.f32 %v1624, %v1735
        %v1737 = vpop.f32.mrb[0].mxu0
        %1738 = vmatprep.mubr.bf16.mxu0 0
        %1739 = vmatmul.mubr.bf16.gmra.mrb[0].mxu0 %v1600
        %v1740 = vpop.f32.mrb[0].mxu0
        %v1741 = vadd.f32 %v1624, %v1740
        %v1742 = vpop.f32.mrb[0].mxu0
        %v1743 = vpop.f32.mrb[0].mxu0
        %v1744 = vadd.f32 %v1624, %v1743
        %v1745 = vpop.f32.mrb[0].mxu0
        %1746 = vmatprep.mubr.bf16.mxu0 0
        %1747 = vmatmul.mubr.bf16.gmra.mrb[0].mxu0 %v1601
        %v1748 = vpop.f32.mrb[0].mxu0
        %v1749 = vadd.f32 %v1624, %v1748
        %v1750 = vpop.f32.mrb[0].mxu0
        %v1751 = vpop.f32.mrb[0].mxu0
        %v1752 = vadd.f32 %v1624, %v1751
        %v1753 = vpop.f32.mrb[0].mxu0
        %1754 = vmatprep.mubr.bf16.mxu0 0
        %1755 = vmatmul.mubr.bf16.gmra.mrb[0].mxu0 %v1602
        %v1756 = vpop.f32.mrb[0].mxu0
        %v1757 = vadd.f32 %v1624, %v1756
        %v1758 = vpop.f32.mrb[0].mxu0
        %v1759 = vpop.f32.mrb[0].mxu0
        %v1760 = vadd.f32 %v1624, %v1759
        %v1761 = vpop.f32.mrb[0].mxu0
        %1762 = vdwg.mxu0
        %v1763 = vadd.f32 %v1709, %v1717
        %v1764 = vadd.f32 %v1712, %v1720
        %v1765 = vadd.f32 %v1763, %v1725
        %v1766 = vadd.f32 %v1764, %v1728
        %v1767 = vadd.f32 %v1765, %v1733
        %v1768 = vadd.f32 %v1766, %v1736
        %v1769 = vadd.f32 %v1767, %v1741
        %v1770 = vadd.f32 %v1768, %v1744
        %v1771 = vadd.f32 %v1769, %v1749
        %v1772 = vadd.f32 %v1770, %v1752
        %v1773 = vadd.f32 %v1771, %v1757
        %v1774 = vadd.f32 %v1772, %v1760
        %v1775 = vpack.c.bf16 %v1074, %v1073
        %v1776 = vld [vmem:[#allocation16] sm:$0xf]
        %v1777 = vld [vmem:[#allocation16 + $0x4] sm:$0xf]
        %v1778 = vld [vmem:[#allocation16 + $0x8] sm:$0xf]
        %v1779 = vld [vmem:[#allocation16 + $0xc] sm:$0xf]
        %v1780 = vld [vmem:[#allocation16 + $0x10] sm:$0xf]
        %v1781 = vld [vmem:[#allocation16 + $0x14] sm:$0xf]
        %v1782 = vld [vmem:[#allocation16 + $0x18] sm:$0xf]
        %v1783 = vld [vmem:[#allocation16 + $0x1c] sm:$0xf]
        %v1784 = vld [vmem:[#allocation16 + $0x20] sm:$0xf]
        %v1785 = vld [vmem:[#allocation16 + $0x24] sm:$0xf]
        %v1786 = vld [vmem:[#allocation16 + $0x28] sm:$0xf]
        %v1787 = vld [vmem:[#allocation16 + $0x2c] sm:$0xf]
        %v1788 = vld [vmem:[#allocation16 + $0x30] sm:$0xf]
        %v1789 = vld [vmem:[#allocation16 + $0x34] sm:$0xf]
        %v1790 = vld [vmem:[#allocation16 + $0x38] sm:$0xf]
        %v1791 = vld [vmem:[#allocation16 + $0x3c] sm:$0xf]
        %v1792 = vpack.c.bf16 %v1774, %v1773
        %v1793 = vld [vmem:[#allocation18] sm:$0xf]
        %v1794 = vld [vmem:[#allocation18 + $0x4] sm:$0xf]
        %v1795 = vld [vmem:[#allocation18 + $0x8] sm:$0xf]
        %v1796 = vld [vmem:[#allocation18 + $0xc] sm:$0xf]
        %v1797 = vld [vmem:[#allocation18 + $0x10] sm:$0xf]
        %v1798 = vld [vmem:[#allocation18 + $0x14] sm:$0xf]
        %v1799 = vld [vmem:[#allocation18 + $0x18] sm:$0xf]
        %v1800 = vld [vmem:[#allocation18 + $0x1c] sm:$0xf]
        %v1801 = vld [vmem:[#allocation18 + $0x20] sm:$0xf]
        %v1802 = vld [vmem:[#allocation18 + $0x24] sm:$0xf]
        %v1803 = vld [vmem:[#allocation18 + $0x28] sm:$0xf]
        %v1804 = vld [vmem:[#allocation18 + $0x2c] sm:$0xf]
        %v1805 = vld [vmem:[#allocation18 + $0x30] sm:$0xf]
        %v1806 = vld [vmem:[#allocation18 + $0x34] sm:$0xf]
        %v1807 = vld [vmem:[#allocation18 + $0x38] sm:$0xf]
        %v1808 = vld [vmem:[#allocation18 + $0x3c] sm:$0xf]
        %v1825 = vunpack.c.l.b16 %v1793
        %v1826 = vunpack.c.l.b16 %v1794
        %v1827 = vunpack.c.l.b16 %v1795
        %v1828 = vunpack.c.l.b16 %v1796
        %v1829 = vunpack.c.l.b16 %v1797
        %v1830 = vunpack.c.l.b16 %v1798
        %v1831 = vunpack.c.l.b16 %v1799
        %v1832 = vunpack.c.l.b16 %v1800
        %v1833 = vunpack.c.l.b16 %v1801
        %v1834 = vunpack.c.l.b16 %v1802
        %v1835 = vunpack.c.l.b16 %v1803
        %v1836 = vunpack.c.l.b16 %v1804
        %v1837 = vunpack.c.l.b16 %v1805
        %v1838 = vunpack.c.l.b16 %v1806
        %v1839 = vunpack.c.l.b16 %v1807
        %v1840 = vunpack.c.l.b16 %v1808
        %v1841 = vpack.c.b16 %v1826, %v1825
        %v1842 = vpack.c.b16 %v1828, %v1827
        %v1843 = vpack.c.b16 %v1830, %v1829
        %v1844 = vpack.c.b16 %v1832, %v1831
        %v1845 = vpack.c.b16 %v1834, %v1833
        %v1846 = vpack.c.b16 %v1836, %v1835
        %v1847 = vpack.c.b16 %v1838, %v1837
        %v1848 = vpack.c.b16 %v1840, %v1839
        %1857 = vmatprep.subr.bf16.mxu0 0
        %1858 = vmatpush1.bf16.msra.mxu0 %v1841
        %1859 = vmatprep.subr.bf16.mxu0 0
        %1860 = vmatpush1.bf16.msra.mxu0 %v1842
        %1861 = vmatprep.subr.bf16.mxu0 0
        %1862 = vmatpush1.bf16.msra.mxu0 %v1843
        %1863 = vmatprep.subr.bf16.mxu0 0
        %1864 = vmatpush1.bf16.msra.mxu0 %v1844
        %1865 = vmatprep.subr.bf16.mxu0 0
        %1866 = vmatpush1.bf16.msra.mxu0 %v1845
        %1867 = vmatprep.subr.bf16.mxu0 0
        %1868 = vmatpush1.bf16.msra.mxu0 %v1846
        %1869 = vmatprep.subr.bf16.mxu0 0
        %1870 = vmatpush1.bf16.msra.mxu0 %v1847
        %1871 = vmatprep.subr.bf16.mxu0 0
        %1872 = vmatpush1.bf16.msra.mxu0 %v1848
        %1873 = vmatprep.subr.bf16.mxu0 0
        %1874 = vmatpush1.bf16.msra.mxu0 0
        %1875 = vmatprep.subr.bf16.mxu0 0
        %1876 = vmatpush1.bf16.msra.mxu0 0
        %1877 = vmatprep.subr.bf16.mxu0 0
        %1878 = vmatpush1.bf16.msra.mxu0 0
        %1879 = vmatprep.subr.bf16.mxu0 0
        %1880 = vmatpush1.bf16.msra.mxu0 0
        %1881 = vmatprep.subr.bf16.mxu0 0
        %1882 = vmatpush1.bf16.msra.mxu0 0
        %1883 = vmatprep.subr.bf16.mxu0 0
        %1884 = vmatpush1.bf16.msra.mxu0 0
        %1885 = vmatprep.subr.bf16.mxu0 0
        %1886 = vmatpush1.bf16.msra.mxu0 0
        %1887 = vmatprep.subr.bf16.mxu0 0
        %1888 = vmatpush1.bf16.msra.mxu0 0
        %1889 = vmatprep.mubr.bf16.mxu0 0
        %1890 = vmatmul.mubr.bf16.gmra.mrb[0].mxu0 %v1792
        %v1891 = vpop.f32.mrb[0].mxu0
        %v1892 = vadd.f32 0.0, %v1891
        %v1893 = vpop.f32.mrb[0].mxu0
        %v1894 = vpop.f32.mrb[0].mxu0
        %v1895 = vadd.f32 0.0, %v1894
        %v1896 = vpop.f32.mrb[0].mxu0
        %1897 = vdwg.mxu0
        %v1914 = vunpack.c.l.b16 %v1776
        %v1915 = vunpack.c.l.b16 %v1777
        %v1916 = vunpack.c.l.b16 %v1778
        %v1917 = vunpack.c.l.b16 %v1779
        %v1918 = vunpack.c.l.b16 %v1780
        %v1919 = vunpack.c.l.b16 %v1781
        %v1920 = vunpack.c.l.b16 %v1782
        %v1921 = vunpack.c.l.b16 %v1783
        %v1922 = vunpack.c.l.b16 %v1784
        %v1923 = vunpack.c.l.b16 %v1785
        %v1924 = vunpack.c.l.b16 %v1786
        %v1925 = vunpack.c.l.b16 %v1787
        %v1926 = vunpack.c.l.b16 %v1788
        %v1927 = vunpack.c.l.b16 %v1789
        %v1928 = vunpack.c.l.b16 %v1790
        %v1929 = vunpack.c.l.b16 %v1791
        %v1930 = vpack.c.b16 %v1915, %v1914
        %v1931 = vpack.c.b16 %v1917, %v1916
        %v1932 = vpack.c.b16 %v1919, %v1918
        %v1933 = vpack.c.b16 %v1921, %v1920
        %v1934 = vpack.c.b16 %v1923, %v1922
        %v1935 = vpack.c.b16 %v1925, %v1924
        %v1936 = vpack.c.b16 %v1927, %v1926
        %v1937 = vpack.c.b16 %v1929, %v1928
        %1946 = vmatprep.subr.bf16.mxu0 0
        %1947 = vmatpush1.bf16.msra.mxu0 %v1930
        %1948 = vmatprep.subr.bf16.mxu0 0
        %1949 = vmatpush1.bf16.msra.mxu0 %v1931
        %1950 = vmatprep.subr.bf16.mxu0 0
        %1951 = vmatpush1.bf16.msra.mxu0 %v1932
        %1952 = vmatprep.subr.bf16.mxu0 0
        %1953 = vmatpush1.bf16.msra.mxu0 %v1933
        %1954 = vmatprep.subr.bf16.mxu0 0
        %1955 = vmatpush1.bf16.msra.mxu0 %v1934
        %1956 = vmatprep.subr.bf16.mxu0 0
        %1957 = vmatpush1.bf16.msra.mxu0 %v1935
        %1958 = vmatprep.subr.bf16.mxu0 0
        %1959 = vmatpush1.bf16.msra.mxu0 %v1936
        %1960 = vmatprep.subr.bf16.mxu0 0
        %1961 = vmatpush1.bf16.msra.mxu0 %v1937
        %1962 = vmatprep.subr.bf16.mxu0 0
        %1963 = vmatpush1.bf16.msra.mxu0 0
        %1964 = vmatprep.subr.bf16.mxu0 0
        %1965 = vmatpush1.bf16.msra.mxu0 0
        %1966 = vmatprep.subr.bf16.mxu0 0
        %1967 = vmatpush1.bf16.msra.mxu0 0
        %1968 = vmatprep.subr.bf16.mxu0 0
        %1969 = vmatpush1.bf16.msra.mxu0 0
        %1970 = vmatprep.subr.bf16.mxu0 0
        %1971 = vmatpush1.bf16.msra.mxu0 0
        %1972 = vmatprep.subr.bf16.mxu0 0
        %1973 = vmatpush1.bf16.msra.mxu0 0
        %1974 = vmatprep.subr.bf16.mxu0 0
        %1975 = vmatpush1.bf16.msra.mxu0 0
        %1976 = vmatprep.subr.bf16.mxu0 0
        %1977 = vmatpush1.bf16.msra.mxu0 0
        %1978 = vmatprep.mubr.bf16.mxu0 0
        %1979 = vmatmul.mubr.bf16.gmra.mrb[0].mxu0 %v1775
        %v1980 = vpop.f32.mrb[0].mxu0
        %v1981 = vadd.f32 %v1892, %v1980
        %v1982 = vpop.f32.mrb[0].mxu0
        %v1983 = vpop.f32.mrb[0].mxu0
        %v1984 = vadd.f32 %v1895, %v1983
        %v1985 = vpop.f32.mrb[0].mxu0
        %1986 = vdwg.mxu0
        %v1987 = vld [vmem:[#allocation19] sm:$0x1]
        %v1989 = vlaneseq
        %v1990 = vshrl.u32 %v1989, 7
        %v1991 = vsub.s32 0, %v1990
        %v1992 = vrot.slane %v1987, %v1991
        %v1994 = vadd.f32 %v1981, %v1992
        %v1995 = vadd.f32 %v1984, %v1992
        %v1996 = vmax.f32 %v1994, 0.0
        %v1997 = vmax.f32 %v1995, 0.0
        %v1998 = vpack.c.bf16 %v1997, %v1996
        %v1999 = vld [vmem:[#allocation21] sm:$0xf]
        %v2000 = vld [vmem:[#allocation21 + $0x4] sm:$0xf]
        %v2001 = vld [vmem:[#allocation21 + $0x8] sm:$0xf]
        %v2002 = vld [vmem:[#allocation21 + $0xc] sm:$0xf]
        %v2003 = vld [vmem:[#allocation21 + $0x10] sm:$0xf]
        %v2004 = vld [vmem:[#allocation21 + $0x14] sm:$0xf]
        %v2005 = vld [vmem:[#allocation21 + $0x18] sm:$0xf]
        %v2006 = vld [vmem:[#allocation21 + $0x1c] sm:$0xf]
        %v2007 = vld [vmem:[#allocation21 + $0x20] sm:$0xf]
        %v2008 = vld [vmem:[#allocation21 + $0x24] sm:$0xf]
        %v2009 = vld [vmem:[#allocation21 + $0x28] sm:$0xf]
        %v2010 = vld [vmem:[#allocation21 + $0x2c] sm:$0xf]
        %v2011 = vld [vmem:[#allocation21 + $0x30] sm:$0xf]
        %v2012 = vld [vmem:[#allocation21 + $0x34] sm:$0xf]
        %v2013 = vld [vmem:[#allocation21 + $0x38] sm:$0xf]
        %v2014 = vld [vmem:[#allocation21 + $0x3c] sm:$0xf]
        %v2015 = vld [vmem:[#allocation22] sm:$0x1]
        %v2017 = vlaneseq
        %v2018 = vshrl.u32 %v2017, 7
        %v2019 = vsub.s32 0, %v2018
        %v2020 = vrot.slane %v2015, %v2019
        %v2038 = vunpack.c.l.b16 %v1999
        %v2039 = vunpack.c.l.b16 %v2000
        %v2040 = vunpack.c.l.b16 %v2001
        %v2041 = vunpack.c.l.b16 %v2002
        %v2042 = vunpack.c.l.b16 %v2003
        %v2043 = vunpack.c.l.b16 %v2004
        %v2044 = vunpack.c.l.b16 %v2005
        %v2045 = vunpack.c.l.b16 %v2006
        %v2046 = vunpack.c.l.b16 %v2007
        %v2047 = vunpack.c.l.b16 %v2008
        %v2048 = vunpack.c.l.b16 %v2009
        %v2049 = vunpack.c.l.b16 %v2010
        %v2050 = vunpack.c.l.b16 %v2011
        %v2051 = vunpack.c.l.b16 %v2012
        %v2052 = vunpack.c.l.b16 %v2013
        %v2053 = vunpack.c.l.b16 %v2014
        %v2054 = vpack.c.b16 %v2039, %v2038
        %v2055 = vpack.c.b16 %v2041, %v2040
        %v2056 = vpack.c.b16 %v2043, %v2042
        %v2057 = vpack.c.b16 %v2045, %v2044
        %v2058 = vpack.c.b16 %v2047, %v2046
        %v2059 = vpack.c.b16 %v2049, %v2048
        %v2060 = vpack.c.b16 %v2051, %v2050
        %v2061 = vpack.c.b16 %v2053, %v2052
        %2070 = vmatprep.subr.bf16.mxu0 0
        %2071 = vmatpush1.bf16.msra.mxu0 %v2054
        %2072 = vmatprep.subr.bf16.mxu0 0
        %2073 = vmatpush1.bf16.msra.mxu0 %v2055
        %2074 = vmatprep.subr.bf16.mxu0 0
        %2075 = vmatpush1.bf16.msra.mxu0 %v2056
        %2076 = vmatprep.subr.bf16.mxu0 0
        %2077 = vmatpush1.bf16.msra.mxu0 %v2057
        %2078 = vmatprep.subr.bf16.mxu0 0
        %2079 = vmatpush1.bf16.msra.mxu0 %v2058
        %2080 = vmatprep.subr.bf16.mxu0 0
        %2081 = vmatpush1.bf16.msra.mxu0 %v2059
        %2082 = vmatprep.subr.bf16.mxu0 0
        %2083 = vmatpush1.bf16.msra.mxu0 %v2060
        %2084 = vmatprep.subr.bf16.mxu0 0
        %2085 = vmatpush1.bf16.msra.mxu0 %v2061
        %2086 = vmatprep.subr.bf16.mxu0 0
        %2087 = vmatpush1.bf16.msra.mxu0 0
        %2088 = vmatprep.subr.bf16.mxu0 0
        %2089 = vmatpush1.bf16.msra.mxu0 0
        %2090 = vmatprep.subr.bf16.mxu0 0
        %2091 = vmatpush1.bf16.msra.mxu0 0
        %2092 = vmatprep.subr.bf16.mxu0 0
        %2093 = vmatpush1.bf16.msra.mxu0 0
        %2094 = vmatprep.subr.bf16.mxu0 0
        %2095 = vmatpush1.bf16.msra.mxu0 0
        %2096 = vmatprep.subr.bf16.mxu0 0
        %2097 = vmatpush1.bf16.msra.mxu0 0
        %2098 = vmatprep.subr.bf16.mxu0 0
        %2099 = vmatpush1.bf16.msra.mxu0 0
        %2100 = vmatprep.subr.bf16.mxu0 0
        %2101 = vmatpush1.bf16.msra.mxu0 0
        %2102 = vmatprep.mubr.bf16.mxu0 0
        %2103 = vmatmul.mubr.bf16.gmra.mrb[0].mxu0 %v1998
        %v2104 = vpop.f32.mrb[0].mxu0
        %v2105 = vadd.f32 %v2020, %v2104
        %v2106 = vpop.f32.mrb[0].mxu0
        %v2107 = vpop.f32.mrb[0].mxu0
        %v2108 = vadd.f32 %v2020, %v2107
        %v2109 = vpop.f32.mrb[0].mxu0
        %2110 = vdwg.mxu0
        %v2111 = vmax.f32 %v2105, 0.0
        %v2112 = vmax.f32 %v2108, 0.0
        %v2113 = vpack.c.bf16 %v2112, %v2111
        %v2114 = vld [vmem:[#allocation24] sm:$0xf]
        %v2115 = vld [vmem:[#allocation24 + $0x4] sm:$0xf]
        %v2116 = vld [vmem:[#allocation24 + $0x8] sm:$0xf]
        %v2117 = vld [vmem:[#allocation24 + $0xc] sm:$0xf]
        %v2118 = vld [vmem:[#allocation24 + $0x10] sm:$0xf]
        %v2119 = vld [vmem:[#allocation24 + $0x14] sm:$0xf]
        %v2120 = vld [vmem:[#allocation24 + $0x18] sm:$0xf]
        %v2121 = vld [vmem:[#allocation24 + $0x1c] sm:$0xf]
        %v2122 = vld [vmem:[#allocation24 + $0x20] sm:$0xf]
        %v2123 = vld [vmem:[#allocation24 + $0x24] sm:$0xf]
        %v2124 = vld [vmem:[#allocation24 + $0x28] sm:$0xf]
        %v2125 = vld [vmem:[#allocation24 + $0x2c] sm:$0xf]
        %v2126 = vld [vmem:[#allocation24 + $0x30] sm:$0xf]
        %v2127 = vld [vmem:[#allocation24 + $0x34] sm:$0xf]
        %v2128 = vld [vmem:[#allocation24 + $0x38] sm:$0xf]
        %v2129 = vld [vmem:[#allocation24 + $0x3c] sm:$0xf]
        %v2130 = vld [vmem:[#allocation25] sm:$0x1]
        %v2132 = vlaneseq
        %v2133 = vshrl.u32 %v2132, 7
        %v2134 = vsub.s32 0, %v2133
        %v2135 = vrot.slane %v2130, %v2134
        %v2153 = vunpack.c.l.b16 %v2114
        %v2154 = vunpack.c.l.b16 %v2115
        %v2155 = vunpack.c.l.b16 %v2116
        %v2156 = vunpack.c.l.b16 %v2117
        %v2157 = vunpack.c.l.b16 %v2118
        %v2158 = vunpack.c.l.b16 %v2119
        %v2159 = vunpack.c.l.b16 %v2120
        %v2160 = vunpack.c.l.b16 %v2121
        %v2161 = vunpack.c.l.b16 %v2122
        %v2162 = vunpack.c.l.b16 %v2123
        %v2163 = vunpack.c.l.b16 %v2124
        %v2164 = vunpack.c.l.b16 %v2125
        %v2165 = vunpack.c.l.b16 %v2126
        %v2166 = vunpack.c.l.b16 %v2127
        %v2167 = vunpack.c.l.b16 %v2128
        %v2168 = vunpack.c.l.b16 %v2129
        %v2169 = vpack.c.b16 %v2154, %v2153
        %v2170 = vpack.c.b16 %v2156, %v2155
        %v2171 = vpack.c.b16 %v2158, %v2157
        %v2172 = vpack.c.b16 %v2160, %v2159
        %v2173 = vpack.c.b16 %v2162, %v2161
        %v2174 = vpack.c.b16 %v2164, %v2163
        %v2175 = vpack.c.b16 %v2166, %v2165
        %v2176 = vpack.c.b16 %v2168, %v2167
        %2185 = vmatprep.subr.bf16.mxu0 0
        %2186 = vmatpush1.bf16.msra.mxu0 %v2169
        %2187 = vmatprep.subr.bf16.mxu0 0
        %2188 = vmatpush1.bf16.msra.mxu0 %v2170
        %2189 = vmatprep.subr.bf16.mxu0 0
        %2190 = vmatpush1.bf16.msra.mxu0 %v2171
        %2191 = vmatprep.subr.bf16.mxu0 0
        %2192 = vmatpush1.bf16.msra.mxu0 %v2172
        %2193 = vmatprep.subr.bf16.mxu0 0
        %2194 = vmatpush1.bf16.msra.mxu0 %v2173
        %2195 = vmatprep.subr.bf16.mxu0 0
        %2196 = vmatpush1.bf16.msra.mxu0 %v2174
        %2197 = vmatprep.subr.bf16.mxu0 0
        %2198 = vmatpush1.bf16.msra.mxu0 %v2175
        %2199 = vmatprep.subr.bf16.mxu0 0
        %2200 = vmatpush1.bf16.msra.mxu0 %v2176
        %2201 = vmatprep.subr.bf16.mxu0 0
        %2202 = vmatpush1.bf16.msra.mxu0 0
        %2203 = vmatprep.subr.bf16.mxu0 0
        %2204 = vmatpush1.bf16.msra.mxu0 0
        %2205 = vmatprep.subr.bf16.mxu0 0
        %2206 = vmatpush1.bf16.msra.mxu0 0
        %2207 = vmatprep.subr.bf16.mxu0 0
        %2208 = vmatpush1.bf16.msra.mxu0 0
        %2209 = vmatprep.subr.bf16.mxu0 0
        %2210 = vmatpush1.bf16.msra.mxu0 0
        %2211 = vmatprep.subr.bf16.mxu0 0
        %2212 = vmatpush1.bf16.msra.mxu0 0
        %2213 = vmatprep.subr.bf16.mxu0 0
        %2214 = vmatpush1.bf16.msra.mxu0 0
        %2215 = vmatprep.subr.bf16.mxu0 0
        %2216 = vmatpush1.bf16.msra.mxu0 0
        %2217 = vmatprep.mubr.bf16.mxu0 0
        %2218 = vmatmul.mubr.bf16.gmra.mrb[0].mxu0 %v2113
        %v2219 = vpop.f32.mrb[0].mxu0
        %v2220 = vadd.f32 %v2135, %v2219
        %v2221 = vpop.f32.mrb[0].mxu0
        %v2222 = vpop.f32.mrb[0].mxu0
        %v2223 = vadd.f32 %v2135, %v2222
        %v2224 = vpop.f32.mrb[0].mxu0
        %2225 = vdwg.mxu0
        %v2226 = vpack.c.bf16 %v2223, %v2220
        %v2227 = vld [vmem:[#allocation27] sm:$0xff]
        %v2228 = vld [vmem:[#allocation27 + $0x8] sm:$0xff]
        %v2229 = vld [vmem:[#allocation27 + $0x10] sm:$0xff]
        %v2230 = vld [vmem:[#allocation27 + $0x18] sm:$0xff]
        %v2231 = vld [vmem:[#allocation27 + $0x20] sm:$0xff]
        %v2232 = vld [vmem:[#allocation27 + $0x28] sm:$0xff]
        %v2233 = vld [vmem:[#allocation27 + $0x30] sm:$0xff]
        %v2234 = vld [vmem:[#allocation27 + $0x38] sm:$0xff]
        %v2235 = vld [vmem:[#allocation27 + $0x40] sm:$0xff]
        %v2236 = vld [vmem:[#allocation27 + $0x48] sm:$0xff]
        %v2237 = vld [vmem:[#allocation27 + $0x50] sm:$0xff]
        %v2238 = vld [vmem:[#allocation27 + $0x58] sm:$0xff]
        %v2239 = vld [vmem:[#allocation27 + $0x60] sm:$0xff]
        %v2240 = vld [vmem:[#allocation27 + $0x68] sm:$0xff]
        %v2241 = vld [vmem:[#allocation27 + $0x70] sm:$0xff]
        %v2242 = vld [vmem:[#allocation27 + $0x78] sm:$0xff]
        %v2243 = vld [vmem:[#allocation27 + $0x80] sm:$0xff]
        %v2244 = vld [vmem:[#allocation27 + $0x88] sm:$0xff]
        %v2245 = vld [vmem:[#allocation27 + $0x90] sm:$0xff]
        %v2246 = vld [vmem:[#allocation27 + $0x98] sm:$0xff]
        %v2247 = vld [vmem:[#allocation27 + $0xa0] sm:$0xff]
        %v2248 = vld [vmem:[#allocation27 + $0xa8] sm:$0xff]
        %v2249 = vld [vmem:[#allocation27 + $0xb0] sm:$0xff]
        %v2250 = vld [vmem:[#allocation27 + $0xb8] sm:$0xff]
        %v2251 = vld [vmem:[#allocation27 + $0xc0] sm:$0xff]
        %v2252 = vld [vmem:[#allocation27 + $0xc8] sm:$0xff]
        %v2253 = vld [vmem:[#allocation27 + $0xd0] sm:$0xff]
        %v2254 = vld [vmem:[#allocation27 + $0xd8] sm:$0xff]
        %v2255 = vld [vmem:[#allocation27 + $0xe0] sm:$0xff]
        %v2256 = vld [vmem:[#allocation27 + $0xe8] sm:$0xff]
        %v2257 = vld [vmem:[#allocation27 + $0xf0] sm:$0xff]
        %v2258 = vld [vmem:[#allocation27 + $0xf8] sm:$0xff]
        %v2259 = vld [vmem:[#allocation28] sm:$0xff]
        %v2260 = vld [vmem:[#allocation28 + $0x8] sm:$0xff]
        %v2261 = vld [vmem:[#allocation28 + $0x10] sm:$0xff]
        %v2262 = vld [vmem:[#allocation28 + $0x18] sm:$0xff]
        %v2263 = vld [vmem:[#allocation28 + $0x20] sm:$0xff]
        %v2264 = vld [vmem:[#allocation28 + $0x28] sm:$0xff]
        %v2265 = vld [vmem:[#allocation28 + $0x30] sm:$0xff]
        %v2266 = vld [vmem:[#allocation28 + $0x38] sm:$0xff]
        %v2267 = vld [vmem:[#allocation28 + $0x40] sm:$0xff]
        %v2268 = vld [vmem:[#allocation28 + $0x48] sm:$0xff]
        %v2269 = vld [vmem:[#allocation28 + $0x50] sm:$0xff]
        %v2270 = vld [vmem:[#allocation28 + $0x58] sm:$0xff]
        %v2271 = vld [vmem:[#allocation28 + $0x60] sm:$0xff]
        %v2272 = vld [vmem:[#allocation28 + $0x68] sm:$0xff]
        %v2273 = vld [vmem:[#allocation28 + $0x70] sm:$0xff]
        %v2274 = vld [vmem:[#allocation28 + $0x78] sm:$0xff]
        %v2275 = vld [vmem:[#allocation28 + $0x80] sm:$0xff]
        %v2276 = vld [vmem:[#allocation28 + $0x88] sm:$0xff]
        %v2277 = vld [vmem:[#allocation28 + $0x90] sm:$0xff]
        %v2278 = vld [vmem:[#allocation28 + $0x98] sm:$0xff]
        %v2279 = vld [vmem:[#allocation28 + $0xa0] sm:$0xff]
        %v2280 = vld [vmem:[#allocation28 + $0xa8] sm:$0xff]
        %v2281 = vld [vmem:[#allocation28 + $0xb0] sm:$0xff]
        %v2282 = vld [vmem:[#allocation28 + $0xb8] sm:$0xff]
        %v2283 = vld [vmem:[#allocation28 + $0xc0] sm:$0xff]
        %v2284 = vld [vmem:[#allocation28 + $0xc8] sm:$0xff]
        %v2285 = vld [vmem:[#allocation28 + $0xd0] sm:$0xff]
        %v2286 = vld [vmem:[#allocation28 + $0xd8] sm:$0xff]
        %v2287 = vld [vmem:[#allocation28 + $0xe0] sm:$0xff]
        %v2288 = vld [vmem:[#allocation28 + $0xe8] sm:$0xff]
        %v2289 = vld [vmem:[#allocation28 + $0xf0] sm:$0xff]
        %v2290 = vld [vmem:[#allocation28 + $0xf8] sm:$0xff]
        %v2323 = vunpack.c.l.b16 %v2259
        %v2324 = vunpack.c.h.b16 %v2259
        %v2325 = vunpack.c.l.b16 %v2260
        %v2326 = vunpack.c.h.b16 %v2260
        %v2327 = vunpack.c.l.b16 %v2261
        %v2328 = vunpack.c.h.b16 %v2261
        %v2329 = vunpack.c.l.b16 %v2262
        %v2330 = vunpack.c.h.b16 %v2262
        %v2331 = vunpack.c.l.b16 %v2263
        %v2332 = vunpack.c.h.b16 %v2263
        %v2333 = vunpack.c.l.b16 %v2264
        %v2334 = vunpack.c.h.b16 %v2264
        %v2335 = vunpack.c.l.b16 %v2265
        %v2336 = vunpack.c.h.b16 %v2265
        %v2337 = vunpack.c.l.b16 %v2266
        %v2338 = vunpack.c.h.b16 %v2266
        %v2339 = vunpack.c.l.b16 %v2267
        %v2340 = vunpack.c.h.b16 %v2267
        %v2341 = vunpack.c.l.b16 %v2268
        %v2342 = vunpack.c.h.b16 %v2268
        %v2343 = vunpack.c.l.b16 %v2269
        %v2344 = vunpack.c.h.b16 %v2269
        %v2345 = vunpack.c.l.b16 %v2270
        %v2346 = vunpack.c.h.b16 %v2270
        %v2347 = vunpack.c.l.b16 %v2271
        %v2348 = vunpack.c.h.b16 %v2271
        %v2349 = vunpack.c.l.b16 %v2272
        %v2350 = vunpack.c.h.b16 %v2272
        %v2351 = vunpack.c.l.b16 %v2273
        %v2352 = vunpack.c.h.b16 %v2273
        %v2353 = vunpack.c.l.b16 %v2274
        %v2354 = vunpack.c.h.b16 %v2274
        %v2355 = vunpack.c.l.b16 %v2275
        %v2356 = vunpack.c.h.b16 %v2275
        %v2357 = vunpack.c.l.b16 %v2276
        %v2358 = vunpack.c.h.b16 %v2276
        %v2359 = vunpack.c.l.b16 %v2277
        %v2360 = vunpack.c.h.b16 %v2277
        %v2361 = vunpack.c.l.b16 %v2278
        %v2362 = vunpack.c.h.b16 %v2278
        %v2363 = vunpack.c.l.b16 %v2279
        %v2364 = vunpack.c.h.b16 %v2279
        %v2365 = vunpack.c.l.b16 %v2280
        %v2366 = vunpack.c.h.b16 %v2280
        %v2367 = vunpack.c.l.b16 %v2281
        %v2368 = vunpack.c.h.b16 %v2281
        %v2369 = vunpack.c.l.b16 %v2282
        %v2370 = vunpack.c.h.b16 %v2282
        %v2371 = vunpack.c.l.b16 %v2283
        %v2372 = vunpack.c.h.b16 %v2283
        %v2373 = vunpack.c.l.b16 %v2284
        %v2374 = vunpack.c.h.b16 %v2284
        %v2375 = vunpack.c.l.b16 %v2285
        %v2376 = vunpack.c.h.b16 %v2285
        %v2377 = vunpack.c.l.b16 %v2286
        %v2378 = vunpack.c.h.b16 %v2286
        %v2379 = vunpack.c.l.b16 %v2287
        %v2380 = vunpack.c.h.b16 %v2287
        %v2381 = vunpack.c.l.b16 %v2288
        %v2382 = vunpack.c.h.b16 %v2288
        %v2383 = vunpack.c.l.b16 %v2289
        %v2384 = vunpack.c.h.b16 %v2289
        %v2385 = vunpack.c.l.b16 %v2290
        %v2386 = vunpack.c.h.b16 %v2290
        %v2387 = vpack.c.b16 %v2327, %v2323
        %v2388 = vpack.c.b16 %v2328, %v2324
        %v2389 = vpack.c.b16 %v2329, %v2325
        %v2390 = vpack.c.b16 %v2330, %v2326
        %v2391 = vpack.c.b16 %v2335, %v2331
        %v2392 = vpack.c.b16 %v2336, %v2332
        %v2393 = vpack.c.b16 %v2337, %v2333
        %v2394 = vpack.c.b16 %v2338, %v2334
        %v2395 = vpack.c.b16 %v2343, %v2339
        %v2396 = vpack.c.b16 %v2344, %v2340
        %v2397 = vpack.c.b16 %v2345, %v2341
        %v2398 = vpack.c.b16 %v2346, %v2342
        %v2399 = vpack.c.b16 %v2351, %v2347
        %v2400 = vpack.c.b16 %v2352, %v2348
        %v2401 = vpack.c.b16 %v2353, %v2349
        %v2402 = vpack.c.b16 %v2354, %v2350
        %v2403 = vpack.c.b16 %v2359, %v2355
        %v2404 = vpack.c.b16 %v2360, %v2356
        %v2405 = vpack.c.b16 %v2361, %v2357
        %v2406 = vpack.c.b16 %v2362, %v2358
        %v2407 = vpack.c.b16 %v2367, %v2363
        %v2408 = vpack.c.b16 %v2368, %v2364
        %v2409 = vpack.c.b16 %v2369, %v2365
        %v2410 = vpack.c.b16 %v2370, %v2366
        %v2411 = vpack.c.b16 %v2375, %v2371
        %v2412 = vpack.c.b16 %v2376, %v2372
        %v2413 = vpack.c.b16 %v2377, %v2373
        %v2414 = vpack.c.b16 %v2378, %v2374
        %v2415 = vpack.c.b16 %v2383, %v2379
        %v2416 = vpack.c.b16 %v2384, %v2380
        %v2417 = vpack.c.b16 %v2385, %v2381
        %v2418 = vpack.c.b16 %v2386, %v2382
        %2451 = vmatprep.subr.bf16.mxu0 %v2388
        %2452 = vmatpush1.bf16.msra.mxu0 %v2387
        %2453 = vmatprep.subr.bf16.mxu0 %v2392
        %2454 = vmatpush1.bf16.msra.mxu0 %v2391
        %2455 = vmatprep.subr.bf16.mxu0 %v2396
        %2456 = vmatpush1.bf16.msra.mxu0 %v2395
        %2457 = vmatprep.subr.bf16.mxu0 %v2400
        %2458 = vmatpush1.bf16.msra.mxu0 %v2399
        %2459 = vmatprep.subr.bf16.mxu0 %v2404
        %2460 = vmatpush1.bf16.msra.mxu0 %v2403
        %2461 = vmatprep.subr.bf16.mxu0 %v2408
        %2462 = vmatpush1.bf16.msra.mxu0 %v2407
        %2463 = vmatprep.subr.bf16.mxu0 %v2412
        %2464 = vmatpush1.bf16.msra.mxu0 %v2411
        %2465 = vmatprep.subr.bf16.mxu0 %v2416
        %2466 = vmatpush1.bf16.msra.mxu0 %v2415
        %2467 = vmatprep.subr.bf16.mxu0 0
        %2468 = vmatpush1.bf16.msra.mxu0 0
        %2469 = vmatprep.subr.bf16.mxu0 0
        %2470 = vmatpush1.bf16.msra.mxu0 0
        %2471 = vmatprep.subr.bf16.mxu0 0
        %2472 = vmatpush1.bf16.msra.mxu0 0
        %2473 = vmatprep.subr.bf16.mxu0 0
        %2474 = vmatpush1.bf16.msra.mxu0 0
        %2475 = vmatprep.subr.bf16.mxu0 0
        %2476 = vmatpush1.bf16.msra.mxu0 0
        %2477 = vmatprep.subr.bf16.mxu0 0
        %2478 = vmatpush1.bf16.msra.mxu0 0
        %2479 = vmatprep.subr.bf16.mxu0 0
        %2480 = vmatpush1.bf16.msra.mxu0 0
        %2481 = vmatprep.subr.bf16.mxu0 0
        %2482 = vmatpush1.bf16.msra.mxu0 0
        %2483 = vmatprep.mubr.bf16.mxu0 0
        %2484 = vmatmul.mubr.bf16.gmra.mrb[0].mxu0 %v1079
        %v2485 = vpop.f32.mrb[0].mxu0
        %v2486 = vadd.f32 0.0, %v2485
        %v2487 = vpop.f32.mrb[0].mxu0
        %v2488 = vadd.f32 0.0, %v2487
        %v2489 = vpop.f32.mrb[0].mxu0
        %v2490 = vadd.f32 0.0, %v2489
        %v2491 = vpop.f32.mrb[0].mxu0
        %v2492 = vadd.f32 0.0, %v2491
        %2493 = vdwg.mxu0
        %2494 = vmatprep.subr.bf16.mxu0 %v2390
        %2495 = vmatpush1.bf16.msra.mxu0 %v2389
        %2496 = vmatprep.subr.bf16.mxu0 %v2394
        %2497 = vmatpush1.bf16.msra.mxu0 %v2393
        %2498 = vmatprep.subr.bf16.mxu0 %v2398
        %2499 = vmatpush1.bf16.msra.mxu0 %v2397
        %2500 = vmatprep.subr.bf16.mxu0 %v2402
        %2501 = vmatpush1.bf16.msra.mxu0 %v2401
        %2502 = vmatprep.subr.bf16.mxu0 %v2406
        %2503 = vmatpush1.bf16.msra.mxu0 %v2405
        %2504 = vmatprep.subr.bf16.mxu0 %v2410
        %2505 = vmatpush1.bf16.msra.mxu0 %v2409
        %2506 = vmatprep.subr.bf16.mxu0 %v2414
        %2507 = vmatpush1.bf16.msra.mxu0 %v2413
        %2508 = vmatprep.subr.bf16.mxu0 %v2418
        %2509 = vmatpush1.bf16.msra.mxu0 %v2417
        %2510 = vmatprep.subr.bf16.mxu0 0
        %2511 = vmatpush1.bf16.msra.mxu0 0
        %2512 = vmatprep.subr.bf16.mxu0 0
        %2513 = vmatpush1.bf16.msra.mxu0 0
        %2514 = vmatprep.subr.bf16.mxu0 0
        %2515 = vmatpush1.bf16.msra.mxu0 0
        %2516 = vmatprep.subr.bf16.mxu0 0
        %2517 = vmatpush1.bf16.msra.mxu0 0
        %2518 = vmatprep.subr.bf16.mxu0 0
        %2519 = vmatpush1.bf16.msra.mxu0 0
        %2520 = vmatprep.subr.bf16.mxu0 0
        %2521 = vmatpush1.bf16.msra.mxu0 0
        %2522 = vmatprep.subr.bf16.mxu0 0
        %2523 = vmatpush1.bf16.msra.mxu0 0
        %2524 = vmatprep.subr.bf16.mxu0 0
        %2525 = vmatpush1.bf16.msra.mxu0 0
        %2526 = vmatprep.mubr.bf16.mxu0 0
        %2527 = vmatmul.mubr.bf16.gmra.mrb[0].mxu0 %v1079
        %v2528 = vpop.f32.mrb[0].mxu0
        %v2529 = vadd.f32 0.0, %v2528
        %v2530 = vpop.f32.mrb[0].mxu0
        %v2531 = vadd.f32 0.0, %v2530
        %v2532 = vpop.f32.mrb[0].mxu0
        %v2533 = vadd.f32 0.0, %v2532
        %v2534 = vpop.f32.mrb[0].mxu0
        %v2535 = vadd.f32 0.0, %v2534
        %2536 = vdwg.mxu0
        %v2569 = vunpack.c.l.b16 %v2227
        %v2570 = vunpack.c.h.b16 %v2227
        %v2571 = vunpack.c.l.b16 %v2228
        %v2572 = vunpack.c.h.b16 %v2228
        %v2573 = vunpack.c.l.b16 %v2229
        %v2574 = vunpack.c.h.b16 %v2229
        %v2575 = vunpack.c.l.b16 %v2230
        %v2576 = vunpack.c.h.b16 %v2230
        %v2577 = vunpack.c.l.b16 %v2231
        %v2578 = vunpack.c.h.b16 %v2231
        %v2579 = vunpack.c.l.b16 %v2232
        %v2580 = vunpack.c.h.b16 %v2232
        %v2581 = vunpack.c.l.b16 %v2233
        %v2582 = vunpack.c.h.b16 %v2233
        %v2583 = vunpack.c.l.b16 %v2234
        %v2584 = vunpack.c.h.b16 %v2234
        %v2585 = vunpack.c.l.b16 %v2235
        %v2586 = vunpack.c.h.b16 %v2235
        %v2587 = vunpack.c.l.b16 %v2236
        %v2588 = vunpack.c.h.b16 %v2236
        %v2589 = vunpack.c.l.b16 %v2237
        %v2590 = vunpack.c.h.b16 %v2237
        %v2591 = vunpack.c.l.b16 %v2238
        %v2592 = vunpack.c.h.b16 %v2238
        %v2593 = vunpack.c.l.b16 %v2239
        %v2594 = vunpack.c.h.b16 %v2239
        %v2595 = vunpack.c.l.b16 %v2240
        %v2596 = vunpack.c.h.b16 %v2240
        %v2597 = vunpack.c.l.b16 %v2241
        %v2598 = vunpack.c.h.b16 %v2241
        %v2599 = vunpack.c.l.b16 %v2242
        %v2600 = vunpack.c.h.b16 %v2242
        %v2601 = vunpack.c.l.b16 %v2243
        %v2602 = vunpack.c.h.b16 %v2243
        %v2603 = vunpack.c.l.b16 %v2244
        %v2604 = vunpack.c.h.b16 %v2244
        %v2605 = vunpack.c.l.b16 %v2245
        %v2606 = vunpack.c.h.b16 %v2245
        %v2607 = vunpack.c.l.b16 %v2246
        %v2608 = vunpack.c.h.b16 %v2246
        %v2609 = vunpack.c.l.b16 %v2247
        %v2610 = vunpack.c.h.b16 %v2247
        %v2611 = vunpack.c.l.b16 %v2248
        %v2612 = vunpack.c.h.b16 %v2248
        %v2613 = vunpack.c.l.b16 %v2249
        %v2614 = vunpack.c.h.b16 %v2249
        %v2615 = vunpack.c.l.b16 %v2250
        %v2616 = vunpack.c.h.b16 %v2250
        %v2617 = vunpack.c.l.b16 %v2251
        %v2618 = vunpack.c.h.b16 %v2251
        %v2619 = vunpack.c.l.b16 %v2252
        %v2620 = vunpack.c.h.b16 %v2252
        %v2621 = vunpack.c.l.b16 %v2253
        %v2622 = vunpack.c.h.b16 %v2253
        %v2623 = vunpack.c.l.b16 %v2254
        %v2624 = vunpack.c.h.b16 %v2254
        %v2625 = vunpack.c.l.b16 %v2255
        %v2626 = vunpack.c.h.b16 %v2255
        %v2627 = vunpack.c.l.b16 %v2256
        %v2628 = vunpack.c.h.b16 %v2256
        %v2629 = vunpack.c.l.b16 %v2257
        %v2630 = vunpack.c.h.b16 %v2257
        %v2631 = vunpack.c.l.b16 %v2258
        %v2632 = vunpack.c.h.b16 %v2258
        %v2633 = vpack.c.b16 %v2573, %v2569
        %v2634 = vpack.c.b16 %v2574, %v2570
        %v2635 = vpack.c.b16 %v2575, %v2571
        %v2636 = vpack.c.b16 %v2576, %v2572
        %v2637 = vpack.c.b16 %v2581, %v2577
        %v2638 = vpack.c.b16 %v2582, %v2578
        %v2639 = vpack.c.b16 %v2583, %v2579
        %v2640 = vpack.c.b16 %v2584, %v2580
        %v2641 = vpack.c.b16 %v2589, %v2585
        %v2642 = vpack.c.b16 %v2590, %v2586
        %v2643 = vpack.c.b16 %v2591, %v2587
        %v2644 = vpack.c.b16 %v2592, %v2588
        %v2645 = vpack.c.b16 %v2597, %v2593
        %v2646 = vpack.c.b16 %v2598, %v2594
        %v2647 = vpack.c.b16 %v2599, %v2595
        %v2648 = vpack.c.b16 %v2600, %v2596
        %v2649 = vpack.c.b16 %v2605, %v2601
        %v2650 = vpack.c.b16 %v2606, %v2602
        %v2651 = vpack.c.b16 %v2607, %v2603
        %v2652 = vpack.c.b16 %v2608, %v2604
        %v2653 = vpack.c.b16 %v2613, %v2609
        %v2654 = vpack.c.b16 %v2614, %v2610
        %v2655 = vpack.c.b16 %v2615, %v2611
        %v2656 = vpack.c.b16 %v2616, %v2612
        %v2657 = vpack.c.b16 %v2621, %v2617
        %v2658 = vpack.c.b16 %v2622, %v2618
        %v2659 = vpack.c.b16 %v2623, %v2619
        %v2660 = vpack.c.b16 %v2624, %v2620
        %v2661 = vpack.c.b16 %v2629, %v2625
        %v2662 = vpack.c.b16 %v2630, %v2626
        %v2663 = vpack.c.b16 %v2631, %v2627
        %v2664 = vpack.c.b16 %v2632, %v2628
        %2697 = vmatprep.subr.bf16.mxu0 %v2634
        %2698 = vmatpush1.bf16.msra.mxu0 %v2633
        %2699 = vmatprep.subr.bf16.mxu0 %v2638
        %2700 = vmatpush1.bf16.msra.mxu0 %v2637
        %2701 = vmatprep.subr.bf16.mxu0 %v2642
        %2702 = vmatpush1.bf16.msra.mxu0 %v2641
        %2703 = vmatprep.subr.bf16.mxu0 %v2646
        %2704 = vmatpush1.bf16.msra.mxu0 %v2645
        %2705 = vmatprep.subr.bf16.mxu0 %v2650
        %2706 = vmatpush1.bf16.msra.mxu0 %v2649
        %2707 = vmatprep.subr.bf16.mxu0 %v2654
        %2708 = vmatpush1.bf16.msra.mxu0 %v2653
        %2709 = vmatprep.subr.bf16.mxu0 %v2658
        %2710 = vmatpush1.bf16.msra.mxu0 %v2657
        %2711 = vmatprep.subr.bf16.mxu0 %v2662
        %2712 = vmatpush1.bf16.msra.mxu0 %v2661
        %2713 = vmatprep.subr.bf16.mxu0 0
        %2714 = vmatpush1.bf16.msra.mxu0 0
        %2715 = vmatprep.subr.bf16.mxu0 0
        %2716 = vmatpush1.bf16.msra.mxu0 0
        %2717 = vmatprep.subr.bf16.mxu0 0
        %2718 = vmatpush1.bf16.msra.mxu0 0
        %2719 = vmatprep.subr.bf16.mxu0 0
        %2720 = vmatpush1.bf16.msra.mxu0 0
        %2721 = vmatprep.subr.bf16.mxu0 0
        %2722 = vmatpush1.bf16.msra.mxu0 0
        %2723 = vmatprep.subr.bf16.mxu0 0
        %2724 = vmatpush1.bf16.msra.mxu0 0
        %2725 = vmatprep.subr.bf16.mxu0 0
        %2726 = vmatpush1.bf16.msra.mxu0 0
        %2727 = vmatprep.subr.bf16.mxu0 0
        %2728 = vmatpush1.bf16.msra.mxu0 0
        %2729 = vmatprep.mubr.bf16.mxu0 0
        %2730 = vmatmul.mubr.bf16.gmra.mrb[0].mxu0 %v2226
        %v2731 = vpop.f32.mrb[0].mxu0
        %v2732 = vadd.f32 %v2486, %v2731
        %v2733 = vpop.f32.mrb[0].mxu0
        %v2734 = vadd.f32 %v2488, %v2733
        %v2735 = vpop.f32.mrb[0].mxu0
        %v2736 = vadd.f32 %v2490, %v2735
        %v2737 = vpop.f32.mrb[0].mxu0
        %v2738 = vadd.f32 %v2492, %v2737
        %2739 = vdwg.mxu0
        %2740 = vmatprep.subr.bf16.mxu0 %v2636
        %2741 = vmatpush1.bf16.msra.mxu0 %v2635
        %2742 = vmatprep.subr.bf16.mxu0 %v2640
        %2743 = vmatpush1.bf16.msra.mxu0 %v2639
        %2744 = vmatprep.subr.bf16.mxu0 %v2644
        %2745 = vmatpush1.bf16.msra.mxu0 %v2643
        %2746 = vmatprep.subr.bf16.mxu0 %v2648
        %2747 = vmatpush1.bf16.msra.mxu0 %v2647
        %2748 = vmatprep.subr.bf16.mxu0 %v2652
        %2749 = vmatpush1.bf16.msra.mxu0 %v2651
        %2750 = vmatprep.subr.bf16.mxu0 %v2656
        %2751 = vmatpush1.bf16.msra.mxu0 %v2655
        %2752 = vmatprep.subr.bf16.mxu0 %v2660
        %2753 = vmatpush1.bf16.msra.mxu0 %v2659
        %2754 = vmatprep.subr.bf16.mxu0 %v2664
        %2755 = vmatpush1.bf16.msra.mxu0 %v2663
        %2756 = vmatprep.subr.bf16.mxu0 0
        %2757 = vmatpush1.bf16.msra.mxu0 0
        %2758 = vmatprep.subr.bf16.mxu0 0
        %2759 = vmatpush1.bf16.msra.mxu0 0
        %2760 = vmatprep.subr.bf16.mxu0 0
        %2761 = vmatpush1.bf16.msra.mxu0 0
        %2762 = vmatprep.subr.bf16.mxu0 0
        %2763 = vmatpush1.bf16.msra.mxu0 0
        %2764 = vmatprep.subr.bf16.mxu0 0
        %2765 = vmatpush1.bf16.msra.mxu0 0
        %2766 = vmatprep.subr.bf16.mxu0 0
        %2767 = vmatpush1.bf16.msra.mxu0 0
        %2768 = vmatprep.subr.bf16.mxu0 0
        %2769 = vmatpush1.bf16.msra.mxu0 0
        %2770 = vmatprep.subr.bf16.mxu0 0
        %2771 = vmatpush1.bf16.msra.mxu0 0
        %2772 = vmatprep.mubr.bf16.mxu0 0
        %2773 = vmatmul.mubr.bf16.gmra.mrb[0].mxu0 %v2226
        %v2774 = vpop.f32.mrb[0].mxu0
        %v2775 = vadd.f32 %v2529, %v2774
        %v2776 = vpop.f32.mrb[0].mxu0
        %v2777 = vadd.f32 %v2531, %v2776
        %v2778 = vpop.f32.mrb[0].mxu0
        %v2779 = vadd.f32 %v2533, %v2778
        %v2780 = vpop.f32.mrb[0].mxu0
        %v2781 = vadd.f32 %v2535, %v2780
        %2782 = vdwg.mxu0
        %v2783 = vld [vmem:[%s18] sm:$0xf]
        %v2785 = vlaneseq
        %v2786 = vshrl.u32 %v2785, 7
        %v2787 = vsub.s32 0, %v2786
        %v2788 = vrot.slane %v2783, %v2787
        %v2789 = vlaneseq
        %v2790 = vshrl.u32 %v2789, 7
        %v2791 = vsub.s32 1, %v2790
        %v2792 = vrot.slane %v2783, %v2791
        %v2793 = vlaneseq
        %v2794 = vshrl.u32 %v2793, 7
        %v2795 = vsub.s32 2, %v2794
        %v2796 = vrot.slane %v2783, %v2795
        %v2797 = vlaneseq
        %v2798 = vshrl.u32 %v2797, 7
        %v2799 = vsub.s32 3, %v2798
        %v2800 = vrot.slane %v2783, %v2799
        %v2805 = vadd.f32 %v2732, %v2788
        %v2806 = vadd.f32 %v2734, %v2792
        %v2807 = vadd.f32 %v2775, %v2796
        %v2808 = vadd.f32 %v2777, %v2800
        %v2809 = vadd.f32 %v2736, %v2788
        %v2810 = vadd.f32 %v2738, %v2792
        %v2811 = vadd.f32 %v2779, %v2796
        %v2812 = vadd.f32 %v2781, %v2800
        %v2813 = vxor.u32 %v2805, 2147483648
        %v2814 = vxor.u32 %v2806, 2147483648
        %v2815 = vxor.u32 %v2807, 2147483648
        %v2816 = vxor.u32 %v2809, 2147483648
        %v2817 = vxor.u32 %v2810, 2147483648
        %v2818 = vxor.u32 %v2811, 2147483648
        %v2819 = vmul.f32 %v2813, 1.442695
        %v2820 = vpow.pop %v2819
        %v2821 = vmul.f32 %v2814, 1.442695
        %v2822 = vpow.pop %v2821
        %v2823 = vmul.f32 %v2815, 1.442695
        %v2824 = vpow.pop %v2823
        %v2825 = vmul.f32 %v2816, 1.442695
        %v2826 = vpow.pop %v2825
        %v2827 = vmul.f32 %v2817, 1.442695
        %v2828 = vpow.pop %v2827
        %v2829 = vmul.f32 %v2818, 1.442695
        %v2830 = vpow.pop %v2829
        %v2831 = vadd.f32 %v2820, 1.0
        %v2832 = vadd.f32 %v2822, 1.0
        %v2833 = vadd.f32 %v2824, 1.0
        %v2834 = vadd.f32 %v2826, 1.0
        %v2835 = vadd.f32 %v2828, 1.0
        %v2836 = vadd.f32 %v2830, 1.0
        %v2837 = vrcp.pop %v2831
        %v2838 = vmul.f32 1.0, %v2837
        %v2839 = vrcp.pop %v2832
        %v2840 = vmul.f32 1.0, %v2839
        %v2841 = vrcp.pop %v2833
        %v2842 = vmul.f32 1.0, %v2841
        %v2843 = vrcp.pop %v2834
        %v2844 = vmul.f32 1.0, %v2843
        %v2845 = vrcp.pop %v2835
        %v2846 = vmul.f32 1.0, %v2845
        %v2847 = vrcp.pop %v2836
        %v2848 = vmul.f32 1.0, %v2847
        %v2849 = vtanh.pop %v2808
        %v2850 = vtanh.pop %v2812
        %v2851 = vmul.f32 %v2840, %v1077
        %v2852 = vmul.f32 %v2846, %v1078
        %v2853 = vmul.f32 %v2838, %v2849
        %v2854 = vmul.f32 %v2844, %v2850
        %v2855 = vadd.f32 %v2851, %v2853
        %v2856 = vadd.f32 %v2852, %v2854
        %v2857 = vtanh.pop %v2855
        %v2858 = vtanh.pop %v2856
        %v2859 = vmul.f32 %v2842, %v2857
        %v2860 = vmul.f32 %v2848, %v2858
        %v2861 = vpack.c.bf16 %v2860, %v2859
        %v2862 = vld [vmem:[%s19] sm:$0xf]
        %v2863 = vld [vmem:[%s19 + $0x4] sm:$0xf]
        %v2864 = vld [vmem:[%s19 + $0x8] sm:$0xf]
        %v2865 = vld [vmem:[%s19 + $0xc] sm:$0xf]
        %v2866 = vld [vmem:[%s19 + $0x10] sm:$0xf]
        %v2867 = vld [vmem:[%s19 + $0x14] sm:$0xf]
        %v2868 = vld [vmem:[%s19 + $0x18] sm:$0xf]
        %v2869 = vld [vmem:[%s19 + $0x1c] sm:$0xf]
        %v2870 = vld [vmem:[%s19 + $0x20] sm:$0xf]
        %v2871 = vld [vmem:[%s19 + $0x24] sm:$0xf]
        %v2872 = vld [vmem:[%s19 + $0x28] sm:$0xf]
        %v2873 = vld [vmem:[%s19 + $0x2c] sm:$0xf]
        %v2874 = vld [vmem:[%s19 + $0x30] sm:$0xf]
        %v2875 = vld [vmem:[%s19 + $0x34] sm:$0xf]
        %v2876 = vld [vmem:[%s19 + $0x38] sm:$0xf]
        %v2877 = vld [vmem:[%s19 + $0x3c] sm:$0xf]
        %v2878 = vld [vmem:[%s20] sm:$0x1]
        %v2880 = vlaneseq
        %v2881 = vshrl.u32 %v2880, 7
        %v2882 = vsub.s32 0, %v2881
        %v2883 = vrot.slane %v2878, %v2882
        %v2901 = vunpack.c.l.b16 %v2862
        %v2902 = vunpack.c.l.b16 %v2863
        %v2903 = vunpack.c.l.b16 %v2864
        %v2904 = vunpack.c.l.b16 %v2865
        %v2905 = vunpack.c.l.b16 %v2866
        %v2906 = vunpack.c.l.b16 %v2867
        %v2907 = vunpack.c.l.b16 %v2868
        %v2908 = vunpack.c.l.b16 %v2869
        %v2909 = vunpack.c.l.b16 %v2870
        %v2910 = vunpack.c.l.b16 %v2871
        %v2911 = vunpack.c.l.b16 %v2872
        %v2912 = vunpack.c.l.b16 %v2873
        %v2913 = vunpack.c.l.b16 %v2874
        %v2914 = vunpack.c.l.b16 %v2875
        %v2915 = vunpack.c.l.b16 %v2876
        %v2916 = vunpack.c.l.b16 %v2877
        %v2917 = vpack.c.b16 %v2902, %v2901
        %v2918 = vpack.c.b16 %v2904, %v2903
        %v2919 = vpack.c.b16 %v2906, %v2905
        %v2920 = vpack.c.b16 %v2908, %v2907
        %v2921 = vpack.c.b16 %v2910, %v2909
        %v2922 = vpack.c.b16 %v2912, %v2911
        %v2923 = vpack.c.b16 %v2914, %v2913
        %v2924 = vpack.c.b16 %v2916, %v2915
        %2933 = vmatprep.subr.bf16.mxu0 0
        %2934 = vmatpush1.bf16.msra.mxu0 %v2917
        %2935 = vmatprep.subr.bf16.mxu0 0
        %2936 = vmatpush1.bf16.msra.mxu0 %v2918
        %2937 = vmatprep.subr.bf16.mxu0 0
        %2938 = vmatpush1.bf16.msra.mxu0 %v2919
        %2939 = vmatprep.subr.bf16.mxu0 0
        %2940 = vmatpush1.bf16.msra.mxu0 %v2920
        %2941 = vmatprep.subr.bf16.mxu0 0
        %2942 = vmatpush1.bf16.msra.mxu0 %v2921
        %2943 = vmatprep.subr.bf16.mxu0 0
        %2944 = vmatpush1.bf16.msra.mxu0 %v2922
        %2945 = vmatprep.subr.bf16.mxu0 0
        %2946 = vmatpush1.bf16.msra.mxu0 %v2923
        %2947 = vmatprep.subr.bf16.mxu0 0
        %2948 = vmatpush1.bf16.msra.mxu0 %v2924
        %2949 = vmatprep.subr.bf16.mxu0 0
        %2950 = vmatpush1.bf16.msra.mxu0 0
        %2951 = vmatprep.subr.bf16.mxu0 0
        %2952 = vmatpush1.bf16.msra.mxu0 0
        %2953 = vmatprep.subr.bf16.mxu0 0
        %2954 = vmatpush1.bf16.msra.mxu0 0
        %2955 = vmatprep.subr.bf16.mxu0 0
        %2956 = vmatpush1.bf16.msra.mxu0 0
        %2957 = vmatprep.subr.bf16.mxu0 0
        %2958 = vmatpush1.bf16.msra.mxu0 0
        %2959 = vmatprep.subr.bf16.mxu0 0
        %2960 = vmatpush1.bf16.msra.mxu0 0
        %2961 = vmatprep.subr.bf16.mxu0 0
        %2962 = vmatpush1.bf16.msra.mxu0 0
        %2963 = vmatprep.subr.bf16.mxu0 0
        %2964 = vmatpush1.bf16.msra.mxu0 0
        %2965 = vmatprep.mubr.bf16.mxu0 0
        %2966 = vmatmul.mubr.bf16.gmra.mrb[0].mxu0 %v2861
        %v2967 = vpop.f32.mrb[0].mxu0
        %v2968 = vadd.f32 %v2883, %v2967
        %v2969 = vpop.f32.mrb[0].mxu0
        %v2970 = vpop.f32.mrb[0].mxu0
        %v2971 = vadd.f32 %v2883, %v2970
        %v2972 = vpop.f32.mrb[0].mxu0
        %2973 = vdwg.mxu0
        %v2974 = vmax.f32 %v2968, 0.0
        %v2975 = vmax.f32 %v2971, 0.0
        %v2976 = vpack.c.bf16 %v2975, %v2974
        %v2977 = vld [vmem:[#allocation30] sm:$0xf]
        %v2978 = vld [vmem:[#allocation30 + $0x4] sm:$0xf]
        %v2979 = vld [vmem:[#allocation30 + $0x8] sm:$0xf]
        %v2980 = vld [vmem:[#allocation30 + $0xc] sm:$0xf]
        %v2981 = vld [vmem:[#allocation30 + $0x10] sm:$0xf]
        %v2982 = vld [vmem:[#allocation30 + $0x14] sm:$0xf]
        %v2983 = vld [vmem:[#allocation30 + $0x18] sm:$0xf]
        %v2984 = vld [vmem:[#allocation30 + $0x1c] sm:$0xf]
        %v2985 = vld [vmem:[#allocation30 + $0x20] sm:$0xf]
        %v2986 = vld [vmem:[#allocation30 + $0x24] sm:$0xf]
        %v2987 = vld [vmem:[#allocation30 + $0x28] sm:$0xf]
        %v2988 = vld [vmem:[#allocation30 + $0x2c] sm:$0xf]
        %v2989 = vld [vmem:[#allocation30 + $0x30] sm:$0xf]
        %v2990 = vld [vmem:[#allocation30 + $0x34] sm:$0xf]
        %v2991 = vld [vmem:[#allocation30 + $0x38] sm:$0xf]
        %v2992 = vld [vmem:[#allocation30 + $0x3c] sm:$0xf]
        %v2993 = vld [vmem:[%s22] sm:$0x1]
        %v2995 = vlaneseq
        %v2996 = vshrl.u32 %v2995, 7
        %v2997 = vsub.s32 0, %v2996
        %v2998 = vrot.slane %v2993, %v2997
        %v3016 = vunpack.c.l.b16 %v2977
        %v3017 = vunpack.c.l.b16 %v2978
        %v3018 = vunpack.c.l.b16 %v2979
        %v3019 = vunpack.c.l.b16 %v2980
        %v3020 = vunpack.c.l.b16 %v2981
        %v3021 = vunpack.c.l.b16 %v2982
        %v3022 = vunpack.c.l.b16 %v2983
        %v3023 = vunpack.c.l.b16 %v2984
        %v3024 = vunpack.c.l.b16 %v2985
        %v3025 = vunpack.c.l.b16 %v2986
        %v3026 = vunpack.c.l.b16 %v2987
        %v3027 = vunpack.c.l.b16 %v2988
        %v3028 = vunpack.c.l.b16 %v2989
        %v3029 = vunpack.c.l.b16 %v2990
        %v3030 = vunpack.c.l.b16 %v2991
        %v3031 = vunpack.c.l.b16 %v2992
        %v3032 = vpack.c.b16 %v3017, %v3016
        %v3033 = vpack.c.b16 %v3019, %v3018
        %v3034 = vpack.c.b16 %v3021, %v3020
        %v3035 = vpack.c.b16 %v3023, %v3022
        %v3036 = vpack.c.b16 %v3025, %v3024
        %v3037 = vpack.c.b16 %v3027, %v3026
        %v3038 = vpack.c.b16 %v3029, %v3028
        %v3039 = vpack.c.b16 %v3031, %v3030
        %3048 = vmatprep.subr.bf16.mxu0 0
        %3049 = vmatpush1.bf16.msra.mxu0 %v3032
        %3050 = vmatprep.subr.bf16.mxu0 0
        %3051 = vmatpush1.bf16.msra.mxu0 %v3033
        %3052 = vmatprep.subr.bf16.mxu0 0
        %3053 = vmatpush1.bf16.msra.mxu0 %v3034
        %3054 = vmatprep.subr.bf16.mxu0 0
        %3055 = vmatpush1.bf16.msra.mxu0 %v3035
        %3056 = vmatprep.subr.bf16.mxu0 0
        %3057 = vmatpush1.bf16.msra.mxu0 %v3036
        %3058 = vmatprep.subr.bf16.mxu0 0
        %3059 = vmatpush1.bf16.msra.mxu0 %v3037
        %3060 = vmatprep.subr.bf16.mxu0 0
        %3061 = vmatpush1.bf16.msra.mxu0 %v3038
        %3062 = vmatprep.subr.bf16.mxu0 0
        %3063 = vmatpush1.bf16.msra.mxu0 %v3039
        %3064 = vmatprep.subr.bf16.mxu0 0
        %3065 = vmatpush1.bf16.msra.mxu0 0
        %3066 = vmatprep.subr.bf16.mxu0 0
        %3067 = vmatpush1.bf16.msra.mxu0 0
        %3068 = vmatprep.subr.bf16.mxu0 0
        %3069 = vmatpush1.bf16.msra.mxu0 0
        %3070 = vmatprep.subr.bf16.mxu0 0
        %3071 = vmatpush1.bf16.msra.mxu0 0
        %3072 = vmatprep.subr.bf16.mxu0 0
        %3073 = vmatpush1.bf16.msra.mxu0 0
        %3074 = vmatprep.subr.bf16.mxu0 0
        %3075 = vmatpush1.bf16.msra.mxu0 0
        %3076 = vmatprep.subr.bf16.mxu0 0
        %3077 = vmatpush1.bf16.msra.mxu0 0
        %3078 = vmatprep.subr.bf16.mxu0 0
        %3079 = vmatpush1.bf16.msra.mxu0 0
        %3080 = vmatprep.mubr.bf16.mxu0 0
        %3081 = vmatmul.mubr.bf16.gmra.mrb[0].mxu0 %v2976
        %v3082 = vpop.f32.mrb[0].mxu0
        %v3083 = vadd.f32 %v2998, %v3082
        %v3084 = vpop.f32.mrb[0].mxu0
        %v3085 = vpop.f32.mrb[0].mxu0
        %v3086 = vadd.f32 %v2998, %v3085
        %v3087 = vpop.f32.mrb[0].mxu0
        %3088 = vdwg.mxu0
        %v3089 = vmax.f32 %v3083, 0.0
        %v3090 = vmax.f32 %v3086, 0.0
        %v3091 = vpack.c.bf16 %v3090, %v3089
        %v3092 = vld [vmem:[#allocation31] sm:$0xf]
        %v3093 = vld [vmem:[#allocation31 + $0x4] sm:$0xf]
        %v3094 = vld [vmem:[#allocation31 + $0x8] sm:$0xf]
        %v3095 = vld [vmem:[#allocation31 + $0xc] sm:$0xf]
        %v3096 = vld [vmem:[#allocation31 + $0x10] sm:$0xf]
        %v3097 = vld [vmem:[#allocation31 + $0x14] sm:$0xf]
        %v3098 = vld [vmem:[#allocation31 + $0x18] sm:$0xf]
        %v3099 = vld [vmem:[#allocation31 + $0x1c] sm:$0xf]
        %v3100 = vld [vmem:[#allocation31 + $0x20] sm:$0xf]
        %v3101 = vld [vmem:[#allocation31 + $0x24] sm:$0xf]
        %v3102 = vld [vmem:[#allocation31 + $0x28] sm:$0xf]
        %v3103 = vld [vmem:[#allocation31 + $0x2c] sm:$0xf]
        %v3104 = vld [vmem:[#allocation31 + $0x30] sm:$0xf]
        %v3105 = vld [vmem:[#allocation31 + $0x34] sm:$0xf]
        %v3106 = vld [vmem:[#allocation31 + $0x38] sm:$0xf]
        %v3107 = vld [vmem:[#allocation31 + $0x3c] sm:$0xf]
        %v3108 = vld [vmem:[%s24] sm:$0x1]
        %v3110 = vlaneseq
        %v3111 = vshrl.u32 %v3110, 7
        %v3112 = vsub.s32 0, %v3111
        %v3113 = vrot.slane %v3108, %v3112
        %v3131 = vunpack.c.l.b16 %v3092
        %v3132 = vunpack.c.l.b16 %v3093
        %v3133 = vunpack.c.l.b16 %v3094
        %v3134 = vunpack.c.l.b16 %v3095
        %v3135 = vunpack.c.l.b16 %v3096
        %v3136 = vunpack.c.l.b16 %v3097
        %v3137 = vunpack.c.l.b16 %v3098
        %v3138 = vunpack.c.l.b16 %v3099
        %v3139 = vunpack.c.l.b16 %v3100
        %v3140 = vunpack.c.l.b16 %v3101
        %v3141 = vunpack.c.l.b16 %v3102
        %v3142 = vunpack.c.l.b16 %v3103
        %v3143 = vunpack.c.l.b16 %v3104
        %v3144 = vunpack.c.l.b16 %v3105
        %v3145 = vunpack.c.l.b16 %v3106
        %v3146 = vunpack.c.l.b16 %v3107
        %v3147 = vpack.c.b16 %v3132, %v3131
        %v3148 = vpack.c.b16 %v3134, %v3133
        %v3149 = vpack.c.b16 %v3136, %v3135
        %v3150 = vpack.c.b16 %v3138, %v3137
        %v3151 = vpack.c.b16 %v3140, %v3139
        %v3152 = vpack.c.b16 %v3142, %v3141
        %v3153 = vpack.c.b16 %v3144, %v3143
        %v3154 = vpack.c.b16 %v3146, %v3145
        %3163 = vmatprep.subr.bf16.mxu0 0
        %3164 = vmatpush1.bf16.msra.mxu0 %v3147
        %3165 = vmatprep.subr.bf16.mxu0 0
        %3166 = vmatpush1.bf16.msra.mxu0 %v3148
        %3167 = vmatprep.subr.bf16.mxu0 0
        %3168 = vmatpush1.bf16.msra.mxu0 %v3149
        %3169 = vmatprep.subr.bf16.mxu0 0
        %3170 = vmatpush1.bf16.msra.mxu0 %v3150
        %3171 = vmatprep.subr.bf16.mxu0 0
        %3172 = vmatpush1.bf16.msra.mxu0 %v3151
        %3173 = vmatprep.subr.bf16.mxu0 0
        %3174 = vmatpush1.bf16.msra.mxu0 %v3152
        %3175 = vmatprep.subr.bf16.mxu0 0
        %3176 = vmatpush1.bf16.msra.mxu0 %v3153
        %3177 = vmatprep.subr.bf16.mxu0 0
        %3178 = vmatpush1.bf16.msra.mxu0 %v3154
        %3179 = vmatprep.subr.bf16.mxu0 0
        %3180 = vmatpush1.bf16.msra.mxu0 0
        %3181 = vmatprep.subr.bf16.mxu0 0
        %3182 = vmatpush1.bf16.msra.mxu0 0
        %3183 = vmatprep.subr.bf16.mxu0 0
        %3184 = vmatpush1.bf16.msra.mxu0 0
        %3185 = vmatprep.subr.bf16.mxu0 0
        %3186 = vmatpush1.bf16.msra.mxu0 0
        %3187 = vmatprep.subr.bf16.mxu0 0
        %3188 = vmatpush1.bf16.msra.mxu0 0
        %3189 = vmatprep.subr.bf16.mxu0 0
        %3190 = vmatpush1.bf16.msra.mxu0 0
        %3191 = vmatprep.subr.bf16.mxu0 0
        %3192 = vmatpush1.bf16.msra.mxu0 0
        %3193 = vmatprep.subr.bf16.mxu0 0
        %3194 = vmatpush1.bf16.msra.mxu0 0
        %3195 = vmatprep.mubr.bf16.mxu0 0
        %3196 = vmatmul.mubr.bf16.gmra.mrb[0].mxu0 %v3091
        %v3197 = vpop.f32.mrb[0].mxu0
        %v3198 = vadd.f32 %v3113, %v3197
        %v3199 = vpop.f32.mrb[0].mxu0
        %v3200 = vpop.f32.mrb[0].mxu0
        %v3201 = vadd.f32 %v3113, %v3200
        %v3202 = vpop.f32.mrb[0].mxu0
        %3203 = vdwg.mxu0
        %3204 = vst [vmem:[#allocation2] sm:$0xff] %v2859
        %3205 = vst [vmem:[#allocation2 + $0x8] sm:$0xff] %v2860
        %3206 = vst [vmem:[#allocation3] sm:$0xff] %v2855
        %3207 = vst [vmem:[#allocation3 + $0x8] sm:$0xff] %v2856
        %3208 = vst [vmem:[%s1056] sm:$0xff] %v3198
        %3209 = vst [vmem:[%s1056 + $0x8] sm:$0xff] %v3201
        %s3210 = sand.u32 %s610, 1
        %s3211 = scalar_lea.sflag [#allocation6], %s3210
        %s3212 = sand.u32 %s610, 1
        %s3213 = smul.addr %s3212, 16
        %s3214 = scalar_lea.vmem [#allocation33], %s3213
        // Predicated region
        $region197: #{tpu_custom_call.1} parent=119 // pred_check
          %p3215 = pneg %p620
        $region198: #{tpu_custom_call.1} parent=119 // pred_check_branch
          %3217 = sbr.rel (%p3215) target = $region200
        $region199: #{tpu_custom_call.1} parent=119 // pred_region
          %s3218 = smul.u32 2, %s57
          %s3220 = ssub.s32 256, 256
          %3221 = vsyncadd %s3211, %s3220
          %s3222 = smul.addr %s58, 4
          %s3223 = sadd.s32 %s3218, %s3222
          %s3224 = smul.addr %s3223, 128
          %s3225 = scalar_lea.hbm %s25, %s3224
          %s3226 = sshll.u32 %s3214, 4
          %s3227 = int_to_ptr.vmem [resolvable:$true] %s3226
          %3232 = dma.vmem_to_hbm [thread:$0]  %s3227, 256, %s3225, %s3211, 128, 128, 8
        $region200: #{tpu_custom_call.1} parent=119 // pred_fallthru
          _
      $region120: #{tpu_custom_call.1} parent=5 // pred_fallthru
        _
      %p3233 = scmp.le.s32.totalorder 2, %s48
      // Predicated region
      $region201: #{tpu_custom_call.1} parent=5 // pred_check
        %p3234 = pneg %p3233
      $region202: #{tpu_custom_call.1} parent=5 // pred_check_branch
        %3236 = sbr.rel (%p3234) target = $region204
      $region203: #{tpu_custom_call.1} parent=5 // pred_region
        %s3237 = ssub.s32 %s48, 2
        // Predicated region
        $region205: #{tpu_custom_call.1} parent=203 // pred_check
          %p3238 = pneg %p626
        $region206: #{tpu_custom_call.1} parent=203 // pred_check_branch
          %3240 = sbr.rel (%p3238) target = $region208
        $region207: #{tpu_custom_call.1} parent=203 // pred_region
          %s3241 = sand.u32 %s611, 1
          %s3242 = scalar_lea.sflag [#allocation6], %s3241
          %s3243 = sand.u32 %s611, 1
          %s3244 = smul.addr %s3243, 16
          %s3245 = scalar_lea.vmem [#allocation33], %s3244
          %3246 = dma.done %s3242, 256
        $region208: #{tpu_custom_call.1} parent=203 // pred_fallthru
          _
      $region204: #{tpu_custom_call.1} parent=5 // pred_fallthru
        _
    $region6: #{tpu_custom_call.1} parent=1 // loop_footer
      %s52 = sadd.s32 1, %s48
    $region7: #{tpu_custom_call.1} parent=1 // loop_footer_branch
      %47 = sbr.rel target = $region3
    $region8: #{tpu_custom_call.1} parent=1 // loop_exit
      _
    %3247 = vsyncpa [#allocation5], 1
    %s3248 = scalar_lea.sflag [#allocation5], 1
    %3249 = vsyncpa %s3248, 1
    %3250 = vsyncpa [#allocation8], 1
    %s3251 = scalar_lea.sflag [#allocation8], 1
    %3252 = vsyncpa %s3251, 1
    %3253 = vsyncpa [#allocation11], 1
    %3254 = vsyncpa [#allocation14], 1
    %3255 = vsyncpa [#allocation17], 1
    %3256 = vsyncpa [#allocation20], 1
    %3257 = vsyncpa [#allocation23], 1
    %3258 = vsyncpa [#allocation26], 1
    %3259 = vsyncpa [#allocation29], 1
    %3260 = vsyncpa [#allocation32], 1
    %3261 = vsyncpa [#allocation6], 1
    %s3262 = scalar_lea.sflag [#allocation6], 1
    %3263 = vsyncpa %s3262, 1

</llo_original>
